<compile_context>
chip_gen: v5e
topology: v5e:2x2
jax: 0.10.0
libtpu: 0.0.40
codegen_flags: <defaults>
</compile_context>

<pallas_src>
import math

import jax
import jax.numpy as jnp
from jax.experimental import pallas as pl
from jax.experimental.pallas import tpu as pltpu

# ---- synthetic config (small shapes consistent with the module) ----
B = 2              # batch
S = 16             # max_seq_length
D = 32             # dim_embedding_token / d_model
H = 4              # num_heads
DH = D // H        # head dim
F = 64             # dim_feedforward
NUM_LAYERS = 2     # num_layers
N_TISSUES = 8      # len(TISSUES)
VOCAB = 65         # len(CODON_MAP_DNA) + 1 ; index 0 = padding
MAX_NORM = 1.0     # embedding_max_norm
PRED_HIDDEN = 32   # Predictor hidden width
LN_EPS = 1e-5
NEG = -1e30


# ---------------------------------------------------------------------------
# In-kernel helpers
# ---------------------------------------------------------------------------
def _layernorm(x, w, b):
    mean = jnp.mean(x, axis=-1, keepdims=True)
    var = jnp.mean((x - mean) ** 2, axis=-1, keepdims=True)
    return (x - mean) * jax.lax.rsqrt(var + LN_EPS) * w + b


# ---------------------------------------------------------------------------
# Fused forward kernel: one grid step == whole batch.
#   x_ref      : (B*S, D) f32 — (seq_emb + tissue) * mask + pe, prepped on host.
#   kbias_ref  : (B, 1, S) f32 additive key-padding bias (0 / -1e30).
#   onehot_ref : (B, S, 1) f32 one-hot selector of the last valid token.
#   weights    : stacked per layer, pre-transposed to (in, out), bf16 for MXU.
# ---------------------------------------------------------------------------
def fused_kernel(x_ref, kbias_ref, onehot_ref,
                 wqkv_ref, bqkv_ref, wo_ref, bo_ref,
                 ln1w_ref, ln1b_ref, w1_ref, b1_ref, w2_ref, b2_ref,
                 ln2w_ref, ln2b_ref,
                 flnw_ref, flnb_ref,
                 pw1_ref, pb1_ref, pw2_ref, pb2_ref,
                 o_ref):
    scale = 1.0 / math.sqrt(DH)

    x = x_ref[...]                               # (B*S, D) f32
    kbias = kbias_ref[...]                       # (B, 1, S) f32

    # ---- NUM_LAYERS post-norm TransformerEncoderLayers (static unroll, L=2) ----
    for l in range(NUM_LAYERS):
        xb = x.astype(jnp.bfloat16)
        qkv = jnp.dot(xb, wqkv_ref[l],
                      preferred_element_type=jnp.float32) + bqkv_ref[l]   # (B*S, 3D)

        q = qkv[:, 0:D].reshape(B, S, D).astype(jnp.bfloat16)
        k = qkv[:, D:2 * D].reshape(B, S, D).astype(jnp.bfloat16)
        v = qkv[:, 2 * D:3 * D].reshape(B, S, D).astype(jnp.bfloat16)

        # Per-head attention; head context is projected through its Wo slice and
        # accumulated in registers (no scratch slab, no masked partial stores).
        attn_out = jnp.zeros((B * S, D), jnp.float32)
        for h in range(H):
            sl = slice(h * DH, (h + 1) * DH)
            qh, kh, vh = q[..., sl], k[..., sl], v[..., sl]          # (B, S, DH) bf16

            s = jnp.einsum("bqd,bkd->bqk", qh, kh,
                           preferred_element_type=jnp.float32) * scale
            s = s + kbias                                            # mask padded keys
            m = jnp.max(s, axis=-1, keepdims=True)
            p = jnp.exp(s - m)
            denom = jnp.sum(p, axis=-1, keepdims=True)
            attn = (p * pl.reciprocal(denom, approx=True)).astype(jnp.bfloat16)

            ctx = jnp.einsum("bqk,bkd->bqd", attn, vh,
                             preferred_element_type=jnp.float32)     # (B, S, DH)
            ctx2 = ctx.reshape(B * S, DH).astype(jnp.bfloat16)
            attn_out = attn_out + jnp.dot(ctx2, wo_ref[l, h],
                                          preferred_element_type=jnp.float32)

        attn_out = attn_out + bo_ref[l]

        y = _layernorm(x + attn_out, ln1w_ref[l], ln1b_ref[l])       # post-norm 1

        hdn = jnp.maximum(
            jnp.dot(y.astype(jnp.bfloat16), w1_ref[l],
                    preferred_element_type=jnp.float32) + b1_ref[l], 0.0)   # relu
        ffn = jnp.dot(hdn.astype(jnp.bfloat16), w2_ref[l],
                      preferred_element_type=jnp.float32) + b2_ref[l]

        x = _layernorm(y + ffn, ln2w_ref[l], ln2b_ref[l])            # post-norm 2

    # ---- final encoder LayerNorm (TransformerEncoder norm=LayerNorm) ----
    xf = _layernorm(x, flnw_ref[...], flnb_ref[...])                 # (B*S, D) f32

    # ---- in-register last-valid-token gather (one-hot select + sublane reduce) ----
    x3 = xf.reshape(B, S, D)
    out_last = jnp.sum(x3 * onehot_ref[...], axis=1)                 # (B, D)

    # ---- Predictor head ----
    # TODO(synk): Predictor class body was not provided; implemented as
    #             Linear -> ReLU -> Linear(1).
    h1 = jnp.maximum(
        jnp.dot(out_last.astype(jnp.bfloat16), pw1_ref[...],
                preferred_element_type=jnp.float32) + pb1_ref[...], 0.0)    # (B, PH)
    y_pred = jnp.sum(h1 * pw2_ref[...], axis=-1, keepdims=True) + pb2_ref[...]  # (B, 1)
    o_ref[...] = y_pred


# ---------------------------------------------------------------------------
# pallas_call wrapper (single fused call, single grid step)
# ---------------------------------------------------------------------------
def run_fused(x_in, kbias, onehot, kp):
    in_arrays = [
        x_in, kbias, onehot,
        kp["wqkv"], kp["bqkv"], kp["wo"], kp["bo"],
        kp["ln1w"], kp["ln1b"], kp["w1"], kp["b1"], kp["w2"], kp["b2"],
        kp["ln2w"], kp["ln2b"],
        kp["flnw"], kp["flnb"],
        kp["pw1"], kp["pb1"], kp["pw2"], kp["pb2"],
    ]

    def fullspec(shape):
        nd = len(shape)
        return pl.BlockSpec(shape, lambda i, _nd=nd: (0,) * _nd)

    in_specs = [fullspec(a.shape) for a in in_arrays]

    out = pl.pallas_call(
        fused_kernel,
        out_shape=jax.ShapeDtypeStruct((B, 1), jnp.float32),
        grid=(1,),
        in_specs=in_specs,
        out_specs=pl.BlockSpec((B, 1), lambda i: (0, 0)),
        compiler_params=pltpu.CompilerParams(
            dimension_semantics=("arbitrary",)),
    )(*in_arrays)
    return out                                                       # (B, 1)


# ---------------------------------------------------------------------------
# Parameter / input construction (deterministic, glue in plain JAX)
# ---------------------------------------------------------------------------
def _renorm(table, max_norm):
    # nn.Embedding(max_norm=...) semantics: rows with norm > max_norm are rescaled.
    norms = jnp.sqrt(jnp.sum(table * table, axis=-1, keepdims=True))
    factor = jnp.minimum(1.0, max_norm / jnp.maximum(norms, 1e-12))
    return table * factor


def make_params(key):
    keys = iter(jax.random.split(key, 64))

    def nrm(shape, scale=0.1):
        return jax.random.normal(next(keys), shape, dtype=jnp.float32) * scale

    params = {}
    seq_table = nrm((VOCAB, D), 0.5).at[0].set(0.0)        # padding_idx=0
    params["seq_table"] = _renorm(seq_table, MAX_NORM)
    params["tissue_table"] = _renorm(nrm((N_TISSUES, D), 0.5), MAX_NORM)

    # sinusoidal positional encoding (identical to the PyTorch buffer)
    position = jnp.arange(S, dtype=jnp.float32)[:, None]
    div_term = jnp.exp(jnp.arange(0, D, 2, dtype=jnp.float32)
                       * (-math.log(10000.0) / D))
    pe = jnp.zeros((S, D), dtype=jnp.float32)
    pe = pe.at[:, 0::2].set(jnp.sin(position * div_term))
    pe = pe.at[:, 1::2].set(jnp.cos(position * div_term))
    params["pe"] = pe

    layers = []
    for _ in range(NUM_LAYERS):
        layers.append({
            "wq": nrm((D, D)), "bq": nrm((1, D)),
            "wk": nrm((D, D)), "bk": nrm((1, D)),
            "wv": nrm((D, D)), "bv": nrm((1, D)),
            "wo": nrm((D, D)), "bo": nrm((1, D)),
            "ln1w": jnp.ones((1, D), jnp.float32), "ln1b": jnp.zeros((1, D), jnp.float32),
            "w1": nrm((F, D)), "b1": nrm((1, F)),
            "w2": nrm((D, F)), "b2": nrm((1, D)),
            "ln2w": jnp.ones((1, D), jnp.float32), "ln2b": jnp.zeros((1, D), jnp.float32),
        })
    params["layers"] = layers
    params["final_lnw"] = jnp.ones((1, D), jnp.float32)
    params["final_lnb"] = jnp.zeros((1, D), jnp.float32)

    params["pred_w1"] = nrm((PRED_HIDDEN, D))
    params["pred_b1"] = nrm((1, PRED_HIDDEN))
    params["pred_w2"] = nrm((1, PRED_HIDDEN))
    params["pred_b2"] = nrm((1, 1))
    return params


def pack_kernel_params(params):
    """Pre-transpose weights to (in, out), fuse QKV, stack per-layer, cast MXU
    weights to bf16 (biases / LN params stay f32)."""
    L = params["layers"]
    bf = jnp.bfloat16
    kp = {
        # (L, D, 3D) bf16, fused QKV
        "wqkv": jnp.stack([jnp.concatenate([l["wq"], l["wk"], l["wv"]], axis=0).T
                           for l in L]).astype(bf),
        "bqkv": jnp.stack([jnp.concatenate([l["bq"], l["bk"], l["bv"]], axis=1)
                           for l in L]),                                   # (L, 1, 3D)
        # (L, H, DH, D) bf16 — per-head slices of Wo^T for register accumulation
        "wo": jnp.stack([l["wo"].T.reshape(H, DH, D) for l in L]).astype(bf),
        "bo": jnp.stack([l["bo"] for l in L]),                             # (L, 1, D)
        "ln1w": jnp.stack([l["ln1w"] for l in L]),
        "ln1b": jnp.stack([l["ln1b"] for l in L]),
        "w1": jnp.stack([l["w1"].T for l in L]).astype(bf),                # (L, D, F)
        "b1": jnp.stack([l["b1"] for l in L]),
        "w2": jnp.stack([l["w2"].T for l in L]).astype(bf),                # (L, F, D)
        "b2": jnp.stack([l["b2"] for l in L]),
        "ln2w": jnp.stack([l["ln2w"] for l in L]),
        "ln2b": jnp.stack([l["ln2b"] for l in L]),
        "flnw": params["final_lnw"], "flnb": params["final_lnb"],
        "pw1": params["pred_w1"].T.astype(bf),                             # (D, PH)
        "pb1": params["pred_b1"],
        "pw2": params["pred_w2"],                                          # (1, PH) f32
        "pb2": params["pred_b2"],
    }
    return kp


def model_transformer_forward(rna_data_pad, tissue_id, seq_lengths, params):
    # embedding lookups (gather) + elementwise prep — glue in plain JAX (host/XLA):
    #   x = (seq_emb + tissue) * mask + pe
    seq_emb = params["seq_table"][rna_data_pad]                       # (B, S, D)
    tissue_emb = params["tissue_table"][tissue_id][:, None, :]        # (B, 1, D)
    mask = (rna_data_pad != 0).astype(jnp.float32)[..., None]         # (B, S, 1)
    x_in = ((seq_emb + tissue_emb) * mask + params["pe"][None]
            ).reshape(B * S, D).astype(jnp.float32)                   # (B*S, D)

    # additive key-padding bias for attention scores
    kbias = jnp.where(rna_data_pad == 0, NEG, 0.0
                      ).astype(jnp.float32)[:, None, :]               # (B, 1, S)

    # one-hot selector of the last valid token (index clamped at 0)
    last = jnp.maximum(seq_lengths.astype(jnp.int32) - 1, 0)          # (B,)
    onehot = (jnp.arange(S, dtype=jnp.int32)[None, :] == last[:, None]
              ).astype(jnp.float32)[..., None]                        # (B, S, 1)

    kp = pack_kernel_params(params)
    y_pred = run_fused(x_in, kbias, onehot, kp)
    return y_pred                                                     # (B, 1)


if __name__ == "__main__":
    key = jax.random.PRNGKey(0)
    k_par, k_rna, k_tis = jax.random.split(key, 3)

    params = make_params(k_par)

    seq_lengths = jnp.array([S, 10], dtype=jnp.int32)
    rna = jax.random.randint(k_rna, (B, S), 1, VOCAB, dtype=jnp.int32)
    pos = jnp.arange(S, dtype=jnp.int32)[None, :]
    rna_data_pad = jnp.where(pos < seq_lengths[:, None], rna, 0)      # 0 = padding
    tissue_id = jax.random.randint(k_tis, (B,), 0, N_TISSUES, dtype=jnp.int32)

    y = model_transformer_forward(rna_data_pad, tissue_id, seq_lengths, params)
    jax.block_until_ready(y)
    assert y.shape == (B, 1) and bool(jnp.all(jnp.isfinite(y)))
    print("KERNEL_OK")
</pallas_src>

<mosaic_0001>
module attributes {stable_mosaic.version = 11 : i64} {
  func.func @fused_kernel(%arg0: i32, %arg1: memref<32x32xf32, #tpu.memory_space<vmem>>, %arg2: memref<2x1x16xf32, #tpu.memory_space<vmem>>, %arg3: memref<2x16x1xf32, #tpu.memory_space<vmem>>, %arg4: memref<2x32x96xbf16, #tpu.memory_space<vmem>>, %arg5: memref<2x1x96xf32, #tpu.memory_space<vmem>>, %arg6: memref<2x4x8x32xbf16, #tpu.memory_space<vmem>>, %arg7: memref<2x1x32xf32, #tpu.memory_space<vmem>>, %arg8: memref<2x1x32xf32, #tpu.memory_space<vmem>>, %arg9: memref<2x1x32xf32, #tpu.memory_space<vmem>>, %arg10: memref<2x32x64xbf16, #tpu.memory_space<vmem>>, %arg11: memref<2x1x64xf32, #tpu.memory_space<vmem>>, %arg12: memref<2x64x32xbf16, #tpu.memory_space<vmem>>, %arg13: memref<2x1x32xf32, #tpu.memory_space<vmem>>, %arg14: memref<2x1x32xf32, #tpu.memory_space<vmem>>, %arg15: memref<2x1x32xf32, #tpu.memory_space<vmem>>, %arg16: memref<1x32xf32, #tpu.memory_space<vmem>>, %arg17: memref<1x32xf32, #tpu.memory_space<vmem>>, %arg18: memref<32x32xbf16, #tpu.memory_space<vmem>>, %arg19: memref<1x32xf32, #tpu.memory_space<vmem>>, %arg20: memref<1x32xf32, #tpu.memory_space<vmem>>, %arg21: memref<1x1xf32, #tpu.memory_space<vmem>>, %arg22: memref<2x1xf32, #tpu.memory_space<vmem>>) attributes {dimension_semantics = [#tpu.dimension_semantics<arbitrary>], iteration_bounds = array<i64: 1>, scalar_prefetch = 0 : i64, scratch_operands = 0 : i64, tpu.core_type = #tpu.core_type<tc>, window_params = [{pipeline_mode = #tpu.pipeline_mode<synchronous>, transform_indices = @transform_0, window_bounds = array<i64: 32, 32>}, {pipeline_mode = #tpu.pipeline_mode<synchronous>, transform_indices = @transform_1, window_bounds = array<i64: 2, 1, 16>}, {pipeline_mode = #tpu.pipeline_mode<synchronous>, transform_indices = @transform_2, window_bounds = array<i64: 2, 16, 1>}, {pipeline_mode = #tpu.pipeline_mode<synchronous>, transform_indices = @transform_3, window_bounds = array<i64: 2, 32, 96>}, {pipeline_mode = #tpu.pipeline_mode<synchronous>, transform_indices = @transform_4, window_bounds = array<i64: 2, 1, 96>}, {pipeline_mode = #tpu.pipeline_mode<synchronous>, transform_indices = @transform_5, window_bounds = array<i64: 2, 4, 8, 32>}, {pipeline_mode = #tpu.pipeline_mode<synchronous>, transform_indices = @transform_6, window_bounds = array<i64: 2, 1, 32>}, {pipeline_mode = #tpu.pipeline_mode<synchronous>, transform_indices = @transform_7, window_bounds = array<i64: 2, 1, 32>}, {pipeline_mode = #tpu.pipeline_mode<synchronous>, transform_indices = @transform_8, window_bounds = array<i64: 2, 1, 32>}, {pipeline_mode = #tpu.pipeline_mode<synchronous>, transform_indices = @transform_9, window_bounds = array<i64: 2, 32, 64>}, {pipeline_mode = #tpu.pipeline_mode<synchronous>, transform_indices = @transform_10, window_bounds = array<i64: 2, 1, 64>}, {pipeline_mode = #tpu.pipeline_mode<synchronous>, transform_indices = @transform_11, window_bounds = array<i64: 2, 64, 32>}, {pipeline_mode = #tpu.pipeline_mode<synchronous>, transform_indices = @transform_12, window_bounds = array<i64: 2, 1, 32>}, {pipeline_mode = #tpu.pipeline_mode<synchronous>, transform_indices = @transform_13, window_bounds = array<i64: 2, 1, 32>}, {pipeline_mode = #tpu.pipeline_mode<synchronous>, transform_indices = @transform_14, window_bounds = array<i64: 2, 1, 32>}, {pipeline_mode = #tpu.pipeline_mode<synchronous>, transform_indices = @transform_15, window_bounds = array<i64: 1, 32>}, {pipeline_mode = #tpu.pipeline_mode<synchronous>, transform_indices = @transform_16, window_bounds = array<i64: 1, 32>}, {pipeline_mode = #tpu.pipeline_mode<synchronous>, transform_indices = @transform_17, window_bounds = array<i64: 32, 32>}, {pipeline_mode = #tpu.pipeline_mode<synchronous>, transform_indices = @transform_18, window_bounds = array<i64: 1, 32>}, {pipeline_mode = #tpu.pipeline_mode<synchronous>, transform_indices = @transform_19, window_bounds = array<i64: 1, 32>}, {pipeline_mode = #tpu.pipeline_mode<synchronous>, transform_indices = @transform_20, window_bounds = array<i64: 1, 1>}, {pipeline_mode = #tpu.pipeline_mode<synchronous>, transform_indices = @transform_21, window_bounds = array<i64: 2, 1>}]} {
    %c0 = arith.constant 0 : index
    %c0_0 = arith.constant 0 : index
    %0 = vector.load %arg1[%c0, %c0_0] : memref<32x32xf32, #tpu.memory_space<vmem>>, vector<32x32xf32>
    %c0_1 = arith.constant 0 : index
    %c0_2 = arith.constant 0 : index
    %c0_3 = arith.constant 0 : index
    %1 = vector.load %arg2[%c0_1, %c0_2, %c0_3] : memref<2x1x16xf32, #tpu.memory_space<vmem>>, vector<2x1x16xf32>
    %2 = arith.truncf %0 : vector<32x32xf32> to vector<32x32xbf16>
    %c0_4 = arith.constant 0 : index
    %c0_5 = arith.constant 0 : index
    %c0_6 = arith.constant 0 : index
    %3 = vector.load %arg4[%c0_4, %c0_5, %c0_6] : memref<2x32x96xbf16, #tpu.memory_space<vmem>>, vector<1x32x96xbf16>
    %4 = vector.shape_cast %3 : vector<1x32x96xbf16> to vector<32x96xbf16>
    %cst = arith.constant dense<0.000000e+00> : vector<32x96xf32>
    %5 = tpu.matmul %2, %4, %cst {dimension_numbers = #tpu.dot_dimension_numbers<[1], [0], [0], [1], [0, 0, 1, 1], [], []>} : vector<32x32xbf16>, vector<32x96xbf16>, vector<32x96xf32> -> vector<32x96xf32>
    %c0_7 = arith.constant 0 : index
    %c0_8 = arith.constant 0 : index
    %c0_9 = arith.constant 0 : index
    %6 = vector.load %arg5[%c0_7, %c0_8, %c0_9] : memref<2x1x96xf32, #tpu.memory_space<vmem>>, vector<1x1x96xf32>
    %7 = vector.shape_cast %6 : vector<1x1x96xf32> to vector<1x96xf32>
    %8 = vector.broadcast %7 : vector<1x96xf32> to vector<32x96xf32>
    %9 = arith.addf %5, %8 : vector<32x96xf32>
    %10 = vector.extract_strided_slice %9 {offsets = [0, 0], sizes = [32, 32], strides = [1, 1]} : vector<32x96xf32> to vector<32x32xf32>
    %11 = vector.shape_cast %10 : vector<32x32xf32> to vector<2x16x32xf32>
    %12 = arith.truncf %11 : vector<2x16x32xf32> to vector<2x16x32xbf16>
    %13 = vector.extract_strided_slice %9 {offsets = [0, 32], sizes = [32, 32], strides = [1, 1]} : vector<32x96xf32> to vector<32x32xf32>
    %14 = vector.shape_cast %13 : vector<32x32xf32> to vector<2x16x32xf32>
    %15 = arith.truncf %14 : vector<2x16x32xf32> to vector<2x16x32xbf16>
    %16 = vector.extract_strided_slice %9 {offsets = [0, 64], sizes = [32, 32], strides = [1, 1]} : vector<32x96xf32> to vector<32x32xf32>
    %17 = vector.shape_cast %16 : vector<32x32xf32> to vector<2x16x32xf32>
    %18 = arith.truncf %17 : vector<2x16x32xf32> to vector<2x16x32xbf16>
    %cst_10 = arith.constant 0.000000e+00 : f32
    %19 = vector.broadcast %cst_10 : f32 to vector<32x32xf32>
    %20 = vector.extract_strided_slice %12 {offsets = [0, 0, 0], sizes = [2, 16, 8], strides = [1, 1, 1]} : vector<2x16x32xbf16> to vector<2x16x8xbf16>
    %21 = vector.extract_strided_slice %15 {offsets = [0, 0, 0], sizes = [2, 16, 8], strides = [1, 1, 1]} : vector<2x16x32xbf16> to vector<2x16x8xbf16>
    %22 = vector.extract_strided_slice %18 {offsets = [0, 0, 0], sizes = [2, 16, 8], strides = [1, 1, 1]} : vector<2x16x32xbf16> to vector<2x16x8xbf16>
    "tpu.trace_start"() <{level = 10 : i32, message = "bqd,bkd->bqk"}> : () -> ()
    %cst_11 = arith.constant dense<0.000000e+00> : vector<2x16x16xf32>
    %23 = tpu.matmul %20, %21, %cst_11 {dimension_numbers = #tpu.dot_dimension_numbers<[2], [2], [1], [1], [0, 0, 0, 1, 1, 1], [0], [0]>} : vector<2x16x8xbf16>, vector<2x16x8xbf16>, vector<2x16x16xf32> -> vector<2x16x16xf32>
    "tpu.trace_stop"() : () -> ()
    %cst_12 = arith.constant 0.353553385 : f32
    %24 = vector.broadcast %cst_12 : f32 to vector<2x16x16xf32>
    %25 = arith.mulf %23, %24 : vector<2x16x16xf32>
    %26 = vector.broadcast %1 : vector<2x1x16xf32> to vector<2x16x16xf32>
    %27 = arith.addf %25, %26 : vector<2x16x16xf32>
    %cst_13 = arith.constant dense<0xFF800000> : vector<2x16xf32>
    %28 = vector.multi_reduction <maximumf>, %27, %cst_13 [2] : vector<2x16x16xf32> to vector<2x16xf32>
    %29 = vector.shape_cast %28 : vector<2x16xf32> to vector<2x16x1xf32>
    %30 = vector.broadcast %29 : vector<2x16x1xf32> to vector<2x16x16xf32>
    %31 = arith.subf %27, %30 : vector<2x16x16xf32>
    %32 = math.exp %31 : vector<2x16x16xf32>
    %cst_14 = arith.constant dense<0.000000e+00> : vector<2x16xf32>
    %33 = vector.multi_reduction <add>, %32, %cst_14 [2] : vector<2x16x16xf32> to vector<2x16xf32>
    %34 = vector.shape_cast %33 : vector<2x16xf32> to vector<2x16x1xf32>
    %35 = tpu.reciprocal %34 {approx = true} : vector<2x16x1xf32> -> vector<2x16x1xf32>
    %36 = vector.broadcast %35 : vector<2x16x1xf32> to vector<2x16x16xf32>
    %37 = arith.mulf %32, %36 : vector<2x16x16xf32>
    %38 = arith.truncf %37 : vector<2x16x16xf32> to vector<2x16x16xbf16>
    "tpu.trace_start"() <{level = 10 : i32, message = "bqk,bkd->bqd"}> : () -> ()
    %cst_15 = arith.constant dense<0.000000e+00> : vector<2x16x8xf32>
    %39 = tpu.matmul %38, %22, %cst_15 {dimension_numbers = #tpu.dot_dimension_numbers<[2], [1], [1], [2], [0, 0, 0, 1, 1, 2], [0], [0]>} : vector<2x16x16xbf16>, vector<2x16x8xbf16>, vector<2x16x8xf32> -> vector<2x16x8xf32>
    "tpu.trace_stop"() : () -> ()
    %40 = vector.shape_cast %39 : vector<2x16x8xf32> to vector<32x8xf32>
    %41 = arith.truncf %40 : vector<32x8xf32> to vector<32x8xbf16>
    %c0_16 = arith.constant 0 : index
    %c0_17 = arith.constant 0 : index
    %c0_18 = arith.constant 0 : index
    %c0_19 = arith.constant 0 : index
    %42 = vector.load %arg6[%c0_16, %c0_17, %c0_18, %c0_19] : memref<2x4x8x32xbf16, #tpu.memory_space<vmem>>, vector<1x1x8x32xbf16>
    %43 = vector.shape_cast %42 : vector<1x1x8x32xbf16> to vector<8x32xbf16>
    %cst_20 = arith.constant dense<0.000000e+00> : vector<32x32xf32>
    %44 = tpu.matmul %41, %43, %cst_20 {dimension_numbers = #tpu.dot_dimension_numbers<[1], [0], [0], [1], [0, 0, 1, 1], [], []>} : vector<32x8xbf16>, vector<8x32xbf16>, vector<32x32xf32> -> vector<32x32xf32>
    %45 = arith.addf %19, %44 : vector<32x32xf32>
    %46 = vector.extract_strided_slice %12 {offsets = [0, 0, 8], sizes = [2, 16, 8], strides = [1, 1, 1]} : vector<2x16x32xbf16> to vector<2x16x8xbf16>
    %47 = vector.extract_strided_slice %15 {offsets = [0, 0, 8], sizes = [2, 16, 8], strides = [1, 1, 1]} : vector<2x16x32xbf16> to vector<2x16x8xbf16>
    %48 = vector.extract_strided_slice %18 {offsets = [0, 0, 8], sizes = [2, 16, 8], strides = [1, 1, 1]} : vector<2x16x32xbf16> to vector<2x16x8xbf16>
    "tpu.trace_start"() <{level = 10 : i32, message = "bqd,bkd->bqk"}> : () -> ()
    %cst_21 = arith.constant dense<0.000000e+00> : vector<2x16x16xf32>
    %49 = tpu.matmul %46, %47, %cst_21 {dimension_numbers = #tpu.dot_dimension_numbers<[2], [2], [1], [1], [0, 0, 0, 1, 1, 1], [0], [0]>} : vector<2x16x8xbf16>, vector<2x16x8xbf16>, vector<2x16x16xf32> -> vector<2x16x16xf32>
    "tpu.trace_stop"() : () -> ()
    %cst_22 = arith.constant 0.353553385 : f32
    %50 = vector.broadcast %cst_22 : f32 to vector<2x16x16xf32>
    %51 = arith.mulf %49, %50 : vector<2x16x16xf32>
    %52 = vector.broadcast %1 : vector<2x1x16xf32> to vector<2x16x16xf32>
    %53 = arith.addf %51, %52 : vector<2x16x16xf32>
    %cst_23 = arith.constant dense<0xFF800000> : vector<2x16xf32>
    %54 = vector.multi_reduction <maximumf>, %53, %cst_23 [2] : vector<2x16x16xf32> to vector<2x16xf32>
    %55 = vector.shape_cast %54 : vector<2x16xf32> to vector<2x16x1xf32>
    %56 = vector.broadcast %55 : vector<2x16x1xf32> to vector<2x16x16xf32>
    %57 = arith.subf %53, %56 : vector<2x16x16xf32>
    %58 = math.exp %57 : vector<2x16x16xf32>
    %cst_24 = arith.constant dense<0.000000e+00> : vector<2x16xf32>
    %59 = vector.multi_reduction <add>, %58, %cst_24 [2] : vector<2x16x16xf32> to vector<2x16xf32>
    %60 = vector.shape_cast %59 : vector<2x16xf32> to vector<2x16x1xf32>
    %61 = tpu.reciprocal %60 {approx = true} : vector<2x16x1xf32> -> vector<2x16x1xf32>
    %62 = vector.broadcast %61 : vector<2x16x1xf32> to vector<2x16x16xf32>
    %63 = arith.mulf %58, %62 : vector<2x16x16xf32>
    %64 = arith.truncf %63 : vector<2x16x16xf32> to vector<2x16x16xbf16>
    "tpu.trace_start"() <{level = 10 : i32, message = "bqk,bkd->bqd"}> : () -> ()
    %cst_25 = arith.constant dense<0.000000e+00> : vector<2x16x8xf32>
    %65 = tpu.matmul %64, %48, %cst_25 {dimension_numbers = #tpu.dot_dimension_numbers<[2], [1], [1], [2], [0, 0, 0, 1, 1, 2], [0], [0]>} : vector<2x16x16xbf16>, vector<2x16x8xbf16>, vector<2x16x8xf32> -> vector<2x16x8xf32>
    "tpu.trace_stop"() : () -> ()
    %66 = vector.shape_cast %65 : vector<2x16x8xf32> to vector<32x8xf32>
    %67 = arith.truncf %66 : vector<32x8xf32> to vector<32x8xbf16>
    %c0_26 = arith.constant 0 : index
    %c1 = arith.constant 1 : index
    %c0_27 = arith.constant 0 : index
    %c0_28 = arith.constant 0 : index
    %68 = vector.load %arg6[%c0_26, %c1, %c0_27, %c0_28] : memref<2x4x8x32xbf16, #tpu.memory_space<vmem>>, vector<1x1x8x32xbf16>
    %69 = vector.shape_cast %68 : vector<1x1x8x32xbf16> to vector<8x32xbf16>
    %cst_29 = arith.constant dense<0.000000e+00> : vector<32x32xf32>
    %70 = tpu.matmul %67, %69, %cst_29 {dimension_numbers = #tpu.dot_dimension_numbers<[1], [0], [0], [1], [0, 0, 1, 1], [], []>} : vector<32x8xbf16>, vector<8x32xbf16>, vector<32x32xf32> -> vector<32x32xf32>
    %71 = arith.addf %45, %70 : vector<32x32xf32>
    %72 = vector.extract_strided_slice %12 {offsets = [0, 0, 16], sizes = [2, 16, 8], strides = [1, 1, 1]} : vector<2x16x32xbf16> to vector<2x16x8xbf16>
    %73 = vector.extract_strided_slice %15 {offsets = [0, 0, 16], sizes = [2, 16, 8], strides = [1, 1, 1]} : vector<2x16x32xbf16> to vector<2x16x8xbf16>
    %74 = vector.extract_strided_slice %18 {offsets = [0, 0, 16], sizes = [2, 16, 8], strides = [1, 1, 1]} : vector<2x16x32xbf16> to vector<2x16x8xbf16>
    "tpu.trace_start"() <{level = 10 : i32, message = "bqd,bkd->bqk"}> : () -> ()
    %cst_30 = arith.constant dense<0.000000e+00> : vector<2x16x16xf32>
    %75 = tpu.matmul %72, %73, %cst_30 {dimension_numbers = #tpu.dot_dimension_numbers<[2], [2], [1], [1], [0, 0, 0, 1, 1, 1], [0], [0]>} : vector<2x16x8xbf16>, vector<2x16x8xbf16>, vector<2x16x16xf32> -> vector<2x16x16xf32>
    "tpu.trace_stop"() : () -> ()
    %cst_31 = arith.constant 0.353553385 : f32
    %76 = vector.broadcast %cst_31 : f32 to vector<2x16x16xf32>
    %77 = arith.mulf %75, %76 : vector<2x16x16xf32>
    %78 = vector.broadcast %1 : vector<2x1x16xf32> to vector<2x16x16xf32>
    %79 = arith.addf %77, %78 : vector<2x16x16xf32>
    %cst_32 = arith.constant dense<0xFF800000> : vector<2x16xf32>
    %80 = vector.multi_reduction <maximumf>, %79, %cst_32 [2] : vector<2x16x16xf32> to vector<2x16xf32>
    %81 = vector.shape_cast %80 : vector<2x16xf32> to vector<2x16x1xf32>
    %82 = vector.broadcast %81 : vector<2x16x1xf32> to vector<2x16x16xf32>
    %83 = arith.subf %79, %82 : vector<2x16x16xf32>
    %84 = math.exp %83 : vector<2x16x16xf32>
    %cst_33 = arith.constant dense<0.000000e+00> : vector<2x16xf32>
    %85 = vector.multi_reduction <add>, %84, %cst_33 [2] : vector<2x16x16xf32> to vector<2x16xf32>
    %86 = vector.shape_cast %85 : vector<2x16xf32> to vector<2x16x1xf32>
    %87 = tpu.reciprocal %86 {approx = true} : vector<2x16x1xf32> -> vector<2x16x1xf32>
    %88 = vector.broadcast %87 : vector<2x16x1xf32> to vector<2x16x16xf32>
    %89 = arith.mulf %84, %88 : vector<2x16x16xf32>
    %90 = arith.truncf %89 : vector<2x16x16xf32> to vector<2x16x16xbf16>
    "tpu.trace_start"() <{level = 10 : i32, message = "bqk,bkd->bqd"}> : () -> ()
    %cst_34 = arith.constant dense<0.000000e+00> : vector<2x16x8xf32>
    %91 = tpu.matmul %90, %74, %cst_34 {dimension_numbers = #tpu.dot_dimension_numbers<[2], [1], [1], [2], [0, 0, 0, 1, 1, 2], [0], [0]>} : vector<2x16x16xbf16>, vector<2x16x8xbf16>, vector<2x16x8xf32> -> vector<2x16x8xf32>
    "tpu.trace_stop"() : () -> ()
    %92 = vector.shape_cast %91 : vector<2x16x8xf32> to vector<32x8xf32>
    %93 = arith.truncf %92 : vector<32x8xf32> to vector<32x8xbf16>
    %c0_35 = arith.constant 0 : index
    %c2 = arith.constant 2 : index
    %c0_36 = arith.constant 0 : index
    %c0_37 = arith.constant 0 : index
    %94 = vector.load %arg6[%c0_35, %c2, %c0_36, %c0_37] : memref<2x4x8x32xbf16, #tpu.memory_space<vmem>>, vector<1x1x8x32xbf16>
    %95 = vector.shape_cast %94 : vector<1x1x8x32xbf16> to vector<8x32xbf16>
    %cst_38 = arith.constant dense<0.000000e+00> : vector<32x32xf32>
    %96 = tpu.matmul %93, %95, %cst_38 {dimension_numbers = #tpu.dot_dimension_numbers<[1], [0], [0], [1], [0, 0, 1, 1], [], []>} : vector<32x8xbf16>, vector<8x32xbf16>, vector<32x32xf32> -> vector<32x32xf32>
    %97 = arith.addf %71, %96 : vector<32x32xf32>
    %98 = vector.extract_strided_slice %12 {offsets = [0, 0, 24], sizes = [2, 16, 8], strides = [1, 1, 1]} : vector<2x16x32xbf16> to vector<2x16x8xbf16>
    %99 = vector.extract_strided_slice %15 {offsets = [0, 0, 24], sizes = [2, 16, 8], strides = [1, 1, 1]} : vector<2x16x32xbf16> to vector<2x16x8xbf16>
    %100 = vector.extract_strided_slice %18 {offsets = [0, 0, 24], sizes = [2, 16, 8], strides = [1, 1, 1]} : vector<2x16x32xbf16> to vector<2x16x8xbf16>
    "tpu.trace_start"() <{level = 10 : i32, message = "bqd,bkd->bqk"}> : () -> ()
    %cst_39 = arith.constant dense<0.000000e+00> : vector<2x16x16xf32>
    %101 = tpu.matmul %98, %99, %cst_39 {dimension_numbers = #tpu.dot_dimension_numbers<[2], [2], [1], [1], [0, 0, 0, 1, 1, 1], [0], [0]>} : vector<2x16x8xbf16>, vector<2x16x8xbf16>, vector<2x16x16xf32> -> vector<2x16x16xf32>
    "tpu.trace_stop"() : () -> ()
    %cst_40 = arith.constant 0.353553385 : f32
    %102 = vector.broadcast %cst_40 : f32 to vector<2x16x16xf32>
    %103 = arith.mulf %101, %102 : vector<2x16x16xf32>
    %104 = vector.broadcast %1 : vector<2x1x16xf32> to vector<2x16x16xf32>
    %105 = arith.addf %103, %104 : vector<2x16x16xf32>
    %cst_41 = arith.constant dense<0xFF800000> : vector<2x16xf32>
    %106 = vector.multi_reduction <maximumf>, %105, %cst_41 [2] : vector<2x16x16xf32> to vector<2x16xf32>
    %107 = vector.shape_cast %106 : vector<2x16xf32> to vector<2x16x1xf32>
    %108 = vector.broadcast %107 : vector<2x16x1xf32> to vector<2x16x16xf32>
    %109 = arith.subf %105, %108 : vector<2x16x16xf32>
    %110 = math.exp %109 : vector<2x16x16xf32>
    %cst_42 = arith.constant dense<0.000000e+00> : vector<2x16xf32>
    %111 = vector.multi_reduction <add>, %110, %cst_42 [2] : vector<2x16x16xf32> to vector<2x16xf32>
    %112 = vector.shape_cast %111 : vector<2x16xf32> to vector<2x16x1xf32>
    %113 = tpu.reciprocal %112 {approx = true} : vector<2x16x1xf32> -> vector<2x16x1xf32>
    %114 = vector.broadcast %113 : vector<2x16x1xf32> to vector<2x16x16xf32>
    %115 = arith.mulf %110, %114 : vector<2x16x16xf32>
    %116 = arith.truncf %115 : vector<2x16x16xf32> to vector<2x16x16xbf16>
    "tpu.trace_start"() <{level = 10 : i32, message = "bqk,bkd->bqd"}> : () -> ()
    %cst_43 = arith.constant dense<0.000000e+00> : vector<2x16x8xf32>
    %117 = tpu.matmul %116, %100, %cst_43 {dimension_numbers = #tpu.dot_dimension_numbers<[2], [1], [1], [2], [0, 0, 0, 1, 1, 2], [0], [0]>} : vector<2x16x16xbf16>, vector<2x16x8xbf16>, vector<2x16x8xf32> -> vector<2x16x8xf32>
    "tpu.trace_stop"() : () -> ()
    %118 = vector.shape_cast %117 : vector<2x16x8xf32> to vector<32x8xf32>
    %119 = arith.truncf %118 : vector<32x8xf32> to vector<32x8xbf16>
    %c0_44 = arith.constant 0 : index
    %c3 = arith.constant 3 : index
    %c0_45 = arith.constant 0 : index
    %c0_46 = arith.constant 0 : index
    %120 = vector.load %arg6[%c0_44, %c3, %c0_45, %c0_46] : memref<2x4x8x32xbf16, #tpu.memory_space<vmem>>, vector<1x1x8x32xbf16>
    %121 = vector.shape_cast %120 : vector<1x1x8x32xbf16> to vector<8x32xbf16>
    %cst_47 = arith.constant dense<0.000000e+00> : vector<32x32xf32>
    %122 = tpu.matmul %119, %121, %cst_47 {dimension_numbers = #tpu.dot_dimension_numbers<[1], [0], [0], [1], [0, 0, 1, 1], [], []>} : vector<32x8xbf16>, vector<8x32xbf16>, vector<32x32xf32> -> vector<32x32xf32>
    %123 = arith.addf %97, %122 : vector<32x32xf32>
    %c0_48 = arith.constant 0 : index
    %c0_49 = arith.constant 0 : index
    %c0_50 = arith.constant 0 : index
    %124 = vector.load %arg7[%c0_48, %c0_49, %c0_50] : memref<2x1x32xf32, #tpu.memory_space<vmem>>, vector<1x1x32xf32>
    %125 = vector.shape_cast %124 : vector<1x1x32xf32> to vector<1x32xf32>
    %126 = vector.broadcast %125 : vector<1x32xf32> to vector<32x32xf32>
    %127 = arith.addf %123, %126 : vector<32x32xf32>
    %128 = arith.addf %0, %127 : vector<32x32xf32>
    %c0_51 = arith.constant 0 : index
    %c0_52 = arith.constant 0 : index
    %c0_53 = arith.constant 0 : index
    %129 = vector.load %arg8[%c0_51, %c0_52, %c0_53] : memref<2x1x32xf32, #tpu.memory_space<vmem>>, vector<1x1x32xf32>
    %130 = vector.shape_cast %129 : vector<1x1x32xf32> to vector<1x32xf32>
    %c0_54 = arith.constant 0 : index
    %c0_55 = arith.constant 0 : index
    %c0_56 = arith.constant 0 : index
    %131 = vector.load %arg9[%c0_54, %c0_55, %c0_56] : memref<2x1x32xf32, #tpu.memory_space<vmem>>, vector<1x1x32xf32>
    %132 = vector.shape_cast %131 : vector<1x1x32xf32> to vector<1x32xf32>
    %cst_57 = arith.constant dense<0.000000e+00> : vector<32xf32>
    %133 = vector.multi_reduction <add>, %128, %cst_57 [1] : vector<32x32xf32> to vector<32xf32>
    %134 = vector.shape_cast %133 : vector<32xf32> to vector<32x1xf32>
    %cst_58 = arith.constant 3.200000e+01 : f32
    %135 = vector.broadcast %cst_58 : f32 to vector<32x1xf32>
    %136 = arith.divf %134, %135 : vector<32x1xf32>
    %137 = vector.broadcast %136 : vector<32x1xf32> to vector<32x32xf32>
    %138 = arith.subf %128, %137 : vector<32x32xf32>
    %139 = arith.mulf %138, %138 : vector<32x32xf32>
    %cst_59 = arith.constant dense<0.000000e+00> : vector<32xf32>
    %140 = vector.multi_reduction <add>, %139, %cst_59 [1] : vector<32x32xf32> to vector<32xf32>
    %141 = vector.shape_cast %140 : vector<32xf32> to vector<32x1xf32>
    %cst_60 = arith.constant 3.200000e+01 : f32
    %142 = vector.broadcast %cst_60 : f32 to vector<32x1xf32>
    %143 = arith.divf %141, %142 : vector<32x1xf32>
    %144 = vector.broadcast %136 : vector<32x1xf32> to vector<32x32xf32>
    %145 = arith.subf %128, %144 : vector<32x32xf32>
    %cst_61 = arith.constant 9.99999974E-6 : f32
    %146 = vector.broadcast %cst_61 : f32 to vector<32x1xf32>
    %147 = arith.addf %143, %146 : vector<32x1xf32>
    %148 = math.rsqrt %147 : vector<32x1xf32>
    %149 = vector.broadcast %148 : vector<32x1xf32> to vector<32x32xf32>
    %150 = arith.mulf %145, %149 : vector<32x32xf32>
    %151 = vector.broadcast %130 : vector<1x32xf32> to vector<32x32xf32>
    %152 = arith.mulf %150, %151 : vector<32x32xf32>
    %153 = vector.broadcast %132 : vector<1x32xf32> to vector<32x32xf32>
    %154 = arith.addf %152, %153 : vector<32x32xf32>
    %155 = arith.truncf %154 : vector<32x32xf32> to vector<32x32xbf16>
    %c0_62 = arith.constant 0 : index
    %c0_63 = arith.constant 0 : index
    %c0_64 = arith.constant 0 : index
    %156 = vector.load %arg10[%c0_62, %c0_63, %c0_64] : memref<2x32x64xbf16, #tpu.memory_space<vmem>>, vector<1x32x64xbf16>
    %157 = vector.shape_cast %156 : vector<1x32x64xbf16> to vector<32x64xbf16>
    %cst_65 = arith.constant dense<0.000000e+00> : vector<32x64xf32>
    %158 = tpu.matmul %155, %157, %cst_65 {dimension_numbers = #tpu.dot_dimension_numbers<[1], [0], [0], [1], [0, 0, 1, 1], [], []>} : vector<32x32xbf16>, vector<32x64xbf16>, vector<32x64xf32> -> vector<32x64xf32>
    %c0_66 = arith.constant 0 : index
    %c0_67 = arith.constant 0 : index
    %c0_68 = arith.constant 0 : index
    %159 = vector.load %arg11[%c0_66, %c0_67, %c0_68] : memref<2x1x64xf32, #tpu.memory_space<vmem>>, vector<1x1x64xf32>
    %160 = vector.shape_cast %159 : vector<1x1x64xf32> to vector<1x64xf32>
    %161 = vector.broadcast %160 : vector<1x64xf32> to vector<32x64xf32>
    %162 = arith.addf %158, %161 : vector<32x64xf32>
    %cst_69 = arith.constant 0.000000e+00 : f32
    %163 = vector.broadcast %cst_69 : f32 to vector<32x64xf32>
    %164 = arith.maximumf %162, %163 : vector<32x64xf32>
    %165 = arith.truncf %164 : vector<32x64xf32> to vector<32x64xbf16>
    %c0_70 = arith.constant 0 : index
    %c0_71 = arith.constant 0 : index
    %c0_72 = arith.constant 0 : index
    %166 = vector.load %arg12[%c0_70, %c0_71, %c0_72] : memref<2x64x32xbf16, #tpu.memory_space<vmem>>, vector<1x64x32xbf16>
    %167 = vector.shape_cast %166 : vector<1x64x32xbf16> to vector<64x32xbf16>
    %cst_73 = arith.constant dense<0.000000e+00> : vector<32x32xf32>
    %168 = tpu.matmul %165, %167, %cst_73 {dimension_numbers = #tpu.dot_dimension_numbers<[1], [0], [0], [1], [0, 0, 1, 1], [], []>} : vector<32x64xbf16>, vector<64x32xbf16>, vector<32x32xf32> -> vector<32x32xf32>
    %c0_74 = arith.constant 0 : index
    %c0_75 = arith.constant 0 : index
    %c0_76 = arith.constant 0 : index
    %169 = vector.load %arg13[%c0_74, %c0_75, %c0_76] : memref<2x1x32xf32, #tpu.memory_space<vmem>>, vector<1x1x32xf32>
    %170 = vector.shape_cast %169 : vector<1x1x32xf32> to vector<1x32xf32>
    %171 = vector.broadcast %170 : vector<1x32xf32> to vector<32x32xf32>
    %172 = arith.addf %168, %171 : vector<32x32xf32>
    %173 = arith.addf %154, %172 : vector<32x32xf32>
    %c0_77 = arith.constant 0 : index
    %c0_78 = arith.constant 0 : index
    %c0_79 = arith.constant 0 : index
    %174 = vector.load %arg14[%c0_77, %c0_78, %c0_79] : memref<2x1x32xf32, #tpu.memory_space<vmem>>, vector<1x1x32xf32>
    %175 = vector.shape_cast %174 : vector<1x1x32xf32> to vector<1x32xf32>
    %c0_80 = arith.constant 0 : index
    %c0_81 = arith.constant 0 : index
    %c0_82 = arith.constant 0 : index
    %176 = vector.load %arg15[%c0_80, %c0_81, %c0_82] : memref<2x1x32xf32, #tpu.memory_space<vmem>>, vector<1x1x32xf32>
    %177 = vector.shape_cast %176 : vector<1x1x32xf32> to vector<1x32xf32>
    %cst_83 = arith.constant dense<0.000000e+00> : vector<32xf32>
    %178 = vector.multi_reduction <add>, %173, %cst_83 [1] : vector<32x32xf32> to vector<32xf32>
    %179 = vector.shape_cast %178 : vector<32xf32> to vector<32x1xf32>
    %cst_84 = arith.constant 3.200000e+01 : f32
    %180 = vector.broadcast %cst_84 : f32 to vector<32x1xf32>
    %181 = arith.divf %179, %180 : vector<32x1xf32>
    %182 = vector.broadcast %181 : vector<32x1xf32> to vector<32x32xf32>
    %183 = arith.subf %173, %182 : vector<32x32xf32>
    %184 = arith.mulf %183, %183 : vector<32x32xf32>
    %cst_85 = arith.constant dense<0.000000e+00> : vector<32xf32>
    %185 = vector.multi_reduction <add>, %184, %cst_85 [1] : vector<32x32xf32> to vector<32xf32>
    %186 = vector.shape_cast %185 : vector<32xf32> to vector<32x1xf32>
    %cst_86 = arith.constant 3.200000e+01 : f32
    %187 = vector.broadcast %cst_86 : f32 to vector<32x1xf32>
    %188 = arith.divf %186, %187 : vector<32x1xf32>
    %189 = vector.broadcast %181 : vector<32x1xf32> to vector<32x32xf32>
    %190 = arith.subf %173, %189 : vector<32x32xf32>
    %cst_87 = arith.constant 9.99999974E-6 : f32
    %191 = vector.broadcast %cst_87 : f32 to vector<32x1xf32>
    %192 = arith.addf %188, %191 : vector<32x1xf32>
    %193 = math.rsqrt %192 : vector<32x1xf32>
    %194 = vector.broadcast %193 : vector<32x1xf32> to vector<32x32xf32>
    %195 = arith.mulf %190, %194 : vector<32x32xf32>
    %196 = vector.broadcast %175 : vector<1x32xf32> to vector<32x32xf32>
    %197 = arith.mulf %195, %196 : vector<32x32xf32>
    %198 = vector.broadcast %177 : vector<1x32xf32> to vector<32x32xf32>
    %199 = arith.addf %197, %198 : vector<32x32xf32>
    %200 = arith.truncf %199 : vector<32x32xf32> to vector<32x32xbf16>
    %c1_88 = arith.constant 1 : index
    %c0_89 = arith.constant 0 : index
    %c0_90 = arith.constant 0 : index
    %201 = vector.load %arg4[%c1_88, %c0_89, %c0_90] : memref<2x32x96xbf16, #tpu.memory_space<vmem>>, vector<1x32x96xbf16>
    %202 = vector.shape_cast %201 : vector<1x32x96xbf16> to vector<32x96xbf16>
    %cst_91 = arith.constant dense<0.000000e+00> : vector<32x96xf32>
    %203 = tpu.matmul %200, %202, %cst_91 {dimension_numbers = #tpu.dot_dimension_numbers<[1], [0], [0], [1], [0, 0, 1, 1], [], []>} : vector<32x32xbf16>, vector<32x96xbf16>, vector<32x96xf32> -> vector<32x96xf32>
    %c1_92 = arith.constant 1 : index
    %c0_93 = arith.constant 0 : index
    %c0_94 = arith.constant 0 : index
    %204 = vector.load %arg5[%c1_92, %c0_93, %c0_94] : memref<2x1x96xf32, #tpu.memory_space<vmem>>, vector<1x1x96xf32>
    %205 = vector.shape_cast %204 : vector<1x1x96xf32> to vector<1x96xf32>
    %206 = vector.broadcast %205 : vector<1x96xf32> to vector<32x96xf32>
    %207 = arith.addf %203, %206 : vector<32x96xf32>
    %208 = vector.extract_strided_slice %207 {offsets = [0, 0], sizes = [32, 32], strides = [1, 1]} : vector<32x96xf32> to vector<32x32xf32>
    %209 = vector.shape_cast %208 : vector<32x32xf32> to vector<2x16x32xf32>
    %210 = arith.truncf %209 : vector<2x16x32xf32> to vector<2x16x32xbf16>
    %211 = vector.extract_strided_slice %207 {offsets = [0, 32], sizes = [32, 32], strides = [1, 1]} : vector<32x96xf32> to vector<32x32xf32>
    %212 = vector.shape_cast %211 : vector<32x32xf32> to vector<2x16x32xf32>
    %213 = arith.truncf %212 : vector<2x16x32xf32> to vector<2x16x32xbf16>
    %214 = vector.extract_strided_slice %207 {offsets = [0, 64], sizes = [32, 32], strides = [1, 1]} : vector<32x96xf32> to vector<32x32xf32>
    %215 = vector.shape_cast %214 : vector<32x32xf32> to vector<2x16x32xf32>
    %216 = arith.truncf %215 : vector<2x16x32xf32> to vector<2x16x32xbf16>
    %cst_95 = arith.constant 0.000000e+00 : f32
    %217 = vector.broadcast %cst_95 : f32 to vector<32x32xf32>
    %218 = vector.extract_strided_slice %210 {offsets = [0, 0, 0], sizes = [2, 16, 8], strides = [1, 1, 1]} : vector<2x16x32xbf16> to vector<2x16x8xbf16>
    %219 = vector.extract_strided_slice %213 {offsets = [0, 0, 0], sizes = [2, 16, 8], strides = [1, 1, 1]} : vector<2x16x32xbf16> to vector<2x16x8xbf16>
    %220 = vector.extract_strided_slice %216 {offsets = [0, 0, 0], sizes = [2, 16, 8], strides = [1, 1, 1]} : vector<2x16x32xbf16> to vector<2x16x8xbf16>
    "tpu.trace_start"() <{level = 10 : i32, message = "bqd,bkd->bqk"}> : () -> ()
    %cst_96 = arith.constant dense<0.000000e+00> : vector<2x16x16xf32>
    %221 = tpu.matmul %218, %219, %cst_96 {dimension_numbers = #tpu.dot_dimension_numbers<[2], [2], [1], [1], [0, 0, 0, 1, 1, 1], [0], [0]>} : vector<2x16x8xbf16>, vector<2x16x8xbf16>, vector<2x16x16xf32> -> vector<2x16x16xf32>
    "tpu.trace_stop"() : () -> ()
    %cst_97 = arith.constant 0.353553385 : f32
    %222 = vector.broadcast %cst_97 : f32 to vector<2x16x16xf32>
    %223 = arith.mulf %221, %222 : vector<2x16x16xf32>
    %224 = vector.broadcast %1 : vector<2x1x16xf32> to vector<2x16x16xf32>
    %225 = arith.addf %223, %224 : vector<2x16x16xf32>
    %cst_98 = arith.constant dense<0xFF800000> : vector<2x16xf32>
    %226 = vector.multi_reduction <maximumf>, %225, %cst_98 [2] : vector<2x16x16xf32> to vector<2x16xf32>
    %227 = vector.shape_cast %226 : vector<2x16xf32> to vector<2x16x1xf32>
    %228 = vector.broadcast %227 : vector<2x16x1xf32> to vector<2x16x16xf32>
    %229 = arith.subf %225, %228 : vector<2x16x16xf32>
    %230 = math.exp %229 : vector<2x16x16xf32>
    %cst_99 = arith.constant dense<0.000000e+00> : vector<2x16xf32>
    %231 = vector.multi_reduction <add>, %230, %cst_99 [2] : vector<2x16x16xf32> to vector<2x16xf32>
    %232 = vector.shape_cast %231 : vector<2x16xf32> to vector<2x16x1xf32>
    %233 = tpu.reciprocal %232 {approx = true} : vector<2x16x1xf32> -> vector<2x16x1xf32>
    %234 = vector.broadcast %233 : vector<2x16x1xf32> to vector<2x16x16xf32>
    %235 = arith.mulf %230, %234 : vector<2x16x16xf32>
    %236 = arith.truncf %235 : vector<2x16x16xf32> to vector<2x16x16xbf16>
    "tpu.trace_start"() <{level = 10 : i32, message = "bqk,bkd->bqd"}> : () -> ()
    %cst_100 = arith.constant dense<0.000000e+00> : vector<2x16x8xf32>
    %237 = tpu.matmul %236, %220, %cst_100 {dimension_numbers = #tpu.dot_dimension_numbers<[2], [1], [1], [2], [0, 0, 0, 1, 1, 2], [0], [0]>} : vector<2x16x16xbf16>, vector<2x16x8xbf16>, vector<2x16x8xf32> -> vector<2x16x8xf32>
    "tpu.trace_stop"() : () -> ()
    %238 = vector.shape_cast %237 : vector<2x16x8xf32> to vector<32x8xf32>
    %239 = arith.truncf %238 : vector<32x8xf32> to vector<32x8xbf16>
    %c1_101 = arith.constant 1 : index
    %c0_102 = arith.constant 0 : index
    %c0_103 = arith.constant 0 : index
    %c0_104 = arith.constant 0 : index
    %240 = vector.load %arg6[%c1_101, %c0_102, %c0_103, %c0_104] : memref<2x4x8x32xbf16, #tpu.memory_space<vmem>>, vector<1x1x8x32xbf16>
    %241 = vector.shape_cast %240 : vector<1x1x8x32xbf16> to vector<8x32xbf16>
    %cst_105 = arith.constant dense<0.000000e+00> : vector<32x32xf32>
    %242 = tpu.matmul %239, %241, %cst_105 {dimension_numbers = #tpu.dot_dimension_numbers<[1], [0], [0], [1], [0, 0, 1, 1], [], []>} : vector<32x8xbf16>, vector<8x32xbf16>, vector<32x32xf32> -> vector<32x32xf32>
    %243 = arith.addf %217, %242 : vector<32x32xf32>
    %244 = vector.extract_strided_slice %210 {offsets = [0, 0, 8], sizes = [2, 16, 8], strides = [1, 1, 1]} : vector<2x16x32xbf16> to vector<2x16x8xbf16>
    %245 = vector.extract_strided_slice %213 {offsets = [0, 0, 8], sizes = [2, 16, 8], strides = [1, 1, 1]} : vector<2x16x32xbf16> to vector<2x16x8xbf16>
    %246 = vector.extract_strided_slice %216 {offsets = [0, 0, 8], sizes = [2, 16, 8], strides = [1, 1, 1]} : vector<2x16x32xbf16> to vector<2x16x8xbf16>
    "tpu.trace_start"() <{level = 10 : i32, message = "bqd,bkd->bqk"}> : () -> ()
    %cst_106 = arith.constant dense<0.000000e+00> : vector<2x16x16xf32>
    %247 = tpu.matmul %244, %245, %cst_106 {dimension_numbers = #tpu.dot_dimension_numbers<[2], [2], [1], [1], [0, 0, 0, 1, 1, 1], [0], [0]>} : vector<2x16x8xbf16>, vector<2x16x8xbf16>, vector<2x16x16xf32> -> vector<2x16x16xf32>
    "tpu.trace_stop"() : () -> ()
    %cst_107 = arith.constant 0.353553385 : f32
    %248 = vector.broadcast %cst_107 : f32 to vector<2x16x16xf32>
    %249 = arith.mulf %247, %248 : vector<2x16x16xf32>
    %250 = vector.broadcast %1 : vector<2x1x16xf32> to vector<2x16x16xf32>
    %251 = arith.addf %249, %250 : vector<2x16x16xf32>
    %cst_108 = arith.constant dense<0xFF800000> : vector<2x16xf32>
    %252 = vector.multi_reduction <maximumf>, %251, %cst_108 [2] : vector<2x16x16xf32> to vector<2x16xf32>
    %253 = vector.shape_cast %252 : vector<2x16xf32> to vector<2x16x1xf32>
    %254 = vector.broadcast %253 : vector<2x16x1xf32> to vector<2x16x16xf32>
    %255 = arith.subf %251, %254 : vector<2x16x16xf32>
    %256 = math.exp %255 : vector<2x16x16xf32>
    %cst_109 = arith.constant dense<0.000000e+00> : vector<2x16xf32>
    %257 = vector.multi_reduction <add>, %256, %cst_109 [2] : vector<2x16x16xf32> to vector<2x16xf32>
    %258 = vector.shape_cast %257 : vector<2x16xf32> to vector<2x16x1xf32>
    %259 = tpu.reciprocal %258 {approx = true} : vector<2x16x1xf32> -> vector<2x16x1xf32>
    %260 = vector.broadcast %259 : vector<2x16x1xf32> to vector<2x16x16xf32>
    %261 = arith.mulf %256, %260 : vector<2x16x16xf32>
    %262 = arith.truncf %261 : vector<2x16x16xf32> to vector<2x16x16xbf16>
    "tpu.trace_start"() <{level = 10 : i32, message = "bqk,bkd->bqd"}> : () -> ()
    %cst_110 = arith.constant dense<0.000000e+00> : vector<2x16x8xf32>
    %263 = tpu.matmul %262, %246, %cst_110 {dimension_numbers = #tpu.dot_dimension_numbers<[2], [1], [1], [2], [0, 0, 0, 1, 1, 2], [0], [0]>} : vector<2x16x16xbf16>, vector<2x16x8xbf16>, vector<2x16x8xf32> -> vector<2x16x8xf32>
    "tpu.trace_stop"() : () -> ()
    %264 = vector.shape_cast %263 : vector<2x16x8xf32> to vector<32x8xf32>
    %265 = arith.truncf %264 : vector<32x8xf32> to vector<32x8xbf16>
    %c1_111 = arith.constant 1 : index
    %c1_112 = arith.constant 1 : index
    %c0_113 = arith.constant 0 : index
    %c0_114 = arith.constant 0 : index
    %266 = vector.load %arg6[%c1_111, %c1_112, %c0_113, %c0_114] : memref<2x4x8x32xbf16, #tpu.memory_space<vmem>>, vector<1x1x8x32xbf16>
    %267 = vector.shape_cast %266 : vector<1x1x8x32xbf16> to vector<8x32xbf16>
    %cst_115 = arith.constant dense<0.000000e+00> : vector<32x32xf32>
    %268 = tpu.matmul %265, %267, %cst_115 {dimension_numbers = #tpu.dot_dimension_numbers<[1], [0], [0], [1], [0, 0, 1, 1], [], []>} : vector<32x8xbf16>, vector<8x32xbf16>, vector<32x32xf32> -> vector<32x32xf32>
    %269 = arith.addf %243, %268 : vector<32x32xf32>
    %270 = vector.extract_strided_slice %210 {offsets = [0, 0, 16], sizes = [2, 16, 8], strides = [1, 1, 1]} : vector<2x16x32xbf16> to vector<2x16x8xbf16>
    %271 = vector.extract_strided_slice %213 {offsets = [0, 0, 16], sizes = [2, 16, 8], strides = [1, 1, 1]} : vector<2x16x32xbf16> to vector<2x16x8xbf16>
    %272 = vector.extract_strided_slice %216 {offsets = [0, 0, 16], sizes = [2, 16, 8], strides = [1, 1, 1]} : vector<2x16x32xbf16> to vector<2x16x8xbf16>
    "tpu.trace_start"() <{level = 10 : i32, message = "bqd,bkd->bqk"}> : () -> ()
    %cst_116 = arith.constant dense<0.000000e+00> : vector<2x16x16xf32>
    %273 = tpu.matmul %270, %271, %cst_116 {dimension_numbers = #tpu.dot_dimension_numbers<[2], [2], [1], [1], [0, 0, 0, 1, 1, 1], [0], [0]>} : vector<2x16x8xbf16>, vector<2x16x8xbf16>, vector<2x16x16xf32> -> vector<2x16x16xf32>
    "tpu.trace_stop"() : () -> ()
    %cst_117 = arith.constant 0.353553385 : f32
    %274 = vector.broadcast %cst_117 : f32 to vector<2x16x16xf32>
    %275 = arith.mulf %273, %274 : vector<2x16x16xf32>
    %276 = vector.broadcast %1 : vector<2x1x16xf32> to vector<2x16x16xf32>
    %277 = arith.addf %275, %276 : vector<2x16x16xf32>
    %cst_118 = arith.constant dense<0xFF800000> : vector<2x16xf32>
    %278 = vector.multi_reduction <maximumf>, %277, %cst_118 [2] : vector<2x16x16xf32> to vector<2x16xf32>
    %279 = vector.shape_cast %278 : vector<2x16xf32> to vector<2x16x1xf32>
    %280 = vector.broadcast %279 : vector<2x16x1xf32> to vector<2x16x16xf32>
    %281 = arith.subf %277, %280 : vector<2x16x16xf32>
    %282 = math.exp %281 : vector<2x16x16xf32>
    %cst_119 = arith.constant dense<0.000000e+00> : vector<2x16xf32>
    %283 = vector.multi_reduction <add>, %282, %cst_119 [2] : vector<2x16x16xf32> to vector<2x16xf32>
    %284 = vector.shape_cast %283 : vector<2x16xf32> to vector<2x16x1xf32>
    %285 = tpu.reciprocal %284 {approx = true} : vector<2x16x1xf32> -> vector<2x16x1xf32>
    %286 = vector.broadcast %285 : vector<2x16x1xf32> to vector<2x16x16xf32>
    %287 = arith.mulf %282, %286 : vector<2x16x16xf32>
    %288 = arith.truncf %287 : vector<2x16x16xf32> to vector<2x16x16xbf16>
    "tpu.trace_start"() <{level = 10 : i32, message = "bqk,bkd->bqd"}> : () -> ()
    %cst_120 = arith.constant dense<0.000000e+00> : vector<2x16x8xf32>
    %289 = tpu.matmul %288, %272, %cst_120 {dimension_numbers = #tpu.dot_dimension_numbers<[2], [1], [1], [2], [0, 0, 0, 1, 1, 2], [0], [0]>} : vector<2x16x16xbf16>, vector<2x16x8xbf16>, vector<2x16x8xf32> -> vector<2x16x8xf32>
    "tpu.trace_stop"() : () -> ()
    %290 = vector.shape_cast %289 : vector<2x16x8xf32> to vector<32x8xf32>
    %291 = arith.truncf %290 : vector<32x8xf32> to vector<32x8xbf16>
    %c1_121 = arith.constant 1 : index
    %c2_122 = arith.constant 2 : index
    %c0_123 = arith.constant 0 : index
    %c0_124 = arith.constant 0 : index
    %292 = vector.load %arg6[%c1_121, %c2_122, %c0_123, %c0_124] : memref<2x4x8x32xbf16, #tpu.memory_space<vmem>>, vector<1x1x8x32xbf16>
    %293 = vector.shape_cast %292 : vector<1x1x8x32xbf16> to vector<8x32xbf16>
    %cst_125 = arith.constant dense<0.000000e+00> : vector<32x32xf32>
    %294 = tpu.matmul %291, %293, %cst_125 {dimension_numbers = #tpu.dot_dimension_numbers<[1], [0], [0], [1], [0, 0, 1, 1], [], []>} : vector<32x8xbf16>, vector<8x32xbf16>, vector<32x32xf32> -> vector<32x32xf32>
    %295 = arith.addf %269, %294 : vector<32x32xf32>
    %296 = vector.extract_strided_slice %210 {offsets = [0, 0, 24], sizes = [2, 16, 8], strides = [1, 1, 1]} : vector<2x16x32xbf16> to vector<2x16x8xbf16>
    %297 = vector.extract_strided_slice %213 {offsets = [0, 0, 24], sizes = [2, 16, 8], strides = [1, 1, 1]} : vector<2x16x32xbf16> to vector<2x16x8xbf16>
    %298 = vector.extract_strided_slice %216 {offsets = [0, 0, 24], sizes = [2, 16, 8], strides = [1, 1, 1]} : vector<2x16x32xbf16> to vector<2x16x8xbf16>
    "tpu.trace_start"() <{level = 10 : i32, message = "bqd,bkd->bqk"}> : () -> ()
    %cst_126 = arith.constant dense<0.000000e+00> : vector<2x16x16xf32>
    %299 = tpu.matmul %296, %297, %cst_126 {dimension_numbers = #tpu.dot_dimension_numbers<[2], [2], [1], [1], [0, 0, 0, 1, 1, 1], [0], [0]>} : vector<2x16x8xbf16>, vector<2x16x8xbf16>, vector<2x16x16xf32> -> vector<2x16x16xf32>
    "tpu.trace_stop"() : () -> ()
    %cst_127 = arith.constant 0.353553385 : f32
    %300 = vector.broadcast %cst_127 : f32 to vector<2x16x16xf32>
    %301 = arith.mulf %299, %300 : vector<2x16x16xf32>
    %302 = vector.broadcast %1 : vector<2x1x16xf32> to vector<2x16x16xf32>
    %303 = arith.addf %301, %302 : vector<2x16x16xf32>
    %cst_128 = arith.constant dense<0xFF800000> : vector<2x16xf32>
    %304 = vector.multi_reduction <maximumf>, %303, %cst_128 [2] : vector<2x16x16xf32> to vector<2x16xf32>
    %305 = vector.shape_cast %304 : vector<2x16xf32> to vector<2x16x1xf32>
    %306 = vector.broadcast %305 : vector<2x16x1xf32> to vector<2x16x16xf32>
    %307 = arith.subf %303, %306 : vector<2x16x16xf32>
    %308 = math.exp %307 : vector<2x16x16xf32>
    %cst_129 = arith.constant dense<0.000000e+00> : vector<2x16xf32>
    %309 = vector.multi_reduction <add>, %308, %cst_129 [2] : vector<2x16x16xf32> to vector<2x16xf32>
    %310 = vector.shape_cast %309 : vector<2x16xf32> to vector<2x16x1xf32>
    %311 = tpu.reciprocal %310 {approx = true} : vector<2x16x1xf32> -> vector<2x16x1xf32>
    %312 = vector.broadcast %311 : vector<2x16x1xf32> to vector<2x16x16xf32>
    %313 = arith.mulf %308, %312 : vector<2x16x16xf32>
    %314 = arith.truncf %313 : vector<2x16x16xf32> to vector<2x16x16xbf16>
    "tpu.trace_start"() <{level = 10 : i32, message = "bqk,bkd->bqd"}> : () -> ()
    %cst_130 = arith.constant dense<0.000000e+00> : vector<2x16x8xf32>
    %315 = tpu.matmul %314, %298, %cst_130 {dimension_numbers = #tpu.dot_dimension_numbers<[2], [1], [1], [2], [0, 0, 0, 1, 1, 2], [0], [0]>} : vector<2x16x16xbf16>, vector<2x16x8xbf16>, vector<2x16x8xf32> -> vector<2x16x8xf32>
    "tpu.trace_stop"() : () -> ()
    %316 = vector.shape_cast %315 : vector<2x16x8xf32> to vector<32x8xf32>
    %317 = arith.truncf %316 : vector<32x8xf32> to vector<32x8xbf16>
    %c1_131 = arith.constant 1 : index
    %c3_132 = arith.constant 3 : index
    %c0_133 = arith.constant 0 : index
    %c0_134 = arith.constant 0 : index
    %318 = vector.load %arg6[%c1_131, %c3_132, %c0_133, %c0_134] : memref<2x4x8x32xbf16, #tpu.memory_space<vmem>>, vector<1x1x8x32xbf16>
    %319 = vector.shape_cast %318 : vector<1x1x8x32xbf16> to vector<8x32xbf16>
    %cst_135 = arith.constant dense<0.000000e+00> : vector<32x32xf32>
    %320 = tpu.matmul %317, %319, %cst_135 {dimension_numbers = #tpu.dot_dimension_numbers<[1], [0], [0], [1], [0, 0, 1, 1], [], []>} : vector<32x8xbf16>, vector<8x32xbf16>, vector<32x32xf32> -> vector<32x32xf32>
    %321 = arith.addf %295, %320 : vector<32x32xf32>
    %c1_136 = arith.constant 1 : index
    %c0_137 = arith.constant 0 : index
    %c0_138 = arith.constant 0 : index
    %322 = vector.load %arg7[%c1_136, %c0_137, %c0_138] : memref<2x1x32xf32, #tpu.memory_space<vmem>>, vector<1x1x32xf32>
    %323 = vector.shape_cast %322 : vector<1x1x32xf32> to vector<1x32xf32>
    %324 = vector.broadcast %323 : vector<1x32xf32> to vector<32x32xf32>
    %325 = arith.addf %321, %324 : vector<32x32xf32>
    %326 = arith.addf %199, %325 : vector<32x32xf32>
    %c1_139 = arith.constant 1 : index
    %c0_140 = arith.constant 0 : index
    %c0_141 = arith.constant 0 : index
    %327 = vector.load %arg8[%c1_139, %c0_140, %c0_141] : memref<2x1x32xf32, #tpu.memory_space<vmem>>, vector<1x1x32xf32>
    %328 = vector.shape_cast %327 : vector<1x1x32xf32> to vector<1x32xf32>
    %c1_142 = arith.constant 1 : index
    %c0_143 = arith.constant 0 : index
    %c0_144 = arith.constant 0 : index
    %329 = vector.load %arg9[%c1_142, %c0_143, %c0_144] : memref<2x1x32xf32, #tpu.memory_space<vmem>>, vector<1x1x32xf32>
    %330 = vector.shape_cast %329 : vector<1x1x32xf32> to vector<1x32xf32>
    %cst_145 = arith.constant dense<0.000000e+00> : vector<32xf32>
    %331 = vector.multi_reduction <add>, %326, %cst_145 [1] : vector<32x32xf32> to vector<32xf32>
    %332 = vector.shape_cast %331 : vector<32xf32> to vector<32x1xf32>
    %cst_146 = arith.constant 3.200000e+01 : f32
    %333 = vector.broadcast %cst_146 : f32 to vector<32x1xf32>
    %334 = arith.divf %332, %333 : vector<32x1xf32>
    %335 = vector.broadcast %334 : vector<32x1xf32> to vector<32x32xf32>
    %336 = arith.subf %326, %335 : vector<32x32xf32>
    %337 = arith.mulf %336, %336 : vector<32x32xf32>
    %cst_147 = arith.constant dense<0.000000e+00> : vector<32xf32>
    %338 = vector.multi_reduction <add>, %337, %cst_147 [1] : vector<32x32xf32> to vector<32xf32>
    %339 = vector.shape_cast %338 : vector<32xf32> to vector<32x1xf32>
    %cst_148 = arith.constant 3.200000e+01 : f32
    %340 = vector.broadcast %cst_148 : f32 to vector<32x1xf32>
    %341 = arith.divf %339, %340 : vector<32x1xf32>
    %342 = vector.broadcast %334 : vector<32x1xf32> to vector<32x32xf32>
    %343 = arith.subf %326, %342 : vector<32x32xf32>
    %cst_149 = arith.constant 9.99999974E-6 : f32
    %344 = vector.broadcast %cst_149 : f32 to vector<32x1xf32>
    %345 = arith.addf %341, %344 : vector<32x1xf32>
    %346 = math.rsqrt %345 : vector<32x1xf32>
    %347 = vector.broadcast %346 : vector<32x1xf32> to vector<32x32xf32>
    %348 = arith.mulf %343, %347 : vector<32x32xf32>
    %349 = vector.broadcast %328 : vector<1x32xf32> to vector<32x32xf32>
    %350 = arith.mulf %348, %349 : vector<32x32xf32>
    %351 = vector.broadcast %330 : vector<1x32xf32> to vector<32x32xf32>
    %352 = arith.addf %350, %351 : vector<32x32xf32>
    %353 = arith.truncf %352 : vector<32x32xf32> to vector<32x32xbf16>
    %c1_150 = arith.constant 1 : index
    %c0_151 = arith.constant 0 : index
    %c0_152 = arith.constant 0 : index
    %354 = vector.load %arg10[%c1_150, %c0_151, %c0_152] : memref<2x32x64xbf16, #tpu.memory_space<vmem>>, vector<1x32x64xbf16>
    %355 = vector.shape_cast %354 : vector<1x32x64xbf16> to vector<32x64xbf16>
    %cst_153 = arith.constant dense<0.000000e+00> : vector<32x64xf32>
    %356 = tpu.matmul %353, %355, %cst_153 {dimension_numbers = #tpu.dot_dimension_numbers<[1], [0], [0], [1], [0, 0, 1, 1], [], []>} : vector<32x32xbf16>, vector<32x64xbf16>, vector<32x64xf32> -> vector<32x64xf32>
    %c1_154 = arith.constant 1 : index
    %c0_155 = arith.constant 0 : index
    %c0_156 = arith.constant 0 : index
    %357 = vector.load %arg11[%c1_154, %c0_155, %c0_156] : memref<2x1x64xf32, #tpu.memory_space<vmem>>, vector<1x1x64xf32>
    %358 = vector.shape_cast %357 : vector<1x1x64xf32> to vector<1x64xf32>
    %359 = vector.broadcast %358 : vector<1x64xf32> to vector<32x64xf32>
    %360 = arith.addf %356, %359 : vector<32x64xf32>
    %cst_157 = arith.constant 0.000000e+00 : f32
    %361 = vector.broadcast %cst_157 : f32 to vector<32x64xf32>
    %362 = arith.maximumf %360, %361 : vector<32x64xf32>
    %363 = arith.truncf %362 : vector<32x64xf32> to vector<32x64xbf16>
    %c1_158 = arith.constant 1 : index
    %c0_159 = arith.constant 0 : index
    %c0_160 = arith.constant 0 : index
    %364 = vector.load %arg12[%c1_158, %c0_159, %c0_160] : memref<2x64x32xbf16, #tpu.memory_space<vmem>>, vector<1x64x32xbf16>
    %365 = vector.shape_cast %364 : vector<1x64x32xbf16> to vector<64x32xbf16>
    %cst_161 = arith.constant dense<0.000000e+00> : vector<32x32xf32>
    %366 = tpu.matmul %363, %365, %cst_161 {dimension_numbers = #tpu.dot_dimension_numbers<[1], [0], [0], [1], [0, 0, 1, 1], [], []>} : vector<32x64xbf16>, vector<64x32xbf16>, vector<32x32xf32> -> vector<32x32xf32>
    %c1_162 = arith.constant 1 : index
    %c0_163 = arith.constant 0 : index
    %c0_164 = arith.constant 0 : index
    %367 = vector.load %arg13[%c1_162, %c0_163, %c0_164] : memref<2x1x32xf32, #tpu.memory_space<vmem>>, vector<1x1x32xf32>
    %368 = vector.shape_cast %367 : vector<1x1x32xf32> to vector<1x32xf32>
    %369 = vector.broadcast %368 : vector<1x32xf32> to vector<32x32xf32>
    %370 = arith.addf %366, %369 : vector<32x32xf32>
    %371 = arith.addf %352, %370 : vector<32x32xf32>
    %c1_165 = arith.constant 1 : index
    %c0_166 = arith.constant 0 : index
    %c0_167 = arith.constant 0 : index
    %372 = vector.load %arg14[%c1_165, %c0_166, %c0_167] : memref<2x1x32xf32, #tpu.memory_space<vmem>>, vector<1x1x32xf32>
    %373 = vector.shape_cast %372 : vector<1x1x32xf32> to vector<1x32xf32>
    %c1_168 = arith.constant 1 : index
    %c0_169 = arith.constant 0 : index
    %c0_170 = arith.constant 0 : index
    %374 = vector.load %arg15[%c1_168, %c0_169, %c0_170] : memref<2x1x32xf32, #tpu.memory_space<vmem>>, vector<1x1x32xf32>
    %375 = vector.shape_cast %374 : vector<1x1x32xf32> to vector<1x32xf32>
    %cst_171 = arith.constant dense<0.000000e+00> : vector<32xf32>
    %376 = vector.multi_reduction <add>, %371, %cst_171 [1] : vector<32x32xf32> to vector<32xf32>
    %377 = vector.shape_cast %376 : vector<32xf32> to vector<32x1xf32>
    %cst_172 = arith.constant 3.200000e+01 : f32
    %378 = vector.broadcast %cst_172 : f32 to vector<32x1xf32>
    %379 = arith.divf %377, %378 : vector<32x1xf32>
    %380 = vector.broadcast %379 : vector<32x1xf32> to vector<32x32xf32>
    %381 = arith.subf %371, %380 : vector<32x32xf32>
    %382 = arith.mulf %381, %381 : vector<32x32xf32>
    %cst_173 = arith.constant dense<0.000000e+00> : vector<32xf32>
    %383 = vector.multi_reduction <add>, %382, %cst_173 [1] : vector<32x32xf32> to vector<32xf32>
    %384 = vector.shape_cast %383 : vector<32xf32> to vector<32x1xf32>
    %cst_174 = arith.constant 3.200000e+01 : f32
    %385 = vector.broadcast %cst_174 : f32 to vector<32x1xf32>
    %386 = arith.divf %384, %385 : vector<32x1xf32>
    %387 = vector.broadcast %379 : vector<32x1xf32> to vector<32x32xf32>
    %388 = arith.subf %371, %387 : vector<32x32xf32>
    %cst_175 = arith.constant 9.99999974E-6 : f32
    %389 = vector.broadcast %cst_175 : f32 to vector<32x1xf32>
    %390 = arith.addf %386, %389 : vector<32x1xf32>
    %391 = math.rsqrt %390 : vector<32x1xf32>
    %392 = vector.broadcast %391 : vector<32x1xf32> to vector<32x32xf32>
    %393 = arith.mulf %388, %392 : vector<32x32xf32>
    %394 = vector.broadcast %373 : vector<1x32xf32> to vector<32x32xf32>
    %395 = arith.mulf %393, %394 : vector<32x32xf32>
    %396 = vector.broadcast %375 : vector<1x32xf32> to vector<32x32xf32>
    %397 = arith.addf %395, %396 : vector<32x32xf32>
    %c0_176 = arith.constant 0 : index
    %c0_177 = arith.constant 0 : index
    %398 = vector.load %arg16[%c0_176, %c0_177] : memref<1x32xf32, #tpu.memory_space<vmem>>, vector<1x32xf32>
    %c0_178 = arith.constant 0 : index
    %c0_179 = arith.constant 0 : index
    %399 = vector.load %arg17[%c0_178, %c0_179] : memref<1x32xf32, #tpu.memory_space<vmem>>, vector<1x32xf32>
    %cst_180 = arith.constant dense<0.000000e+00> : vector<32xf32>
    %400 = vector.multi_reduction <add>, %397, %cst_180 [1] : vector<32x32xf32> to vector<32xf32>
    %401 = vector.shape_cast %400 : vector<32xf32> to vector<32x1xf32>
    %cst_181 = arith.constant 3.200000e+01 : f32
    %402 = vector.broadcast %cst_181 : f32 to vector<32x1xf32>
    %403 = arith.divf %401, %402 : vector<32x1xf32>
    %404 = vector.broadcast %403 : vector<32x1xf32> to vector<32x32xf32>
    %405 = arith.subf %397, %404 : vector<32x32xf32>
    %406 = arith.mulf %405, %405 : vector<32x32xf32>
    %cst_182 = arith.constant dense<0.000000e+00> : vector<32xf32>
    %407 = vector.multi_reduction <add>, %406, %cst_182 [1] : vector<32x32xf32> to vector<32xf32>
    %408 = vector.shape_cast %407 : vector<32xf32> to vector<32x1xf32>
    %cst_183 = arith.constant 3.200000e+01 : f32
    %409 = vector.broadcast %cst_183 : f32 to vector<32x1xf32>
    %410 = arith.divf %408, %409 : vector<32x1xf32>
    %411 = vector.broadcast %403 : vector<32x1xf32> to vector<32x32xf32>
    %412 = arith.subf %397, %411 : vector<32x32xf32>
    %cst_184 = arith.constant 9.99999974E-6 : f32
    %413 = vector.broadcast %cst_184 : f32 to vector<32x1xf32>
    %414 = arith.addf %410, %413 : vector<32x1xf32>
    %415 = math.rsqrt %414 : vector<32x1xf32>
    %416 = vector.broadcast %415 : vector<32x1xf32> to vector<32x32xf32>
    %417 = arith.mulf %412, %416 : vector<32x32xf32>
    %418 = vector.broadcast %398 : vector<1x32xf32> to vector<32x32xf32>
    %419 = arith.mulf %417, %418 : vector<32x32xf32>
    %420 = vector.broadcast %399 : vector<1x32xf32> to vector<32x32xf32>
    %421 = arith.addf %419, %420 : vector<32x32xf32>
    %422 = vector.shape_cast %421 : vector<32x32xf32> to vector<2x16x32xf32>
    %c0_185 = arith.constant 0 : index
    %c0_186 = arith.constant 0 : index
    %c0_187 = arith.constant 0 : index
    %423 = vector.load %arg3[%c0_185, %c0_186, %c0_187] : memref<2x16x1xf32, #tpu.memory_space<vmem>>, vector<2x16x1xf32>
    %424 = vector.broadcast %423 : vector<2x16x1xf32> to vector<2x16x32xf32>
    %425 = arith.mulf %422, %424 : vector<2x16x32xf32>
    %cst_188 = arith.constant dense<0.000000e+00> : vector<2x32xf32>
    %426 = vector.multi_reduction <add>, %425, %cst_188 [1] : vector<2x16x32xf32> to vector<2x32xf32>
    %427 = arith.truncf %426 : vector<2x32xf32> to vector<2x32xbf16>
    %c0_189 = arith.constant 0 : index
    %c0_190 = arith.constant 0 : index
    %428 = vector.load %arg18[%c0_189, %c0_190] : memref<32x32xbf16, #tpu.memory_space<vmem>>, vector<32x32xbf16>
    %cst_191 = arith.constant dense<0.000000e+00> : vector<2x32xf32>
    %429 = tpu.matmul %427, %428, %cst_191 {dimension_numbers = #tpu.dot_dimension_numbers<[1], [0], [0], [1], [0, 0, 1, 1], [], []>} : vector<2x32xbf16>, vector<32x32xbf16>, vector<2x32xf32> -> vector<2x32xf32>
    %c0_192 = arith.constant 0 : index
    %c0_193 = arith.constant 0 : index
    %430 = vector.load %arg19[%c0_192, %c0_193] : memref<1x32xf32, #tpu.memory_space<vmem>>, vector<1x32xf32>
    %431 = vector.broadcast %430 : vector<1x32xf32> to vector<2x32xf32>
    %432 = arith.addf %429, %431 : vector<2x32xf32>
    %cst_194 = arith.constant 0.000000e+00 : f32
    %433 = vector.broadcast %cst_194 : f32 to vector<2x32xf32>
    %434 = arith.maximumf %432, %433 : vector<2x32xf32>
    %c0_195 = arith.constant 0 : index
    %c0_196 = arith.constant 0 : index
    %435 = vector.load %arg20[%c0_195, %c0_196] : memref<1x32xf32, #tpu.memory_space<vmem>>, vector<1x32xf32>
    %436 = vector.broadcast %435 : vector<1x32xf32> to vector<2x32xf32>
    %437 = arith.mulf %434, %436 : vector<2x32xf32>
    %cst_197 = arith.constant dense<0.000000e+00> : vector<2xf32>
    %438 = vector.multi_reduction <add>, %437, %cst_197 [1] : vector<2x32xf32> to vector<2xf32>
    %439 = vector.shape_cast %438 : vector<2xf32> to vector<2x1xf32>
    %c0_198 = arith.constant 0 : index
    %c0_199 = arith.constant 0 : index
    %440 = vector.load %arg21[%c0_198, %c0_199] : memref<1x1xf32, #tpu.memory_space<vmem>>, vector<1x1xf32>
    %441 = vector.broadcast %440 : vector<1x1xf32> to vector<2x1xf32>
    %442 = arith.addf %439, %441 : vector<2x1xf32>
    %c0_200 = arith.constant 0 : index
    %c0_201 = arith.constant 0 : index
    %443 = vector.load %arg22[%c0_200, %c0_201] : memref<2x1xf32, #tpu.memory_space<vmem>>, vector<2x1xf32>
    tpu.vector_store %arg22[%c0_200, %c0_201], %442 {strides = array<i32>} : memref<2x1xf32, #tpu.memory_space<vmem>>, vector<2x1xf32>,
    return
  }
  func.func @transform_0(%arg0: i32) -> (i32, i32) {
    %c0_i32 = arith.constant 0 : i32
    %c0_i32_0 = arith.constant 0 : i32
    %c0_i32_1 = arith.constant 0 : i32
    return %c0_i32, %c0_i32_0 : i32, i32
  }
  func.func @transform_1(%arg0: i32) -> (i32, i32, i32) {
    %c0_i32 = arith.constant 0 : i32
    %c0_i32_0 = arith.constant 0 : i32
    %c0_i32_1 = arith.constant 0 : i32
    %c0_i32_2 = arith.constant 0 : i32
    return %c0_i32, %c0_i32_0, %c0_i32_1 : i32, i32, i32
  }
  func.func @transform_2(%arg0: i32) -> (i32, i32, i32) {
    %c0_i32 = arith.constant 0 : i32
    %c0_i32_0 = arith.constant 0 : i32
    %c0_i32_1 = arith.constant 0 : i32
    %c0_i32_2 = arith.constant 0 : i32
    return %c0_i32, %c0_i32_0, %c0_i32_1 : i32, i32, i32
  }
  func.func @transform_3(%arg0: i32) -> (i32, i32, i32) {
    %c0_i32 = arith.constant 0 : i32
    %c0_i32_0 = arith.constant 0 : i32
    %c0_i32_1 = arith.constant 0 : i32
    %c0_i32_2 = arith.constant 0 : i32
    return %c0_i32, %c0_i32_0, %c0_i32_1 : i32, i32, i32
  }
  func.func @transform_4(%arg0: i32) -> (i32, i32, i32) {
    %c0_i32 = arith.constant 0 : i32
    %c0_i32_0 = arith.constant 0 : i32
    %c0_i32_1 = arith.constant 0 : i32
    %c0_i32_2 = arith.constant 0 : i32
    return %c0_i32, %c0_i32_0, %c0_i32_1 : i32, i32, i32
  }
  func.func @transform_5(%arg0: i32) -> (i32, i32, i32, i32) {
    %c0_i32 = arith.constant 0 : i32
    %c0_i32_0 = arith.constant 0 : i32
    %c0_i32_1 = arith.constant 0 : i32
    %c0_i32_2 = arith.constant 0 : i32
    %c0_i32_3 = arith.constant 0 : i32
    return %c0_i32, %c0_i32_0, %c0_i32_1, %c0_i32_2 : i32, i32, i32, i32
  }
  func.func @transform_6(%arg0: i32) -> (i32, i32, i32) {
    %c0_i32 = arith.constant 0 : i32
    %c0_i32_0 = arith.constant 0 : i32
    %c0_i32_1 = arith.constant 0 : i32
    %c0_i32_2 = arith.constant 0 : i32
    return %c0_i32, %c0_i32_0, %c0_i32_1 : i32, i32, i32
  }
  func.func @transform_7(%arg0: i32) -> (i32, i32, i32) {
    %c0_i32 = arith.constant 0 : i32
    %c0_i32_0 = arith.constant 0 : i32
    %c0_i32_1 = arith.constant 0 : i32
    %c0_i32_2 = arith.constant 0 : i32
    return %c0_i32, %c0_i32_0, %c0_i32_1 : i32, i32, i32
  }
  func.func @transform_8(%arg0: i32) -> (i32, i32, i32) {
    %c0_i32 = arith.constant 0 : i32
    %c0_i32_0 = arith.constant 0 : i32
    %c0_i32_1 = arith.constant 0 : i32
    %c0_i32_2 = arith.constant 0 : i32
    return %c0_i32, %c0_i32_0, %c0_i32_1 : i32, i32, i32
  }
  func.func @transform_9(%arg0: i32) -> (i32, i32, i32) {
    %c0_i32 = arith.constant 0 : i32
    %c0_i32_0 = arith.constant 0 : i32
    %c0_i32_1 = arith.constant 0 : i32
    %c0_i32_2 = arith.constant 0 : i32
    return %c0_i32, %c0_i32_0, %c0_i32_1 : i32, i32, i32
  }
  func.func @transform_10(%arg0: i32) -> (i32, i32, i32) {
    %c0_i32 = arith.constant 0 : i32
    %c0_i32_0 = arith.constant 0 : i32
    %c0_i32_1 = arith.constant 0 : i32
    %c0_i32_2 = arith.constant 0 : i32
    return %c0_i32, %c0_i32_0, %c0_i32_1 : i32, i32, i32
  }
  func.func @transform_11(%arg0: i32) -> (i32, i32, i32) {
    %c0_i32 = arith.constant 0 : i32
    %c0_i32_0 = arith.constant 0 : i32
    %c0_i32_1 = arith.constant 0 : i32
    %c0_i32_2 = arith.constant 0 : i32
    return %c0_i32, %c0_i32_0, %c0_i32_1 : i32, i32, i32
  }
  func.func @transform_12(%arg0: i32) -> (i32, i32, i32) {
    %c0_i32 = arith.constant 0 : i32
    %c0_i32_0 = arith.constant 0 : i32
    %c0_i32_1 = arith.constant 0 : i32
    %c0_i32_2 = arith.constant 0 : i32
    return %c0_i32, %c0_i32_0, %c0_i32_1 : i32, i32, i32
  }
  func.func @transform_13(%arg0: i32) -> (i32, i32, i32) {
    %c0_i32 = arith.constant 0 : i32
    %c0_i32_0 = arith.constant 0 : i32
    %c0_i32_1 = arith.constant 0 : i32
    %c0_i32_2 = arith.constant 0 : i32
    return %c0_i32, %c0_i32_0, %c0_i32_1 : i32, i32, i32
  }
  func.func @transform_14(%arg0: i32) -> (i32, i32, i32) {
    %c0_i32 = arith.constant 0 : i32
    %c0_i32_0 = arith.constant 0 : i32
    %c0_i32_1 = arith.constant 0 : i32
    %c0_i32_2 = arith.constant 0 : i32
    return %c0_i32, %c0_i32_0, %c0_i32_1 : i32, i32, i32
  }
  func.func @transform_15(%arg0: i32) -> (i32, i32) {
    %c0_i32 = arith.constant 0 : i32
    %c0_i32_0 = arith.constant 0 : i32
    %c0_i32_1 = arith.constant 0 : i32
    return %c0_i32, %c0_i32_0 : i32, i32
  }
  func.func @transform_16(%arg0: i32) -> (i32, i32) {
    %c0_i32 = arith.constant 0 : i32
    %c0_i32_0 = arith.constant 0 : i32
    %c0_i32_1 = arith.constant 0 : i32
    return %c0_i32, %c0_i32_0 : i32, i32
  }
  func.func @transform_17(%arg0: i32) -> (i32, i32) {
    %c0_i32 = arith.constant 0 : i32
    %c0_i32_0 = arith.constant 0 : i32
    %c0_i32_1 = arith.constant 0 : i32
    return %c0_i32, %c0_i32_0 : i32, i32
  }
  func.func @transform_18(%arg0: i32) -> (i32, i32) {
    %c0_i32 = arith.constant 0 : i32
    %c0_i32_0 = arith.constant 0 : i32
    %c0_i32_1 = arith.constant 0 : i32
    return %c0_i32, %c0_i32_0 : i32, i32
  }
  func.func @transform_19(%arg0: i32) -> (i32, i32) {
    %c0_i32 = arith.constant 0 : i32
    %c0_i32_0 = arith.constant 0 : i32
    %c0_i32_1 = arith.constant 0 : i32
    return %c0_i32, %c0_i32_0 : i32, i32
  }
  func.func @transform_20(%arg0: i32) -> (i32, i32) {
    %c0_i32 = arith.constant 0 : i32
    %c0_i32_0 = arith.constant 0 : i32
    %c0_i32_1 = arith.constant 0 : i32
    return %c0_i32, %c0_i32_0 : i32, i32
  }
  func.func @transform_21(%arg0: i32) -> (i32, i32) {
    %c0_i32 = arith.constant 0 : i32
    %c0_i32_0 = arith.constant 0 : i32
    %c0_i32_1 = arith.constant 0 : i32
    return %c0_i32, %c0_i32_0 : i32, i32
  }
}

</mosaic_0001>

<llo_original>
// kernel: tpu_custom_call.1
$region0: #{tpu_custom_call.1}
  #allocation0 [shape = 'u32[]', space=smem, size = 0x4, offset = 0x4, fixed_abs, tag = 'smem constant byte address 0x4 - core index']
  #allocation1 [shape = 'u32[72,128]{1,0:T(1,128)}', space=vmem, size = 0x9000, scoped, tag = 'internal scratch']
  #allocation2 [shape = 'f32[1,1]{1,0:T(1,128)S(1)}', space=vmem, size = 0x200, scoped, tag = 'scoped memory for tpu_custom_call.1']
  %s0 = inlined_call_operand.vmem [shape: f32[32,32], index: 0, kind: input, shape index: {}]
  %s1 = inlined_call_operand.hbm [shape: f32[2,1,16], index: 1, kind: input, shape index: {}]
  %s2 = inlined_call_operand.vmem [shape: f32[2,16,1], index: 2, kind: input, shape index: {}]
  %s3 = inlined_call_operand.vmem [shape: bf16[2,32,96], index: 3, kind: input, shape index: {}]
  %s4 = inlined_call_operand.hbm [shape: f32[2,1,96], index: 4, kind: input, shape index: {}]
  %s5 = inlined_call_operand.vmem [shape: bf16[2,4,8,32], index: 5, kind: input, shape index: {}]
  %s6 = inlined_call_operand.hbm [shape: f32[2,1,32], index: 6, kind: input, shape index: {}]
  %s7 = inlined_call_operand.hbm [shape: f32[2,1,32], index: 7, kind: input, shape index: {}]
  %s8 = inlined_call_operand.hbm [shape: f32[2,1,32], index: 8, kind: input, shape index: {}]
  %s9 = inlined_call_operand.hbm [shape: bf16[2,32,64], index: 9, kind: input, shape index: {}]
  %s10 = inlined_call_operand.hbm [shape: f32[2,1,64], index: 10, kind: input, shape index: {}]
  %s11 = inlined_call_operand.vmem [shape: bf16[2,64,32], index: 11, kind: input, shape index: {}]
  %s12 = inlined_call_operand.hbm [shape: f32[2,1,32], index: 12, kind: input, shape index: {}]
  %s13 = inlined_call_operand.hbm [shape: f32[2,1,32], index: 13, kind: input, shape index: {}]
  %s14 = inlined_call_operand.hbm [shape: f32[2,1,32], index: 14, kind: input, shape index: {}]
  %s15 = inlined_call_operand.vmem [shape: f32[1,32], index: 15, kind: input, shape index: {}]
  %s16 = inlined_call_operand.vmem [shape: f32[1,32], index: 16, kind: input, shape index: {}]
  %s17 = inlined_call_operand.vmem [shape: bf16[32,32], index: 17, kind: input, shape index: {}]
  %s18 = inlined_call_operand.vmem [shape: f32[1,32], index: 18, kind: input, shape index: {}]
  %s19 = inlined_call_operand.vmem [shape: f32[1,32], index: 19, kind: input, shape index: {}]
  %s20 = inlined_call_operand.<no memory space> [shape: f32[1,1], index: 20, kind: input, shape index: {}]
  %s21 = inlined_call_operand.vmem [shape: f32[2,1], index: 21, kind: output, shape index: {}]
  %s22 = sld [smem:[#allocation0]]
  $region134: #{tpu_custom_call.1} parent=0
    _
  %s24 = ssub.s32 1, %s22
  %s25 = scalar_select 0, %s24, %s22
  %v26 = vstv %s20
  %27 = vst [vmem:[#allocation2] sm:$0x1] %v26
  $region1: #{tpu_custom_call.1} parent=0
    #allocation3 [shape = 'u8[1024]{0}', space=vmem, size = 0x400, scoped, tag = 'input window, operand 1, single buffered']
    #allocation4 [shape = 's32[1]{0}', space=sflag, size = 0x4, scoped, tag = 'scoped memory for tpu_custom_call.1']
    #allocation5 [shape = 'u8[1024]{0}', space=vmem, size = 0x400, scoped, tag = 'input window, operand 4, single buffered']
    #allocation6 [shape = 's32[1]{0}', space=sflag, size = 0x4, scoped, tag = 'scoped memory for tpu_custom_call.1']
    #allocation7 [shape = 'u8[1024]{0}', space=vmem, size = 0x400, scoped, tag = 'input window, operand 6, single buffered']
    #allocation8 [shape = 'u8[1024]{0}', space=vmem, size = 0x400, scoped, tag = 'input window, operand 7, single buffered']
    #allocation9 [shape = 's32[1]{0}', space=sflag, size = 0x4, scoped, tag = 'scoped memory for tpu_custom_call.1']
    #allocation10 [shape = 'u8[1024]{0}', space=vmem, size = 0x400, scoped, tag = 'input window, operand 8, single buffered']
    #allocation11 [shape = 'u8[16384]{0}', space=vmem, size = 0x4000, scoped, tag = 'input window, operand 9, single buffered']
    #allocation12 [shape = 's32[1]{0}', space=sflag, size = 0x4, scoped, tag = 'scoped memory for tpu_custom_call.1']
    #allocation13 [shape = 'u8[1024]{0}', space=vmem, size = 0x400, scoped, tag = 'input window, operand 10, single buffered']
    #allocation14 [shape = 'u8[1024]{0}', space=vmem, size = 0x400, scoped, tag = 'input window, operand 12, single buffered']
    #allocation15 [shape = 's32[1]{0}', space=sflag, size = 0x4, scoped, tag = 'scoped memory for tpu_custom_call.1']
    #allocation16 [shape = 'u8[1024]{0}', space=vmem, size = 0x400, scoped, tag = 'input window, operand 13, single buffered']
    #allocation17 [shape = 'u8[1024]{0}', space=vmem, size = 0x400, scoped, tag = 'input window, operand 14, single buffered']
    #allocation18 [shape = 's32[1]{0}', space=sflag, size = 0x4, scoped, tag = 'scoped memory for tpu_custom_call.1']
    %28 = vsyncpa [#allocation4], 0
    %29 = vsyncpa [#allocation6], 0
    %30 = vsyncpa [#allocation9], 0
    %31 = vsyncpa [#allocation12], 0
    %32 = vsyncpa [#allocation15], 0
    %33 = vsyncpa [#allocation18], 0
    // Predicated region
    $region2: #{tpu_custom_call.1} parent=1 // pred_check
      _
    $region3: #{tpu_custom_call.1} parent=1 // pred_check_branch
      %35 = sbr.rel (0) target = $region5
    $region4: #{tpu_custom_call.1} parent=1 // pred_region
      _
    $region5: #{tpu_custom_call.1} parent=1 // pred_fallthru
      _
    // Predicated region
    $region6: #{tpu_custom_call.1} parent=1 // pred_check
      _
    $region7: #{tpu_custom_call.1} parent=1 // pred_check_branch
      %37 = sbr.rel (0) target = $region9
    $region8: #{tpu_custom_call.1} parent=1 // pred_region
      %39 = vsyncadd [#allocation4], 0
      %s40 = sshll.u32 %s1, 4
      %s41 = int_to_ptr.hbm [resolvable:$true] %s40
      %s42 = sshll.u32 [#allocation3], 4
      %s43 = int_to_ptr.vmem [resolvable:$true] %s42
      %48 = dma.hbm_to_vmem [thread:$0]  %s41, 32, %s43, [#allocation4], 16, 16, 1
    $region9: #{tpu_custom_call.1} parent=1 // pred_fallthru
      _
    // Predicated region
    $region10: #{tpu_custom_call.1} parent=1 // pred_check
      _
    $region11: #{tpu_custom_call.1} parent=1 // pred_check_branch
      %50 = sbr.rel (0) target = $region13
    $region12: #{tpu_custom_call.1} parent=1 // pred_region
      _
    $region13: #{tpu_custom_call.1} parent=1 // pred_fallthru
      _
    // Predicated region
    $region14: #{tpu_custom_call.1} parent=1 // pred_check
      _
    $region15: #{tpu_custom_call.1} parent=1 // pred_check_branch
      %52 = sbr.rel (0) target = $region17
    $region16: #{tpu_custom_call.1} parent=1 // pred_region
      _
    $region17: #{tpu_custom_call.1} parent=1 // pred_fallthru
      _
    // Predicated region
    $region18: #{tpu_custom_call.1} parent=1 // pred_check
      _
    $region19: #{tpu_custom_call.1} parent=1 // pred_check_branch
      %54 = sbr.rel (0) target = $region21
    $region20: #{tpu_custom_call.1} parent=1 // pred_region
      %56 = vsyncadd [#allocation6], 0
      %s57 = sshll.u32 %s4, 4
      %s58 = int_to_ptr.hbm [resolvable:$true] %s57
      %s59 = sshll.u32 [#allocation5], 4
      %s60 = int_to_ptr.vmem [resolvable:$true] %s59
      %65 = dma.hbm_to_vmem [thread:$0]  %s58, 32, %s60, [#allocation6], 16, 16, 1
    $region21: #{tpu_custom_call.1} parent=1 // pred_fallthru
      _
    // Predicated region
    $region22: #{tpu_custom_call.1} parent=1 // pred_check
      _
    $region23: #{tpu_custom_call.1} parent=1 // pred_check_branch
      %67 = sbr.rel (0) target = $region25
    $region24: #{tpu_custom_call.1} parent=1 // pred_region
      _
    $region25: #{tpu_custom_call.1} parent=1 // pred_fallthru
      _
    // Predicated region
    $region26: #{tpu_custom_call.1} parent=1 // pred_check
      _
    $region27: #{tpu_custom_call.1} parent=1 // pred_check_branch
      %69 = sbr.rel (0) target = $region29
    $region28: #{tpu_custom_call.1} parent=1 // pred_region
      %71 = vsyncadd [#allocation6], 0
      %s72 = sshll.u32 %s6, 4
      %s73 = int_to_ptr.hbm [resolvable:$true] %s72
      %s74 = sshll.u32 [#allocation7], 4
      %s75 = int_to_ptr.vmem [resolvable:$true] %s74
      %80 = dma.hbm_to_vmem [thread:$0]  %s73, 32, %s75, [#allocation6], 16, 16, 1
    $region29: #{tpu_custom_call.1} parent=1 // pred_fallthru
      _
    // Predicated region
    $region30: #{tpu_custom_call.1} parent=1 // pred_check
      _
    $region31: #{tpu_custom_call.1} parent=1 // pred_check_branch
      %82 = sbr.rel (0) target = $region33
    $region32: #{tpu_custom_call.1} parent=1 // pred_region
      %84 = vsyncadd [#allocation9], 0
      %s85 = sshll.u32 %s7, 4
      %s86 = int_to_ptr.hbm [resolvable:$true] %s85
      %s87 = sshll.u32 [#allocation8], 4
      %s88 = int_to_ptr.vmem [resolvable:$true] %s87
      %93 = dma.hbm_to_vmem [thread:$0]  %s86, 32, %s88, [#allocation9], 16, 16, 1
    $region33: #{tpu_custom_call.1} parent=1 // pred_fallthru
      _
    // Predicated region
    $region34: #{tpu_custom_call.1} parent=1 // pred_check
      _
    $region35: #{tpu_custom_call.1} parent=1 // pred_check_branch
      %95 = sbr.rel (0) target = $region37
    $region36: #{tpu_custom_call.1} parent=1 // pred_region
      %97 = vsyncadd [#allocation9], 0
      %s98 = sshll.u32 %s8, 4
      %s99 = int_to_ptr.hbm [resolvable:$true] %s98
      %s100 = sshll.u32 [#allocation10], 4
      %s101 = int_to_ptr.vmem [resolvable:$true] %s100
      %106 = dma.hbm_to_vmem [thread:$0]  %s99, 32, %s101, [#allocation9], 16, 16, 1
    $region37: #{tpu_custom_call.1} parent=1 // pred_fallthru
      _
    // Predicated region
    $region38: #{tpu_custom_call.1} parent=1 // pred_check
      _
    $region39: #{tpu_custom_call.1} parent=1 // pred_check_branch
      %108 = sbr.rel (0) target = $region41
    $region40: #{tpu_custom_call.1} parent=1 // pred_region
      %110 = vsyncadd [#allocation12], 0
      %s111 = sshll.u32 %s9, 4
      %s112 = int_to_ptr.hbm [resolvable:$true] %s111
      %s113 = sshll.u32 [#allocation11], 4
      %s114 = int_to_ptr.vmem [resolvable:$true] %s113
      %119 = dma.hbm_to_vmem [thread:$0]  %s112, 512, %s114, [#allocation12], 64, 64, 4
    $region41: #{tpu_custom_call.1} parent=1 // pred_fallthru
      _
    // Predicated region
    $region42: #{tpu_custom_call.1} parent=1 // pred_check
      _
    $region43: #{tpu_custom_call.1} parent=1 // pred_check_branch
      %121 = sbr.rel (0) target = $region45
    $region44: #{tpu_custom_call.1} parent=1 // pred_region
      %123 = vsyncadd [#allocation12], 0
      %s124 = sshll.u32 %s10, 4
      %s125 = int_to_ptr.hbm [resolvable:$true] %s124
      %s126 = sshll.u32 [#allocation13], 4
      %s127 = int_to_ptr.vmem [resolvable:$true] %s126
      %132 = dma.hbm_to_vmem [thread:$0]  %s125, 32, %s127, [#allocation12], 16, 16, 1
    $region45: #{tpu_custom_call.1} parent=1 // pred_fallthru
      _
    // Predicated region
    $region46: #{tpu_custom_call.1} parent=1 // pred_check
      _
    $region47: #{tpu_custom_call.1} parent=1 // pred_check_branch
      %134 = sbr.rel (0) target = $region49
    $region48: #{tpu_custom_call.1} parent=1 // pred_region
      _
    $region49: #{tpu_custom_call.1} parent=1 // pred_fallthru
      _
    // Predicated region
    $region50: #{tpu_custom_call.1} parent=1 // pred_check
      _
    $region51: #{tpu_custom_call.1} parent=1 // pred_check_branch
      %136 = sbr.rel (0) target = $region53
    $region52: #{tpu_custom_call.1} parent=1 // pred_region
      %138 = vsyncadd [#allocation15], 0
      %s139 = sshll.u32 %s12, 4
      %s140 = int_to_ptr.hbm [resolvable:$true] %s139
      %s141 = sshll.u32 [#allocation14], 4
      %s142 = int_to_ptr.vmem [resolvable:$true] %s141
      %147 = dma.hbm_to_vmem [thread:$0]  %s140, 32, %s142, [#allocation15], 16, 16, 1
    $region53: #{tpu_custom_call.1} parent=1 // pred_fallthru
      _
    // Predicated region
    $region54: #{tpu_custom_call.1} parent=1 // pred_check
      _
    $region55: #{tpu_custom_call.1} parent=1 // pred_check_branch
      %149 = sbr.rel (0) target = $region57
    $region56: #{tpu_custom_call.1} parent=1 // pred_region
      %151 = vsyncadd [#allocation15], 0
      %s152 = sshll.u32 %s13, 4
      %s153 = int_to_ptr.hbm [resolvable:$true] %s152
      %s154 = sshll.u32 [#allocation16], 4
      %s155 = int_to_ptr.vmem [resolvable:$true] %s154
      %160 = dma.hbm_to_vmem [thread:$0]  %s153, 32, %s155, [#allocation15], 16, 16, 1
    $region57: #{tpu_custom_call.1} parent=1 // pred_fallthru
      _
    // Predicated region
    $region58: #{tpu_custom_call.1} parent=1 // pred_check
      _
    $region59: #{tpu_custom_call.1} parent=1 // pred_check_branch
      %162 = sbr.rel (0) target = $region61
    $region60: #{tpu_custom_call.1} parent=1 // pred_region
      %164 = vsyncadd [#allocation18], 0
      %s165 = sshll.u32 %s14, 4
      %s166 = int_to_ptr.hbm [resolvable:$true] %s165
      %s167 = sshll.u32 [#allocation17], 4
      %s168 = int_to_ptr.vmem [resolvable:$true] %s167
      %173 = dma.hbm_to_vmem [thread:$0]  %s166, 32, %s168, [#allocation18], 16, 16, 1
    $region61: #{tpu_custom_call.1} parent=1 // pred_fallthru
      _
    // Predicated region
    $region62: #{tpu_custom_call.1} parent=1 // pred_check
      _
    $region63: #{tpu_custom_call.1} parent=1 // pred_check_branch
      %175 = sbr.rel (0) target = $region65
    $region64: #{tpu_custom_call.1} parent=1 // pred_region
      _
    $region65: #{tpu_custom_call.1} parent=1 // pred_fallthru
      _
    // Predicated region
    $region66: #{tpu_custom_call.1} parent=1 // pred_check
      _
    $region67: #{tpu_custom_call.1} parent=1 // pred_check_branch
      %177 = sbr.rel (0) target = $region69
    $region68: #{tpu_custom_call.1} parent=1 // pred_region
      _
    $region69: #{tpu_custom_call.1} parent=1 // pred_fallthru
      _
    // Predicated region
    $region70: #{tpu_custom_call.1} parent=1 // pred_check
      _
    $region71: #{tpu_custom_call.1} parent=1 // pred_check_branch
      %179 = sbr.rel (0) target = $region73
    $region72: #{tpu_custom_call.1} parent=1 // pred_region
      _
    $region73: #{tpu_custom_call.1} parent=1 // pred_fallthru
      _
    // Predicated region
    $region74: #{tpu_custom_call.1} parent=1 // pred_check
      _
    $region75: #{tpu_custom_call.1} parent=1 // pred_check_branch
      %181 = sbr.rel (0) target = $region77
    $region76: #{tpu_custom_call.1} parent=1 // pred_region
      _
    $region77: #{tpu_custom_call.1} parent=1 // pred_fallthru
      _
    // Predicated region
    $region78: #{tpu_custom_call.1} parent=1 // pred_check
      _
    $region79: #{tpu_custom_call.1} parent=1 // pred_check_branch
      %183 = sbr.rel (0) target = $region81
    $region80: #{tpu_custom_call.1} parent=1 // pred_region
      _
    $region81: #{tpu_custom_call.1} parent=1 // pred_fallthru
      _
    // Predicated region
    $region82: #{tpu_custom_call.1} parent=1 // pred_check
      _
    $region83: #{tpu_custom_call.1} parent=1 // pred_check_branch
      %185 = sbr.rel (0) target = $region85
    $region84: #{tpu_custom_call.1} parent=1 // pred_region
      _
    $region85: #{tpu_custom_call.1} parent=1 // pred_fallthru
      _
    // Predicated region
    $region86: #{tpu_custom_call.1} parent=1 // pred_check
      _
    $region87: #{tpu_custom_call.1} parent=1 // pred_check_branch
      %187 = sbr.rel (0) target = $region89
    $region88: #{tpu_custom_call.1} parent=1 // pred_region
      %189 = dma.done [#allocation4], 32
    $region89: #{tpu_custom_call.1} parent=1 // pred_fallthru
      _
    // Predicated region
    $region90: #{tpu_custom_call.1} parent=1 // pred_check
      _
    $region91: #{tpu_custom_call.1} parent=1 // pred_check_branch
      %191 = sbr.rel (0) target = $region93
    $region92: #{tpu_custom_call.1} parent=1 // pred_region
      %193 = dma.done [#allocation6], 32
    $region93: #{tpu_custom_call.1} parent=1 // pred_fallthru
      _
    // Predicated region
    $region94: #{tpu_custom_call.1} parent=1 // pred_check
      _
    $region95: #{tpu_custom_call.1} parent=1 // pred_check_branch
      %195 = sbr.rel (0) target = $region97
    $region96: #{tpu_custom_call.1} parent=1 // pred_region
      %197 = dma.done [#allocation6], 32
    $region97: #{tpu_custom_call.1} parent=1 // pred_fallthru
      _
    // Predicated region
    $region98: #{tpu_custom_call.1} parent=1 // pred_check
      _
    $region99: #{tpu_custom_call.1} parent=1 // pred_check_branch
      %199 = sbr.rel (0) target = $region101
    $region100: #{tpu_custom_call.1} parent=1 // pred_region
      %201 = dma.done [#allocation9], 32
    $region101: #{tpu_custom_call.1} parent=1 // pred_fallthru
      _
    // Predicated region
    $region102: #{tpu_custom_call.1} parent=1 // pred_check
      _
    $region103: #{tpu_custom_call.1} parent=1 // pred_check_branch
      %203 = sbr.rel (0) target = $region105
    $region104: #{tpu_custom_call.1} parent=1 // pred_region
      %205 = dma.done [#allocation9], 32
    $region105: #{tpu_custom_call.1} parent=1 // pred_fallthru
      _
    // Predicated region
    $region106: #{tpu_custom_call.1} parent=1 // pred_check
      _
    $region107: #{tpu_custom_call.1} parent=1 // pred_check_branch
      %207 = sbr.rel (0) target = $region109
    $region108: #{tpu_custom_call.1} parent=1 // pred_region
      %209 = dma.done [#allocation12], 512
    $region109: #{tpu_custom_call.1} parent=1 // pred_fallthru
      _
    // Predicated region
    $region110: #{tpu_custom_call.1} parent=1 // pred_check
      _
    $region111: #{tpu_custom_call.1} parent=1 // pred_check_branch
      %211 = sbr.rel (0) target = $region113
    $region112: #{tpu_custom_call.1} parent=1 // pred_region
      %213 = dma.done [#allocation12], 32
    $region113: #{tpu_custom_call.1} parent=1 // pred_fallthru
      _
    // Predicated region
    $region114: #{tpu_custom_call.1} parent=1 // pred_check
      _
    $region115: #{tpu_custom_call.1} parent=1 // pred_check_branch
      %215 = sbr.rel (0) target = $region117
    $region116: #{tpu_custom_call.1} parent=1 // pred_region
      %217 = dma.done [#allocation15], 32
    $region117: #{tpu_custom_call.1} parent=1 // pred_fallthru
      _
    // Predicated region
    $region118: #{tpu_custom_call.1} parent=1 // pred_check
      _
    $region119: #{tpu_custom_call.1} parent=1 // pred_check_branch
      %219 = sbr.rel (0) target = $region121
    $region120: #{tpu_custom_call.1} parent=1 // pred_region
      %221 = dma.done [#allocation15], 32
    $region121: #{tpu_custom_call.1} parent=1 // pred_fallthru
      _
    // Predicated region
    $region122: #{tpu_custom_call.1} parent=1 // pred_check
      _
    $region123: #{tpu_custom_call.1} parent=1 // pred_check_branch
      %223 = sbr.rel (0) target = $region125
    $region124: #{tpu_custom_call.1} parent=1 // pred_region
      %225 = dma.done [#allocation18], 32
    $region125: #{tpu_custom_call.1} parent=1 // pred_fallthru
      _
    %v227 = vld [vmem:[%s0] sm:$0xff]
    %v228 = vld [vmem:[%s0 + $0x8] sm:$0xff]
    %v229 = vld [vmem:[%s0 + $0x10] sm:$0xff]
    %v230 = vld [vmem:[%s0 + $0x18] sm:$0xff]
    %v231 = vld [vmem:[#allocation3] sm:$0x1]
    %v232 = vld [vmem:[#allocation3 + $0x1] sm:$0x1]
    %v233 = vpack.c.bf16 %v228, %v227
    %v234 = vpack.c.bf16 %v230, %v229
    %v235 = vld [vmem:[%s3] sm:$0xf]
    %v236 = vld [vmem:[%s3 + $0x4] sm:$0xf]
    %v237 = vld [vmem:[%s3 + $0x8] sm:$0xf]
    %v238 = vld [vmem:[%s3 + $0xc] sm:$0xf]
    %v239 = vld [vmem:[#allocation5] sm:$0x1]
    %v241 = vperm.slane %v239, 0
    %v247 = vunpack.c.l.b16 %v235
    %v248 = vunpack.c.l.b16 %v236
    %v249 = vunpack.c.l.b16 %v237
    %v250 = vunpack.c.l.b16 %v238
    %v251 = vpack.c.b16 %v248, %v247
    %v252 = vpack.c.b16 %v250, %v249
    %vm255 = vcmask 261120
    %v257 = vsel %vm255, %v233, 0
    %v260 = vsel %vm255, %v234, 0
    %262 = vmatpush.bf16.msra.mxu0 0
    %263 = vmatpush.bf16.msra.mxu0 0
    %264 = vmatpush.bf16.msra.mxu0 0
    %265 = vmatpush.bf16.msra.mxu0 0
    %266 = vmatpush.bf16.msra.mxu0 0
    %267 = vmatpush.bf16.msra.mxu0 0
    %268 = vmatpush.bf16.msra.mxu0 %v252
    %269 = vmatpush.bf16.msra.mxu0 %v251
    %270 = vmatmul.bf16.gmra.mxu0 %v257
    %v271 = vpop.f32.mrf.mxu0
    %v272 = vadd.f32 %v241, %v271
    %v273 = vpop.f32.mrf.mxu0
    %v274 = vadd.f32 %v241, %v273
    %275 = vmatmul.bf16.gmra.mxu0 %v260
    %v276 = vpop.f32.mrf.mxu0
    %v277 = vadd.f32 %v241, %v276
    %v278 = vpop.f32.mrf.mxu0
    %v279 = vadd.f32 %v241, %v278
    %280 = vdwg.mxu0
    %v281 = vpack.c.bf16 %v272, %v272
    %v282 = vpack.c.bf16 %v274, %v274
    %v283 = vpack.c.bf16 %v277, %v277
    %v284 = vpack.c.bf16 %v279, %v279
    %v287 = vunpack.c.l.b16 %v281
    %v288 = vunpack.c.l.b16 %v282
    %v289 = vpack.c.b16 %v288, %v287
    %290 = vrot.lane.b32.xlu0 %v289, 96
    %v291 = vpop.permute.xlu0 %290
    %vm292 = vcmask 64512
    %v294 = vsel %vm292, %v289, 0
    %v297 = vsel %vm292, %v291, 0
    %299 = vmatpush.bf16.xpose.msra.mxu0 0
    %300 = vmatpush.bf16.xpose.msra.mxu0 0
    %301 = vmatpush.bf16.xpose.msra.mxu0 0
    %302 = vmatpush.bf16.xpose.msra.mxu0 0
    %303 = vmatpush.bf16.xpose.msra.mxu0 0
    %304 = vmatpush.bf16.xpose.msra.mxu0 0
    %305 = vmatpush.bf16.xpose.msra.mxu0 0
    %306 = vmatpush.bf16.xpose.msra.mxu0 %v297
    %307 = vmatmul.bf16.gmra.mxu0 %v294
    %v308 = vpop.f32.mrf.mxu0
    %v309 = vadd.f32 0.0, %v308
    %v310 = vpop.f32.mrf.mxu0
    %v311 = vadd.f32 0.0, %v310
    %312 = vdwg.mxu0
    %v315 = vunpack.c.l.b16 %v283
    %v316 = vunpack.c.l.b16 %v284
    %v317 = vpack.c.b16 %v316, %v315
    %318 = vrot.lane.b32.xlu0 %v317, 96
    %v319 = vpop.permute.xlu0 %318
    %v321 = vsel %vm292, %v317, 0
    %v324 = vsel %vm292, %v319, 0
    %326 = vmatpush.bf16.xpose.msra.mxu0 0
    %327 = vmatpush.bf16.xpose.msra.mxu0 0
    %328 = vmatpush.bf16.xpose.msra.mxu0 0
    %329 = vmatpush.bf16.xpose.msra.mxu0 0
    %330 = vmatpush.bf16.xpose.msra.mxu0 0
    %331 = vmatpush.bf16.xpose.msra.mxu0 0
    %332 = vmatpush.bf16.xpose.msra.mxu0 0
    %333 = vmatpush.bf16.xpose.msra.mxu0 %v324
    %334 = vmatmul.bf16.gmra.mxu0 %v321
    %v335 = vpop.f32.mrf.mxu0
    %v336 = vadd.f32 0.0, %v335
    %v337 = vpop.f32.mrf.mxu0
    %v338 = vadd.f32 0.0, %v337
    %339 = vdwg.mxu0
    %v340 = vmul.f32 %v309, 0.35355338
    %v341 = vmul.f32 %v311, 0.35355338
    %v342 = vmul.f32 %v336, 0.35355338
    %v343 = vmul.f32 %v338, 0.35355338
    %v346 = vperm.slane %v231, 0
    %v347 = vperm.slane %v232, 0
    %v350 = vadd.f32 %v340, %v346
    %v351 = vadd.f32 %v341, %v346
    %v352 = vadd.f32 %v342, %v347
    %v353 = vadd.f32 %v343, %v347
    %vm354 = vcmask 130048
    %v355 = vsel %vm354, %v350, -inf
    %356 = vmax.xlane.f32.xlu0 %v355
    %v357 = vpop.xlane.xlu0 %356
    %v358 = vsel %vm354, %v351, -inf
    %359 = vmax.xlane.f32.xlu0 %v358
    %v360 = vpop.xlane.xlu0 %359
    %v361 = vsel %vm354, %v352, -inf
    %362 = vmax.xlane.f32.xlu0 %v361
    %v363 = vpop.xlane.xlu0 %362
    %v364 = vsel %vm354, %v353, -inf
    %365 = vmax.xlane.f32.xlu0 %v364
    %v366 = vpop.xlane.xlu0 %365
    %v367 = vsub.f32 %v350, %v357
    %v368 = vsub.f32 %v351, %v360
    %v369 = vsub.f32 %v352, %v363
    %v370 = vsub.f32 %v353, %v366
    %v371 = vmul.f32 %v367, 1.442695
    %v372 = vpow.pop %v371
    %v373 = vmul.f32 %v368, 1.442695
    %v374 = vpow.pop %v373
    %v375 = vmul.f32 %v369, 1.442695
    %v376 = vpow.pop %v375
    %v377 = vmul.f32 %v370, 1.442695
    %v378 = vpow.pop %v377
    %v379 = vsel %vm354, %v372, 0.0
    %380 = vadd.xlane.f32.xlu0 %v379
    %v381 = vpop.xlane.xlu0 %380
    %v382 = vsel %vm354, %v374, 0.0
    %383 = vadd.xlane.f32.xlu0 %v382
    %v384 = vpop.xlane.xlu0 %383
    %v385 = vsel %vm354, %v376, 0.0
    %386 = vadd.xlane.f32.xlu0 %v385
    %v387 = vpop.xlane.xlu0 %386
    %v388 = vsel %vm354, %v378, 0.0
    %389 = vadd.xlane.f32.xlu0 %v388
    %v390 = vpop.xlane.xlu0 %389
    %v391 = vrcp.pop %v381
    %v392 = vrcp.pop %v384
    %v393 = vrcp.pop %v387
    %v394 = vrcp.pop %v390
    %v395 = vmul.f32 %v372, %v391
    %v396 = vmul.f32 %v374, %v392
    %v397 = vmul.f32 %v376, %v393
    %v398 = vmul.f32 %v378, %v394
    %v399 = vpack.c.bf16 %v395, %v395
    %v400 = vpack.c.bf16 %v396, %v396
    %v401 = vpack.c.bf16 %v397, %v397
    %v402 = vpack.c.bf16 %v398, %v398
    %v405 = vunpack.c.l.b16 %v399
    %v406 = vunpack.c.l.b16 %v400
    %v407 = vpack.c.b16 %v406, %v405
    %408 = vrot.lane.b32.xlu0 %v289, 64
    %v409 = vpop.permute.xlu0 %408
    %v412 = vsel %vm354, %v407, 0
    %414 = vmatpush.bf16.msra.mxu0 0
    %415 = vmatpush.bf16.msra.mxu0 0
    %416 = vmatpush.bf16.msra.mxu0 0
    %417 = vmatpush.bf16.msra.mxu0 0
    %418 = vmatpush.bf16.msra.mxu0 0
    %419 = vmatpush.bf16.msra.mxu0 0
    %420 = vmatpush.bf16.msra.mxu0 0
    %421 = vmatpush.bf16.msra.mxu0 %v409
    %422 = vmatmul.bf16.gmra.mxu0 %v412
    %v423 = vpop.f32.mrf.mxu0
    %v424 = vadd.f32 0.0, %v423
    %v425 = vpop.f32.mrf.mxu0
    %v426 = vadd.f32 0.0, %v425
    %427 = vdwg.mxu0
    %v430 = vunpack.c.l.b16 %v401
    %v431 = vunpack.c.l.b16 %v402
    %v432 = vpack.c.b16 %v431, %v430
    %433 = vrot.lane.b32.xlu0 %v317, 64
    %v434 = vpop.permute.xlu0 %433
    %v437 = vsel %vm354, %v432, 0
    %439 = vmatpush.bf16.msra.mxu0 0
    %440 = vmatpush.bf16.msra.mxu0 0
    %441 = vmatpush.bf16.msra.mxu0 0
    %442 = vmatpush.bf16.msra.mxu0 0
    %443 = vmatpush.bf16.msra.mxu0 0
    %444 = vmatpush.bf16.msra.mxu0 0
    %445 = vmatpush.bf16.msra.mxu0 0
    %446 = vmatpush.bf16.msra.mxu0 %v434
    %447 = vmatmul.bf16.gmra.mxu0 %v437
    %v448 = vpop.f32.mrf.mxu0
    %v449 = vadd.f32 0.0, %v448
    %v450 = vpop.f32.mrf.mxu0
    %v451 = vadd.f32 0.0, %v450
    %452 = vdwg.mxu0
    %v453 = vpack.c.bf16 %v426, %v424
    %v454 = vpack.c.bf16 %v451, %v449
    %v455 = vld [vmem:[%s5] sm:$0xf]
    %456 = vrot.lane.b32.xlu0 %v289, 120
    %v457 = vpop.permute.xlu0 %456
    %458 = vrot.lane.b32.xlu0 %v289, 88
    %v459 = vpop.permute.xlu0 %458
    %v461 = vsel %vm292, %v457, 0
    %v464 = vsel %vm292, %v459, 0
    %466 = vmatpush.bf16.xpose.msra.mxu0 0
    %467 = vmatpush.bf16.xpose.msra.mxu0 0
    %468 = vmatpush.bf16.xpose.msra.mxu0 0
    %469 = vmatpush.bf16.xpose.msra.mxu0 0
    %470 = vmatpush.bf16.xpose.msra.mxu0 0
    %471 = vmatpush.bf16.xpose.msra.mxu0 0
    %472 = vmatpush.bf16.xpose.msra.mxu0 0
    %473 = vmatpush.bf16.xpose.msra.mxu0 %v464
    %474 = vmatmul.bf16.gmra.mxu0 %v461
    %v475 = vpop.f32.mrf.mxu0
    %v476 = vadd.f32 0.0, %v475
    %v477 = vpop.f32.mrf.mxu0
    %v478 = vadd.f32 0.0, %v477
    %479 = vdwg.mxu0
    %480 = vrot.lane.b32.xlu0 %v317, 120
    %v481 = vpop.permute.xlu0 %480
    %482 = vrot.lane.b32.xlu0 %v317, 88
    %v483 = vpop.permute.xlu0 %482
    %v485 = vsel %vm292, %v481, 0
    %v488 = vsel %vm292, %v483, 0
    %490 = vmatpush.bf16.xpose.msra.mxu0 0
    %491 = vmatpush.bf16.xpose.msra.mxu0 0
    %492 = vmatpush.bf16.xpose.msra.mxu0 0
    %493 = vmatpush.bf16.xpose.msra.mxu0 0
    %494 = vmatpush.bf16.xpose.msra.mxu0 0
    %495 = vmatpush.bf16.xpose.msra.mxu0 0
    %496 = vmatpush.bf16.xpose.msra.mxu0 0
    %497 = vmatpush.bf16.xpose.msra.mxu0 %v488
    %498 = vmatmul.bf16.gmra.mxu0 %v485
    %v499 = vpop.f32.mrf.mxu0
    %v500 = vadd.f32 0.0, %v499
    %v501 = vpop.f32.mrf.mxu0
    %v502 = vadd.f32 0.0, %v501
    %503 = vdwg.mxu0
    %v504 = vmul.f32 %v476, 0.35355338
    %v505 = vmul.f32 %v478, 0.35355338
    %v506 = vmul.f32 %v500, 0.35355338
    %v507 = vmul.f32 %v502, 0.35355338
    %v508 = vadd.f32 %v504, %v346
    %v509 = vadd.f32 %v505, %v346
    %v510 = vadd.f32 %v506, %v347
    %v511 = vadd.f32 %v507, %v347
    %v512 = vsel %vm354, %v508, -inf
    %513 = vmax.xlane.f32.xlu0 %v512
    %v514 = vpop.xlane.xlu0 %513
    %v515 = vsel %vm354, %v509, -inf
    %516 = vmax.xlane.f32.xlu0 %v515
    %v517 = vpop.xlane.xlu0 %516
    %v518 = vsel %vm354, %v510, -inf
    %519 = vmax.xlane.f32.xlu0 %v518
    %v520 = vpop.xlane.xlu0 %519
    %v521 = vsel %vm354, %v511, -inf
    %522 = vmax.xlane.f32.xlu0 %v521
    %v523 = vpop.xlane.xlu0 %522
    %v524 = vsub.f32 %v508, %v514
    %v525 = vsub.f32 %v509, %v517
    %v526 = vsub.f32 %v510, %v520
    %v527 = vsub.f32 %v511, %v523
    %v528 = vmul.f32 %v524, 1.442695
    %v529 = vpow.pop %v528
    %v530 = vmul.f32 %v525, 1.442695
    %v531 = vpow.pop %v530
    %v532 = vmul.f32 %v526, 1.442695
    %v533 = vpow.pop %v532
    %v534 = vmul.f32 %v527, 1.442695
    %v535 = vpow.pop %v534
    %v536 = vsel %vm354, %v529, 0.0
    %537 = vadd.xlane.f32.xlu0 %v536
    %v538 = vpop.xlane.xlu0 %537
    %v539 = vsel %vm354, %v531, 0.0
    %540 = vadd.xlane.f32.xlu0 %v539
    %v541 = vpop.xlane.xlu0 %540
    %v542 = vsel %vm354, %v533, 0.0
    %543 = vadd.xlane.f32.xlu0 %v542
    %v544 = vpop.xlane.xlu0 %543
    %v545 = vsel %vm354, %v535, 0.0
    %546 = vadd.xlane.f32.xlu0 %v545
    %v547 = vpop.xlane.xlu0 %546
    %v548 = vrcp.pop %v538
    %v549 = vrcp.pop %v541
    %v550 = vrcp.pop %v544
    %v551 = vrcp.pop %v547
    %v552 = vmul.f32 %v529, %v548
    %v553 = vmul.f32 %v531, %v549
    %v554 = vmul.f32 %v533, %v550
    %v555 = vmul.f32 %v535, %v551
    %v556 = vpack.c.bf16 %v552, %v552
    %v557 = vpack.c.bf16 %v553, %v553
    %v558 = vpack.c.bf16 %v554, %v554
    %v559 = vpack.c.bf16 %v555, %v555
    %v562 = vunpack.c.l.b16 %v556
    %v563 = vunpack.c.l.b16 %v557
    %v564 = vpack.c.b16 %v563, %v562
    %565 = vrot.lane.b32.xlu0 %v289, 56
    %v566 = vpop.permute.xlu0 %565
    %v569 = vsel %vm354, %v564, 0
    %571 = vmatpush.bf16.msra.mxu0 0
    %572 = vmatpush.bf16.msra.mxu0 0
    %573 = vmatpush.bf16.msra.mxu0 0
    %574 = vmatpush.bf16.msra.mxu0 0
    %575 = vmatpush.bf16.msra.mxu0 0
    %576 = vmatpush.bf16.msra.mxu0 0
    %577 = vmatpush.bf16.msra.mxu0 0
    %578 = vmatpush.bf16.msra.mxu0 %v566
    %579 = vmatmul.bf16.gmra.mxu0 %v569
    %v580 = vpop.f32.mrf.mxu0
    %v581 = vadd.f32 0.0, %v580
    %v582 = vpop.f32.mrf.mxu0
    %v583 = vadd.f32 0.0, %v582
    %584 = vdwg.mxu0
    %v587 = vunpack.c.l.b16 %v558
    %v588 = vunpack.c.l.b16 %v559
    %v589 = vpack.c.b16 %v588, %v587
    %590 = vrot.lane.b32.xlu0 %v317, 56
    %v591 = vpop.permute.xlu0 %590
    %v594 = vsel %vm354, %v589, 0
    %596 = vmatpush.bf16.msra.mxu0 0
    %597 = vmatpush.bf16.msra.mxu0 0
    %598 = vmatpush.bf16.msra.mxu0 0
    %599 = vmatpush.bf16.msra.mxu0 0
    %600 = vmatpush.bf16.msra.mxu0 0
    %601 = vmatpush.bf16.msra.mxu0 0
    %602 = vmatpush.bf16.msra.mxu0 0
    %603 = vmatpush.bf16.msra.mxu0 %v591
    %604 = vmatmul.bf16.gmra.mxu0 %v594
    %v605 = vpop.f32.mrf.mxu0
    %v606 = vadd.f32 0.0, %v605
    %v607 = vpop.f32.mrf.mxu0
    %v608 = vadd.f32 0.0, %v607
    %609 = vdwg.mxu0
    %v610 = vpack.c.bf16 %v583, %v581
    %v611 = vpack.c.bf16 %v608, %v606
    %s612 = scalar_lea.vmem %s5, 4
    %v613 = vld [vmem:[%s612] sm:$0xf]
    %v615 = vsel %vm292, %v610, 0
    %v618 = vsel %vm292, %v611, 0
    %vm620 = vcmask 1043456
    %v622 = vsel %vm620, %v613, 0
    %624 = vmatpush.bf16.msra.mxu0 0
    %625 = vmatpush.bf16.msra.mxu0 0
    %626 = vmatpush.bf16.msra.mxu0 0
    %627 = vmatpush.bf16.msra.mxu0 0
    %628 = vmatpush.bf16.msra.mxu0 0
    %629 = vmatpush.bf16.msra.mxu0 0
    %630 = vmatpush.bf16.msra.mxu0 0
    %631 = vmatpush.bf16.msra.mxu0 %v622
    %632 = vmatmul.bf16.gmra.mxu0 %v615
    %v633 = vpop.f32.mrf.mxu0
    %v634 = vadd.f32 0.0, %v633
    %v635 = vpop.f32.mrf.mxu0
    %v636 = vadd.f32 0.0, %v635
    %637 = vmatmul.bf16.gmra.mxu0 %v618
    %v638 = vpop.f32.mrf.mxu0
    %v639 = vadd.f32 0.0, %v638
    %v640 = vpop.f32.mrf.mxu0
    %v641 = vadd.f32 0.0, %v640
    %642 = vdwg.mxu0
    %v644 = vsel %vm292, %v453, 0
    %v647 = vsel %vm292, %v454, 0
    %v650 = vsel %vm620, %v455, 0
    %652 = vmatpush.bf16.msra.mxu0 0
    %653 = vmatpush.bf16.msra.mxu0 0
    %654 = vmatpush.bf16.msra.mxu0 0
    %655 = vmatpush.bf16.msra.mxu0 0
    %656 = vmatpush.bf16.msra.mxu0 0
    %657 = vmatpush.bf16.msra.mxu0 0
    %658 = vmatpush.bf16.msra.mxu0 0
    %659 = vmatpush.bf16.msra.mxu0 %v650
    %660 = vmatmul.bf16.gmra.mxu0 %v644
    %v661 = vpop.f32.mrf.mxu0
    %v662 = vadd.f32 %v634, %v661
    %v663 = vpop.f32.mrf.mxu0
    %v664 = vadd.f32 %v636, %v663
    %665 = vmatmul.bf16.gmra.mxu0 %v647
    %v666 = vpop.f32.mrf.mxu0
    %v667 = vadd.f32 %v639, %v666
    %v668 = vpop.f32.mrf.mxu0
    %v669 = vadd.f32 %v641, %v668
    %670 = vdwg.mxu0
    %671 = vrot.lane.b32.xlu0 %v289, 112
    %v672 = vpop.permute.xlu0 %671
    %673 = vrot.lane.b32.xlu0 %v289, 80
    %v674 = vpop.permute.xlu0 %673
    %v676 = vsel %vm292, %v672, 0
    %v679 = vsel %vm292, %v674, 0
    %681 = vmatpush.bf16.xpose.msra.mxu0 0
    %682 = vmatpush.bf16.xpose.msra.mxu0 0
    %683 = vmatpush.bf16.xpose.msra.mxu0 0
    %684 = vmatpush.bf16.xpose.msra.mxu0 0
    %685 = vmatpush.bf16.xpose.msra.mxu0 0
    %686 = vmatpush.bf16.xpose.msra.mxu0 0
    %687 = vmatpush.bf16.xpose.msra.mxu0 0
    %688 = vmatpush.bf16.xpose.msra.mxu0 %v679
    %689 = vmatmul.bf16.gmra.mxu0 %v676
    %v690 = vpop.f32.mrf.mxu0
    %v691 = vadd.f32 0.0, %v690
    %v692 = vpop.f32.mrf.mxu0
    %v693 = vadd.f32 0.0, %v692
    %694 = vdwg.mxu0
    %695 = vrot.lane.b32.xlu0 %v317, 112
    %v696 = vpop.permute.xlu0 %695
    %697 = vrot.lane.b32.xlu0 %v317, 80
    %v698 = vpop.permute.xlu0 %697
    %v700 = vsel %vm292, %v696, 0
    %v703 = vsel %vm292, %v698, 0
    %705 = vmatpush.bf16.xpose.msra.mxu0 0
    %706 = vmatpush.bf16.xpose.msra.mxu0 0
    %707 = vmatpush.bf16.xpose.msra.mxu0 0
    %708 = vmatpush.bf16.xpose.msra.mxu0 0
    %709 = vmatpush.bf16.xpose.msra.mxu0 0
    %710 = vmatpush.bf16.xpose.msra.mxu0 0
    %711 = vmatpush.bf16.xpose.msra.mxu0 0
    %712 = vmatpush.bf16.xpose.msra.mxu0 %v703
    %713 = vmatmul.bf16.gmra.mxu0 %v700
    %v714 = vpop.f32.mrf.mxu0
    %v715 = vadd.f32 0.0, %v714
    %v716 = vpop.f32.mrf.mxu0
    %v717 = vadd.f32 0.0, %v716
    %718 = vdwg.mxu0
    %v719 = vmul.f32 %v691, 0.35355338
    %v720 = vmul.f32 %v693, 0.35355338
    %v721 = vmul.f32 %v715, 0.35355338
    %v722 = vmul.f32 %v717, 0.35355338
    %v723 = vadd.f32 %v719, %v346
    %v724 = vadd.f32 %v720, %v346
    %v725 = vadd.f32 %v721, %v347
    %v726 = vadd.f32 %v722, %v347
    %v727 = vsel %vm354, %v723, -inf
    %728 = vmax.xlane.f32.xlu0 %v727
    %v729 = vpop.xlane.xlu0 %728
    %v730 = vsel %vm354, %v724, -inf
    %731 = vmax.xlane.f32.xlu0 %v730
    %v732 = vpop.xlane.xlu0 %731
    %v733 = vsel %vm354, %v725, -inf
    %734 = vmax.xlane.f32.xlu0 %v733
    %v735 = vpop.xlane.xlu0 %734
    %v736 = vsel %vm354, %v726, -inf
    %737 = vmax.xlane.f32.xlu0 %v736
    %v738 = vpop.xlane.xlu0 %737
    %v739 = vsub.f32 %v723, %v729
    %v740 = vsub.f32 %v724, %v732
    %v741 = vsub.f32 %v725, %v735
    %v742 = vsub.f32 %v726, %v738
    %v743 = vmul.f32 %v739, 1.442695
    %v744 = vpow.pop %v743
    %v745 = vmul.f32 %v740, 1.442695
    %v746 = vpow.pop %v745
    %v747 = vmul.f32 %v741, 1.442695
    %v748 = vpow.pop %v747
    %v749 = vmul.f32 %v742, 1.442695
    %v750 = vpow.pop %v749
    %v751 = vsel %vm354, %v744, 0.0
    %752 = vadd.xlane.f32.xlu0 %v751
    %v753 = vpop.xlane.xlu0 %752
    %v754 = vsel %vm354, %v746, 0.0
    %755 = vadd.xlane.f32.xlu0 %v754
    %v756 = vpop.xlane.xlu0 %755
    %v757 = vsel %vm354, %v748, 0.0
    %758 = vadd.xlane.f32.xlu0 %v757
    %v759 = vpop.xlane.xlu0 %758
    %v760 = vsel %vm354, %v750, 0.0
    %761 = vadd.xlane.f32.xlu0 %v760
    %v762 = vpop.xlane.xlu0 %761
    %v763 = vrcp.pop %v753
    %v764 = vrcp.pop %v756
    %v765 = vrcp.pop %v759
    %v766 = vrcp.pop %v762
    %v767 = vmul.f32 %v744, %v763
    %v768 = vmul.f32 %v746, %v764
    %v769 = vmul.f32 %v748, %v765
    %v770 = vmul.f32 %v750, %v766
    %v771 = vpack.c.bf16 %v767, %v767
    %v772 = vpack.c.bf16 %v768, %v768
    %v773 = vpack.c.bf16 %v769, %v769
    %v774 = vpack.c.bf16 %v770, %v770
    %v777 = vunpack.c.l.b16 %v771
    %v778 = vunpack.c.l.b16 %v772
    %v779 = vpack.c.b16 %v778, %v777
    %780 = vrot.lane.b32.xlu0 %v289, 48
    %v781 = vpop.permute.xlu0 %780
    %v784 = vsel %vm354, %v779, 0
    %786 = vmatpush.bf16.msra.mxu0 0
    %787 = vmatpush.bf16.msra.mxu0 0
    %788 = vmatpush.bf16.msra.mxu0 0
    %789 = vmatpush.bf16.msra.mxu0 0
    %790 = vmatpush.bf16.msra.mxu0 0
    %791 = vmatpush.bf16.msra.mxu0 0
    %792 = vmatpush.bf16.msra.mxu0 0
    %793 = vmatpush.bf16.msra.mxu0 %v781
    %794 = vmatmul.bf16.gmra.mxu0 %v784
    %v795 = vpop.f32.mrf.mxu0
    %v796 = vadd.f32 0.0, %v795
    %v797 = vpop.f32.mrf.mxu0
    %v798 = vadd.f32 0.0, %v797
    %799 = vdwg.mxu0
    %v802 = vunpack.c.l.b16 %v773
    %v803 = vunpack.c.l.b16 %v774
    %v804 = vpack.c.b16 %v803, %v802
    %805 = vrot.lane.b32.xlu0 %v317, 48
    %v806 = vpop.permute.xlu0 %805
    %v809 = vsel %vm354, %v804, 0
    %811 = vmatpush.bf16.msra.mxu0 0
    %812 = vmatpush.bf16.msra.mxu0 0
    %813 = vmatpush.bf16.msra.mxu0 0
    %814 = vmatpush.bf16.msra.mxu0 0
    %815 = vmatpush.bf16.msra.mxu0 0
    %816 = vmatpush.bf16.msra.mxu0 0
    %817 = vmatpush.bf16.msra.mxu0 0
    %818 = vmatpush.bf16.msra.mxu0 %v806
    %819 = vmatmul.bf16.gmra.mxu0 %v809
    %v820 = vpop.f32.mrf.mxu0
    %v821 = vadd.f32 0.0, %v820
    %v822 = vpop.f32.mrf.mxu0
    %v823 = vadd.f32 0.0, %v822
    %824 = vdwg.mxu0
    %v825 = vpack.c.bf16 %v798, %v796
    %v826 = vpack.c.bf16 %v823, %v821
    %s827 = scalar_lea.vmem %s5, 8
    %v828 = vld [vmem:[%s827] sm:$0xf]
    %v830 = vsel %vm292, %v825, 0
    %v833 = vsel %vm292, %v826, 0
    %v836 = vsel %vm620, %v828, 0
    %838 = vmatpush.bf16.msra.mxu0 0
    %839 = vmatpush.bf16.msra.mxu0 0
    %840 = vmatpush.bf16.msra.mxu0 0
    %841 = vmatpush.bf16.msra.mxu0 0
    %842 = vmatpush.bf16.msra.mxu0 0
    %843 = vmatpush.bf16.msra.mxu0 0
    %844 = vmatpush.bf16.msra.mxu0 0
    %845 = vmatpush.bf16.msra.mxu0 %v836
    %846 = vmatmul.bf16.gmra.mxu0 %v830
    %v847 = vpop.f32.mrf.mxu0
    %v848 = vadd.f32 0.0, %v847
    %v849 = vpop.f32.mrf.mxu0
    %v850 = vadd.f32 0.0, %v849
    %851 = vmatmul.bf16.gmra.mxu0 %v833
    %v852 = vpop.f32.mrf.mxu0
    %v853 = vadd.f32 0.0, %v852
    %v854 = vpop.f32.mrf.mxu0
    %v855 = vadd.f32 0.0, %v854
    %856 = vdwg.mxu0
    %v857 = vadd.f32 %v662, %v848
    %v858 = vadd.f32 %v664, %v850
    %v859 = vadd.f32 %v667, %v853
    %v860 = vadd.f32 %v669, %v855
    %861 = vrot.lane.b32.xlu0 %v289, 104
    %v862 = vpop.permute.xlu0 %861
    %863 = vrot.lane.b32.xlu0 %v289, 72
    %v864 = vpop.permute.xlu0 %863
    %v866 = vsel %vm292, %v862, 0
    %v869 = vsel %vm292, %v864, 0
    %871 = vmatpush.bf16.xpose.msra.mxu0 0
    %872 = vmatpush.bf16.xpose.msra.mxu0 0
    %873 = vmatpush.bf16.xpose.msra.mxu0 0
    %874 = vmatpush.bf16.xpose.msra.mxu0 0
    %875 = vmatpush.bf16.xpose.msra.mxu0 0
    %876 = vmatpush.bf16.xpose.msra.mxu0 0
    %877 = vmatpush.bf16.xpose.msra.mxu0 0
    %878 = vmatpush.bf16.xpose.msra.mxu0 %v869
    %879 = vmatmul.bf16.gmra.mxu0 %v866
    %v880 = vpop.f32.mrf.mxu0
    %v881 = vadd.f32 0.0, %v880
    %v882 = vpop.f32.mrf.mxu0
    %v883 = vadd.f32 0.0, %v882
    %884 = vdwg.mxu0
    %885 = vrot.lane.b32.xlu0 %v317, 104
    %v886 = vpop.permute.xlu0 %885
    %887 = vrot.lane.b32.xlu0 %v317, 72
    %v888 = vpop.permute.xlu0 %887
    %v890 = vsel %vm292, %v886, 0
    %v893 = vsel %vm292, %v888, 0
    %895 = vmatpush.bf16.xpose.msra.mxu0 0
    %896 = vmatpush.bf16.xpose.msra.mxu0 0
    %897 = vmatpush.bf16.xpose.msra.mxu0 0
    %898 = vmatpush.bf16.xpose.msra.mxu0 0
    %899 = vmatpush.bf16.xpose.msra.mxu0 0
    %900 = vmatpush.bf16.xpose.msra.mxu0 0
    %901 = vmatpush.bf16.xpose.msra.mxu0 0
    %902 = vmatpush.bf16.xpose.msra.mxu0 %v893
    %903 = vmatmul.bf16.gmra.mxu0 %v890
    %v904 = vpop.f32.mrf.mxu0
    %v905 = vadd.f32 0.0, %v904
    %v906 = vpop.f32.mrf.mxu0
    %v907 = vadd.f32 0.0, %v906
    %908 = vdwg.mxu0
    %v909 = vmul.f32 %v881, 0.35355338
    %v910 = vmul.f32 %v883, 0.35355338
    %v911 = vmul.f32 %v905, 0.35355338
    %v912 = vmul.f32 %v907, 0.35355338
    %v913 = vadd.f32 %v909, %v346
    %v914 = vadd.f32 %v910, %v346
    %v915 = vadd.f32 %v911, %v347
    %v916 = vadd.f32 %v912, %v347
    %v917 = vsel %vm354, %v913, -inf
    %918 = vmax.xlane.f32.xlu0 %v917
    %v919 = vpop.xlane.xlu0 %918
    %v920 = vsel %vm354, %v914, -inf
    %921 = vmax.xlane.f32.xlu0 %v920
    %v922 = vpop.xlane.xlu0 %921
    %v923 = vsel %vm354, %v915, -inf
    %924 = vmax.xlane.f32.xlu0 %v923
    %v925 = vpop.xlane.xlu0 %924
    %v926 = vsel %vm354, %v916, -inf
    %927 = vmax.xlane.f32.xlu0 %v926
    %v928 = vpop.xlane.xlu0 %927
    %v929 = vsub.f32 %v913, %v919
    %v930 = vsub.f32 %v914, %v922
    %v931 = vsub.f32 %v915, %v925
    %v932 = vsub.f32 %v916, %v928
    %v933 = vmul.f32 %v929, 1.442695
    %v934 = vpow.pop %v933
    %v935 = vmul.f32 %v930, 1.442695
    %v936 = vpow.pop %v935
    %v937 = vmul.f32 %v931, 1.442695
    %v938 = vpow.pop %v937
    %v939 = vmul.f32 %v932, 1.442695
    %v940 = vpow.pop %v939
    %v941 = vsel %vm354, %v934, 0.0
    %942 = vadd.xlane.f32.xlu0 %v941
    %v943 = vpop.xlane.xlu0 %942
    %v944 = vsel %vm354, %v936, 0.0
    %945 = vadd.xlane.f32.xlu0 %v944
    %v946 = vpop.xlane.xlu0 %945
    %v947 = vsel %vm354, %v938, 0.0
    %948 = vadd.xlane.f32.xlu0 %v947
    %v949 = vpop.xlane.xlu0 %948
    %v950 = vsel %vm354, %v940, 0.0
    %951 = vadd.xlane.f32.xlu0 %v950
    %v952 = vpop.xlane.xlu0 %951
    %v953 = vrcp.pop %v943
    %v954 = vrcp.pop %v946
    %v955 = vrcp.pop %v949
    %v956 = vrcp.pop %v952
    %v957 = vmul.f32 %v934, %v953
    %v958 = vmul.f32 %v936, %v954
    %v959 = vmul.f32 %v938, %v955
    %v960 = vmul.f32 %v940, %v956
    %v961 = vpack.c.bf16 %v957, %v957
    %v962 = vpack.c.bf16 %v958, %v958
    %v963 = vpack.c.bf16 %v959, %v959
    %v964 = vpack.c.bf16 %v960, %v960
    %v967 = vunpack.c.l.b16 %v961
    %v968 = vunpack.c.l.b16 %v962
    %v969 = vpack.c.b16 %v968, %v967
    %970 = vrot.lane.b32.xlu0 %v289, 40
    %v971 = vpop.permute.xlu0 %970
    %v974 = vsel %vm354, %v969, 0
    %976 = vmatpush.bf16.msra.mxu0 0
    %977 = vmatpush.bf16.msra.mxu0 0
    %978 = vmatpush.bf16.msra.mxu0 0
    %979 = vmatpush.bf16.msra.mxu0 0
    %980 = vmatpush.bf16.msra.mxu0 0
    %981 = vmatpush.bf16.msra.mxu0 0
    %982 = vmatpush.bf16.msra.mxu0 0
    %983 = vmatpush.bf16.msra.mxu0 %v971
    %984 = vmatmul.bf16.gmra.mxu0 %v974
    %v985 = vpop.f32.mrf.mxu0
    %v986 = vadd.f32 0.0, %v985
    %v987 = vpop.f32.mrf.mxu0
    %v988 = vadd.f32 0.0, %v987
    %989 = vdwg.mxu0
    %v992 = vunpack.c.l.b16 %v963
    %v993 = vunpack.c.l.b16 %v964
    %v994 = vpack.c.b16 %v993, %v992
    %995 = vrot.lane.b32.xlu0 %v317, 40
    %v996 = vpop.permute.xlu0 %995
    %v999 = vsel %vm354, %v994, 0
    %1001 = vmatpush.bf16.msra.mxu0 0
    %1002 = vmatpush.bf16.msra.mxu0 0
    %1003 = vmatpush.bf16.msra.mxu0 0
    %1004 = vmatpush.bf16.msra.mxu0 0
    %1005 = vmatpush.bf16.msra.mxu0 0
    %1006 = vmatpush.bf16.msra.mxu0 0
    %1007 = vmatpush.bf16.msra.mxu0 0
    %1008 = vmatpush.bf16.msra.mxu0 %v996
    %1009 = vmatmul.bf16.gmra.mxu0 %v999
    %v1010 = vpop.f32.mrf.mxu0
    %v1011 = vadd.f32 0.0, %v1010
    %v1012 = vpop.f32.mrf.mxu0
    %v1013 = vadd.f32 0.0, %v1012
    %1014 = vdwg.mxu0
    %v1015 = vpack.c.bf16 %v988, %v986
    %v1016 = vpack.c.bf16 %v1013, %v1011
    %s1017 = scalar_lea.vmem %s5, 12
    %v1018 = vld [vmem:[%s1017] sm:$0xf]
    %v1020 = vsel %vm292, %v1015, 0
    %v1023 = vsel %vm292, %v1016, 0
    %v1026 = vsel %vm620, %v1018, 0
    %1028 = vmatpush.bf16.msra.mxu0 0
    %1029 = vmatpush.bf16.msra.mxu0 0
    %1030 = vmatpush.bf16.msra.mxu0 0
    %1031 = vmatpush.bf16.msra.mxu0 0
    %1032 = vmatpush.bf16.msra.mxu0 0
    %1033 = vmatpush.bf16.msra.mxu0 0
    %1034 = vmatpush.bf16.msra.mxu0 0
    %1035 = vmatpush.bf16.msra.mxu0 %v1026
    %1036 = vmatmul.bf16.gmra.mxu0 %v1020
    %v1037 = vpop.f32.mrf.mxu0
    %v1038 = vadd.f32 0.0, %v1037
    %v1039 = vpop.f32.mrf.mxu0
    %v1040 = vadd.f32 0.0, %v1039
    %1041 = vmatmul.bf16.gmra.mxu0 %v1023
    %v1042 = vpop.f32.mrf.mxu0
    %v1043 = vadd.f32 0.0, %v1042
    %v1044 = vpop.f32.mrf.mxu0
    %v1045 = vadd.f32 0.0, %v1044
    %1046 = vdwg.mxu0
    %v1047 = vadd.f32 %v857, %v1038
    %v1048 = vadd.f32 %v858, %v1040
    %v1049 = vadd.f32 %v859, %v1043
    %v1050 = vadd.f32 %v860, %v1045
    %v1051 = vld [vmem:[#allocation7] sm:$0x1]
    %v1053 = vperm.slane %v1051, 0
    %v1055 = vadd.f32 %v1047, %v1053
    %v1056 = vadd.f32 %v1048, %v1053
    %v1057 = vadd.f32 %v1049, %v1053
    %v1058 = vadd.f32 %v1050, %v1053
    %v1059 = vadd.f32 %v227, %v1055
    %v1060 = vadd.f32 %v228, %v1056
    %v1061 = vadd.f32 %v229, %v1057
    %v1062 = vadd.f32 %v230, %v1058
    %v1063 = vld [vmem:[#allocation8] sm:$0x1]
    %v1064 = vld [vmem:[#allocation10] sm:$0x1]
    %v1065 = vsel %vm255, %v1059, 0.0
    %1066 = vadd.xlane.f32.xlu0 %v1065
    %v1067 = vpop.xlane.xlu0 %1066
    %v1068 = vsel %vm255, %v1060, 0.0
    %1069 = vadd.xlane.f32.xlu0 %v1068
    %v1070 = vpop.xlane.xlu0 %1069
    %v1071 = vsel %vm255, %v1061, 0.0
    %1072 = vadd.xlane.f32.xlu0 %v1071
    %v1073 = vpop.xlane.xlu0 %1072
    %v1074 = vsel %vm255, %v1062, 0.0
    %1075 = vadd.xlane.f32.xlu0 %v1074
    %v1076 = vpop.xlane.xlu0 %1075
    %v1077 = vrcp.pop 32.0
    %v1078 = vmul.f32 32.0, %v1077
    %v1079 = vsub.f32 1.0, %v1078
    %v1080 = vmul.f32 %v1077, %v1079
    %v1081 = vadd.f32 %v1077, %v1080
    %vm1082 = vweird.f32 %v1077
    %v1083 = vsel %vm1082, %v1077, %v1081
    %v1084 = vmul.f32 %v1067, %v1083
    %v1085 = vmul.f32 %v1070, %v1083
    %v1086 = vmul.f32 %v1073, %v1083
    %v1087 = vmul.f32 %v1076, %v1083
    %v1088 = vsub.f32 %v1059, %v1084
    %v1089 = vsub.f32 %v1060, %v1085
    %v1090 = vsub.f32 %v1061, %v1086
    %v1091 = vsub.f32 %v1062, %v1087
    %v1092 = vmul.f32 %v1088, %v1088
    %v1093 = vmul.f32 %v1089, %v1089
    %v1094 = vmul.f32 %v1090, %v1090
    %v1095 = vmul.f32 %v1091, %v1091
    %v1096 = vsel %vm255, %v1092, 0.0
    %1097 = vadd.xlane.f32.xlu0 %v1096
    %v1098 = vpop.xlane.xlu0 %1097
    %v1099 = vsel %vm255, %v1093, 0.0
    %1100 = vadd.xlane.f32.xlu0 %v1099
    %v1101 = vpop.xlane.xlu0 %1100
    %v1102 = vsel %vm255, %v1094, 0.0
    %1103 = vadd.xlane.f32.xlu0 %v1102
    %v1104 = vpop.xlane.xlu0 %1103
    %v1105 = vsel %vm255, %v1095, 0.0
    %1106 = vadd.xlane.f32.xlu0 %v1105
    %v1107 = vpop.xlane.xlu0 %1106
    %v1108 = vmul.f32 %v1098, %v1083
    %v1109 = vmul.f32 %v1101, %v1083
    %v1110 = vmul.f32 %v1104, %v1083
    %v1111 = vmul.f32 %v1107, %v1083
    %v1112 = vadd.f32 %v1108, 1e-05
    %v1113 = vadd.f32 %v1109, 1e-05
    %v1114 = vadd.f32 %v1110, 1e-05
    %v1115 = vadd.f32 %v1111, 1e-05
    %v1116 = vrsqrt.pop %v1112
    %v1117 = vmul.f32 %v1116, %v1112
    %v1118 = vmul.f32 %v1117, %v1116
    %v1119 = vmul.f32 0.5, %v1118
    %v1120 = vsub.f32 1.5, %v1119
    %v1121 = vmul.f32 %v1116, %v1120
    %vm1122 = vweird.f32 %v1112
    %vm1123 = vweird.f32 %v1116
    %vm1124 = vmor %vm1122, %vm1123
    %v1125 = vsel %vm1124, %v1116, %v1121
    %v1126 = vrsqrt.pop %v1113
    %v1127 = vmul.f32 %v1126, %v1113
    %v1128 = vmul.f32 %v1127, %v1126
    %v1129 = vmul.f32 0.5, %v1128
    %v1130 = vsub.f32 1.5, %v1129
    %v1131 = vmul.f32 %v1126, %v1130
    %vm1132 = vweird.f32 %v1113
    %vm1133 = vweird.f32 %v1126
    %vm1134 = vmor %vm1132, %vm1133
    %v1135 = vsel %vm1134, %v1126, %v1131
    %v1136 = vrsqrt.pop %v1114
    %v1137 = vmul.f32 %v1136, %v1114
    %v1138 = vmul.f32 %v1137, %v1136
    %v1139 = vmul.f32 0.5, %v1138
    %v1140 = vsub.f32 1.5, %v1139
    %v1141 = vmul.f32 %v1136, %v1140
    %vm1142 = vweird.f32 %v1114
    %vm1143 = vweird.f32 %v1136
    %vm1144 = vmor %vm1142, %vm1143
    %v1145 = vsel %vm1144, %v1136, %v1141
    %v1146 = vrsqrt.pop %v1115
    %v1147 = vmul.f32 %v1146, %v1115
    %v1148 = vmul.f32 %v1147, %v1146
    %v1149 = vmul.f32 0.5, %v1148
    %v1150 = vsub.f32 1.5, %v1149
    %v1151 = vmul.f32 %v1146, %v1150
    %vm1152 = vweird.f32 %v1115
    %vm1153 = vweird.f32 %v1146
    %vm1154 = vmor %vm1152, %vm1153
    %v1155 = vsel %vm1154, %v1146, %v1151
    %v1156 = vmul.f32 %v1088, %v1125
    %v1157 = vmul.f32 %v1089, %v1135
    %v1158 = vmul.f32 %v1090, %v1145
    %v1159 = vmul.f32 %v1091, %v1155
    %v1161 = vperm.slane %v1063, 0
    %v1163 = vmul.f32 %v1156, %v1161
    %v1164 = vmul.f32 %v1157, %v1161
    %v1165 = vmul.f32 %v1158, %v1161
    %v1166 = vmul.f32 %v1159, %v1161
    %v1168 = vperm.slane %v1064, 0
    %v1170 = vadd.f32 %v1163, %v1168
    %v1171 = vadd.f32 %v1164, %v1168
    %v1172 = vadd.f32 %v1165, %v1168
    %v1173 = vadd.f32 %v1166, %v1168
    %v1174 = vpack.c.bf16 %v1171, %v1170
    %v1175 = vpack.c.bf16 %v1173, %v1172
    %v1176 = vld [vmem:[#allocation11] sm:$0xf]
    %v1177 = vld [vmem:[#allocation11 + $0x4] sm:$0xf]
    %v1178 = vld [vmem:[#allocation11 + $0x8] sm:$0xf]
    %v1179 = vld [vmem:[#allocation11 + $0xc] sm:$0xf]
    %v1180 = vld [vmem:[#allocation13] sm:$0x1]
    %v1182 = vperm.slane %v1180, 0
    %v1188 = vunpack.c.l.b16 %v1176
    %v1189 = vunpack.c.l.b16 %v1177
    %v1190 = vunpack.c.l.b16 %v1178
    %v1191 = vunpack.c.l.b16 %v1179
    %v1192 = vpack.c.b16 %v1189, %v1188
    %v1193 = vpack.c.b16 %v1191, %v1190
    %v1197 = vsel %vm255, %v1174, 0
    %v1200 = vsel %vm255, %v1175, 0
    %1202 = vmatpush.bf16.msra.mxu0 0
    %1203 = vmatpush.bf16.msra.mxu0 0
    %1204 = vmatpush.bf16.msra.mxu0 0
    %1205 = vmatpush.bf16.msra.mxu0 0
    %1206 = vmatpush.bf16.msra.mxu0 0
    %1207 = vmatpush.bf16.msra.mxu0 0
    %1208 = vmatpush.bf16.msra.mxu0 %v1193
    %1209 = vmatpush.bf16.msra.mxu0 %v1192
    %1210 = vmatmul.bf16.gmra.mxu0 %v1197
    %v1211 = vpop.f32.mrf.mxu0
    %v1212 = vadd.f32 %v1182, %v1211
    %v1213 = vpop.f32.mrf.mxu0
    %v1214 = vadd.f32 %v1182, %v1213
    %1215 = vmatmul.bf16.gmra.mxu0 %v1200
    %v1216 = vpop.f32.mrf.mxu0
    %v1217 = vadd.f32 %v1182, %v1216
    %v1218 = vpop.f32.mrf.mxu0
    %v1219 = vadd.f32 %v1182, %v1218
    %1220 = vdwg.mxu0
    %v1221 = vmax.f32 %v1212, 0.0
    %v1222 = vmax.f32 %v1214, 0.0
    %v1223 = vmax.f32 %v1217, 0.0
    %v1224 = vmax.f32 %v1219, 0.0
    %v1225 = vpack.c.bf16 %v1222, %v1221
    %v1226 = vpack.c.bf16 %v1224, %v1223
    %v1227 = vld [vmem:[%s11] sm:$0xf]
    %v1228 = vld [vmem:[%s11 + $0x4] sm:$0xf]
    %v1229 = vld [vmem:[%s11 + $0x8] sm:$0xf]
    %v1230 = vld [vmem:[%s11 + $0xc] sm:$0xf]
    %v1231 = vld [vmem:[%s11 + $0x10] sm:$0xf]
    %v1232 = vld [vmem:[%s11 + $0x14] sm:$0xf]
    %v1233 = vld [vmem:[%s11 + $0x18] sm:$0xf]
    %v1234 = vld [vmem:[%s11 + $0x1c] sm:$0xf]
    %v1235 = vld [vmem:[#allocation14] sm:$0x1]
    %v1237 = vperm.slane %v1235, 0
    %v1247 = vunpack.c.l.b16 %v1227
    %v1248 = vunpack.c.l.b16 %v1228
    %v1249 = vunpack.c.l.b16 %v1229
    %v1250 = vunpack.c.l.b16 %v1230
    %v1251 = vunpack.c.l.b16 %v1231
    %v1252 = vunpack.c.l.b16 %v1232
    %v1253 = vunpack.c.l.b16 %v1233
    %v1254 = vunpack.c.l.b16 %v1234
    %v1255 = vpack.c.b16 %v1248, %v1247
    %v1256 = vpack.c.b16 %v1250, %v1249
    %v1257 = vpack.c.b16 %v1252, %v1251
    %v1258 = vpack.c.b16 %v1254, %v1253
    %vm1263 = vcmask 523264
    %v1265 = vsel %vm1263, %v1225, 0
    %v1268 = vsel %vm1263, %v1226, 0
    %1270 = vmatpush.bf16.msra.mxu0 0
    %1271 = vmatpush.bf16.msra.mxu0 0
    %1272 = vmatpush.bf16.msra.mxu0 0
    %1273 = vmatpush.bf16.msra.mxu0 0
    %1274 = vmatpush.bf16.msra.mxu0 %v1258
    %1275 = vmatpush.bf16.msra.mxu0 %v1257
    %1276 = vmatpush.bf16.msra.mxu0 %v1256
    %1277 = vmatpush.bf16.msra.mxu0 %v1255
    %1278 = vmatmul.bf16.gmra.mxu0 %v1265
    %v1279 = vpop.f32.mrf.mxu0
    %v1280 = vadd.f32 %v1237, %v1279
    %v1281 = vpop.f32.mrf.mxu0
    %v1282 = vadd.f32 %v1237, %v1281
    %1283 = vmatmul.bf16.gmra.mxu0 %v1268
    %v1284 = vpop.f32.mrf.mxu0
    %v1285 = vadd.f32 %v1237, %v1284
    %v1286 = vpop.f32.mrf.mxu0
    %v1287 = vadd.f32 %v1237, %v1286
    %1288 = vdwg.mxu0
    %v1289 = vadd.f32 %v1170, %v1280
    %v1290 = vadd.f32 %v1171, %v1282
    %v1291 = vadd.f32 %v1172, %v1285
    %v1292 = vadd.f32 %v1173, %v1287
    %v1293 = vld [vmem:[#allocation16] sm:$0x1]
    %v1294 = vld [vmem:[#allocation17] sm:$0x1]
    %v1295 = vsel %vm255, %v1289, 0.0
    %1296 = vadd.xlane.f32.xlu0 %v1295
    %v1297 = vpop.xlane.xlu0 %1296
    %v1298 = vsel %vm255, %v1290, 0.0
    %1299 = vadd.xlane.f32.xlu0 %v1298
    %v1300 = vpop.xlane.xlu0 %1299
    %v1301 = vsel %vm255, %v1291, 0.0
    %1302 = vadd.xlane.f32.xlu0 %v1301
    %v1303 = vpop.xlane.xlu0 %1302
    %v1304 = vsel %vm255, %v1292, 0.0
    %1305 = vadd.xlane.f32.xlu0 %v1304
    %v1306 = vpop.xlane.xlu0 %1305
    %v1307 = vmul.f32 %v1297, %v1083
    %v1308 = vmul.f32 %v1300, %v1083
    %v1309 = vmul.f32 %v1303, %v1083
    %v1310 = vmul.f32 %v1306, %v1083
    %v1311 = vsub.f32 %v1289, %v1307
    %v1312 = vsub.f32 %v1290, %v1308
    %v1313 = vsub.f32 %v1291, %v1309
    %v1314 = vsub.f32 %v1292, %v1310
    %v1315 = vmul.f32 %v1311, %v1311
    %v1316 = vmul.f32 %v1312, %v1312
    %v1317 = vmul.f32 %v1313, %v1313
    %v1318 = vmul.f32 %v1314, %v1314
    %v1319 = vsel %vm255, %v1315, 0.0
    %1320 = vadd.xlane.f32.xlu0 %v1319
    %v1321 = vpop.xlane.xlu0 %1320
    %v1322 = vsel %vm255, %v1316, 0.0
    %1323 = vadd.xlane.f32.xlu0 %v1322
    %v1324 = vpop.xlane.xlu0 %1323
    %v1325 = vsel %vm255, %v1317, 0.0
    %1326 = vadd.xlane.f32.xlu0 %v1325
    %v1327 = vpop.xlane.xlu0 %1326
    %v1328 = vsel %vm255, %v1318, 0.0
    %1329 = vadd.xlane.f32.xlu0 %v1328
    %v1330 = vpop.xlane.xlu0 %1329
    %v1331 = vmul.f32 %v1321, %v1083
    %v1332 = vmul.f32 %v1324, %v1083
    %v1333 = vmul.f32 %v1327, %v1083
    %v1334 = vmul.f32 %v1330, %v1083
    %v1335 = vadd.f32 %v1331, 1e-05
    %v1336 = vadd.f32 %v1332, 1e-05
    %v1337 = vadd.f32 %v1333, 1e-05
    %v1338 = vadd.f32 %v1334, 1e-05
    %v1339 = vrsqrt.pop %v1335
    %v1340 = vmul.f32 %v1339, %v1335
    %v1341 = vmul.f32 %v1340, %v1339
    %v1342 = vmul.f32 0.5, %v1341
    %v1343 = vsub.f32 1.5, %v1342
    %v1344 = vmul.f32 %v1339, %v1343
    %vm1345 = vweird.f32 %v1335
    %vm1346 = vweird.f32 %v1339
    %vm1347 = vmor %vm1345, %vm1346
    %v1348 = vsel %vm1347, %v1339, %v1344
    %v1349 = vrsqrt.pop %v1336
    %v1350 = vmul.f32 %v1349, %v1336
    %v1351 = vmul.f32 %v1350, %v1349
    %v1352 = vmul.f32 0.5, %v1351
    %v1353 = vsub.f32 1.5, %v1352
    %v1354 = vmul.f32 %v1349, %v1353
    %vm1355 = vweird.f32 %v1336
    %vm1356 = vweird.f32 %v1349
    %vm1357 = vmor %vm1355, %vm1356
    %v1358 = vsel %vm1357, %v1349, %v1354
    %v1359 = vrsqrt.pop %v1337
    %v1360 = vmul.f32 %v1359, %v1337
    %v1361 = vmul.f32 %v1360, %v1359
    %v1362 = vmul.f32 0.5, %v1361
    %v1363 = vsub.f32 1.5, %v1362
    %v1364 = vmul.f32 %v1359, %v1363
    %vm1365 = vweird.f32 %v1337
    %vm1366 = vweird.f32 %v1359
    %vm1367 = vmor %vm1365, %vm1366
    %v1368 = vsel %vm1367, %v1359, %v1364
    %v1369 = vrsqrt.pop %v1338
    %v1370 = vmul.f32 %v1369, %v1338
    %v1371 = vmul.f32 %v1370, %v1369
    %v1372 = vmul.f32 0.5, %v1371
    %v1373 = vsub.f32 1.5, %v1372
    %v1374 = vmul.f32 %v1369, %v1373
    %vm1375 = vweird.f32 %v1338
    %vm1376 = vweird.f32 %v1369
    %vm1377 = vmor %vm1375, %vm1376
    %v1378 = vsel %vm1377, %v1369, %v1374
    %v1379 = vmul.f32 %v1311, %v1348
    %v1380 = vmul.f32 %v1312, %v1358
    %v1381 = vmul.f32 %v1313, %v1368
    %v1382 = vmul.f32 %v1314, %v1378
    %v1384 = vperm.slane %v1293, 0
    %v1386 = vmul.f32 %v1379, %v1384
    %v1387 = vmul.f32 %v1380, %v1384
    %v1388 = vmul.f32 %v1381, %v1384
    %v1389 = vmul.f32 %v1382, %v1384
    %v1391 = vperm.slane %v1294, 0
    %v1393 = vadd.f32 %v1386, %v1391
    %v1394 = vadd.f32 %v1387, %v1391
    %v1395 = vadd.f32 %v1388, %v1391
    %v1396 = vadd.f32 %v1389, %v1391
    %v1397 = vpack.c.bf16 %v1394, %v1393
    %v1398 = vpack.c.bf16 %v1396, %v1395
    %s1399 = scalar_lea.vmem %s3, 16
    %v1400 = vld [vmem:[%s1399] sm:$0xf]
    %v1401 = vld [vmem:[%s1399 + $0x4] sm:$0xf]
    %v1402 = vld [vmem:[%s1399 + $0x8] sm:$0xf]
    %v1403 = vld [vmem:[%s1399 + $0xc] sm:$0xf]
    %s1404 = scalar_lea.vmem [#allocation5], 1
    %v1405 = vld [vmem:[%s1404] sm:$0x1]
    %v1407 = vperm.slane %v1405, 0
    %v1413 = vunpack.c.l.b16 %v1400
    %v1414 = vunpack.c.l.b16 %v1401
    %v1415 = vunpack.c.l.b16 %v1402
    %v1416 = vunpack.c.l.b16 %v1403
    %v1417 = vpack.c.b16 %v1414, %v1413
    %v1418 = vpack.c.b16 %v1416, %v1415
    %v1422 = vsel %vm255, %v1397, 0
    %v1425 = vsel %vm255, %v1398, 0
    %1427 = vmatpush.bf16.msra.mxu0 0
    %1428 = vmatpush.bf16.msra.mxu0 0
    %1429 = vmatpush.bf16.msra.mxu0 0
    %1430 = vmatpush.bf16.msra.mxu0 0
    %1431 = vmatpush.bf16.msra.mxu0 0
    %1432 = vmatpush.bf16.msra.mxu0 0
    %1433 = vmatpush.bf16.msra.mxu0 %v1418
    %1434 = vmatpush.bf16.msra.mxu0 %v1417
    %1435 = vmatmul.bf16.gmra.mxu0 %v1422
    %v1436 = vpop.f32.mrf.mxu0
    %v1437 = vadd.f32 %v1407, %v1436
    %v1438 = vpop.f32.mrf.mxu0
    %v1439 = vadd.f32 %v1407, %v1438
    %1440 = vmatmul.bf16.gmra.mxu0 %v1425
    %v1441 = vpop.f32.mrf.mxu0
    %v1442 = vadd.f32 %v1407, %v1441
    %v1443 = vpop.f32.mrf.mxu0
    %v1444 = vadd.f32 %v1407, %v1443
    %1445 = vdwg.mxu0
    %v1446 = vpack.c.bf16 %v1437, %v1437
    %v1447 = vpack.c.bf16 %v1439, %v1439
    %v1448 = vpack.c.bf16 %v1442, %v1442
    %v1449 = vpack.c.bf16 %v1444, %v1444
    %v1452 = vunpack.c.l.b16 %v1446
    %v1453 = vunpack.c.l.b16 %v1447
    %v1454 = vpack.c.b16 %v1453, %v1452
    %1455 = vrot.lane.b32.xlu0 %v1454, 96
    %v1456 = vpop.permute.xlu0 %1455
    %v1458 = vsel %vm292, %v1454, 0
    %v1461 = vsel %vm292, %v1456, 0
    %1463 = vmatpush.bf16.xpose.msra.mxu0 0
    %1464 = vmatpush.bf16.xpose.msra.mxu0 0
    %1465 = vmatpush.bf16.xpose.msra.mxu0 0
    %1466 = vmatpush.bf16.xpose.msra.mxu0 0
    %1467 = vmatpush.bf16.xpose.msra.mxu0 0
    %1468 = vmatpush.bf16.xpose.msra.mxu0 0
    %1469 = vmatpush.bf16.xpose.msra.mxu0 0
    %1470 = vmatpush.bf16.xpose.msra.mxu0 %v1461
    %1471 = vmatmul.bf16.gmra.mxu0 %v1458
    %v1472 = vpop.f32.mrf.mxu0
    %v1473 = vadd.f32 0.0, %v1472
    %v1474 = vpop.f32.mrf.mxu0
    %v1475 = vadd.f32 0.0, %v1474
    %1476 = vdwg.mxu0
    %v1479 = vunpack.c.l.b16 %v1448
    %v1480 = vunpack.c.l.b16 %v1449
    %v1481 = vpack.c.b16 %v1480, %v1479
    %1482 = vrot.lane.b32.xlu0 %v1481, 96
    %v1483 = vpop.permute.xlu0 %1482
    %v1485 = vsel %vm292, %v1481, 0
    %v1488 = vsel %vm292, %v1483, 0
    %1490 = vmatpush.bf16.xpose.msra.mxu0 0
    %1491 = vmatpush.bf16.xpose.msra.mxu0 0
    %1492 = vmatpush.bf16.xpose.msra.mxu0 0
    %1493 = vmatpush.bf16.xpose.msra.mxu0 0
    %1494 = vmatpush.bf16.xpose.msra.mxu0 0
    %1495 = vmatpush.bf16.xpose.msra.mxu0 0
    %1496 = vmatpush.bf16.xpose.msra.mxu0 0
    %1497 = vmatpush.bf16.xpose.msra.mxu0 %v1488
    %1498 = vmatmul.bf16.gmra.mxu0 %v1485
    %v1499 = vpop.f32.mrf.mxu0
    %v1500 = vadd.f32 0.0, %v1499
    %v1501 = vpop.f32.mrf.mxu0
    %v1502 = vadd.f32 0.0, %v1501
    %1503 = vdwg.mxu0
    %v1504 = vmul.f32 %v1473, 0.35355338
    %v1505 = vmul.f32 %v1475, 0.35355338
    %v1506 = vmul.f32 %v1500, 0.35355338
    %v1507 = vmul.f32 %v1502, 0.35355338
    %v1508 = vadd.f32 %v1504, %v346
    %v1509 = vadd.f32 %v1505, %v346
    %v1510 = vadd.f32 %v1506, %v347
    %v1511 = vadd.f32 %v1507, %v347
    %v1512 = vsel %vm354, %v1508, -inf
    %1513 = vmax.xlane.f32.xlu0 %v1512
    %v1514 = vpop.xlane.xlu0 %1513
    %v1515 = vsel %vm354, %v1509, -inf
    %1516 = vmax.xlane.f32.xlu0 %v1515
    %v1517 = vpop.xlane.xlu0 %1516
    %v1518 = vsel %vm354, %v1510, -inf
    %1519 = vmax.xlane.f32.xlu0 %v1518
    %v1520 = vpop.xlane.xlu0 %1519
    %v1521 = vsel %vm354, %v1511, -inf
    %1522 = vmax.xlane.f32.xlu0 %v1521
    %v1523 = vpop.xlane.xlu0 %1522
    %v1524 = vsub.f32 %v1508, %v1514
    %v1525 = vsub.f32 %v1509, %v1517
    %v1526 = vsub.f32 %v1510, %v1520
    %v1527 = vsub.f32 %v1511, %v1523
    %v1528 = vmul.f32 %v1524, 1.442695
    %v1529 = vpow.pop %v1528
    %v1530 = vmul.f32 %v1525, 1.442695
    %v1531 = vpow.pop %v1530
    %v1532 = vmul.f32 %v1526, 1.442695
    %v1533 = vpow.pop %v1532
    %v1534 = vmul.f32 %v1527, 1.442695
    %v1535 = vpow.pop %v1534
    %v1536 = vsel %vm354, %v1529, 0.0
    %1537 = vadd.xlane.f32.xlu0 %v1536
    %v1538 = vpop.xlane.xlu0 %1537
    %v1539 = vsel %vm354, %v1531, 0.0
    %1540 = vadd.xlane.f32.xlu0 %v1539
    %v1541 = vpop.xlane.xlu0 %1540
    %v1542 = vsel %vm354, %v1533, 0.0
    %1543 = vadd.xlane.f32.xlu0 %v1542
    %v1544 = vpop.xlane.xlu0 %1543
    %v1545 = vsel %vm354, %v1535, 0.0
    %1546 = vadd.xlane.f32.xlu0 %v1545
    %v1547 = vpop.xlane.xlu0 %1546
    %v1548 = vrcp.pop %v1538
    %v1549 = vrcp.pop %v1541
    %v1550 = vrcp.pop %v1544
    %v1551 = vrcp.pop %v1547
    %v1552 = vmul.f32 %v1529, %v1548
    %v1553 = vmul.f32 %v1531, %v1549
    %v1554 = vmul.f32 %v1533, %v1550
    %v1555 = vmul.f32 %v1535, %v1551
    %v1556 = vpack.c.bf16 %v1552, %v1552
    %v1557 = vpack.c.bf16 %v1553, %v1553
    %v1558 = vpack.c.bf16 %v1554, %v1554
    %v1559 = vpack.c.bf16 %v1555, %v1555
    %v1562 = vunpack.c.l.b16 %v1556
    %v1563 = vunpack.c.l.b16 %v1557
    %v1564 = vpack.c.b16 %v1563, %v1562
    %1565 = vrot.lane.b32.xlu0 %v1454, 64
    %v1566 = vpop.permute.xlu0 %1565
    %v1569 = vsel %vm354, %v1564, 0
    %1571 = vmatpush.bf16.msra.mxu0 0
    %1572 = vmatpush.bf16.msra.mxu0 0
    %1573 = vmatpush.bf16.msra.mxu0 0
    %1574 = vmatpush.bf16.msra.mxu0 0
    %1575 = vmatpush.bf16.msra.mxu0 0
    %1576 = vmatpush.bf16.msra.mxu0 0
    %1577 = vmatpush.bf16.msra.mxu0 0
    %1578 = vmatpush.bf16.msra.mxu0 %v1566
    %1579 = vmatmul.bf16.gmra.mxu0 %v1569
    %v1580 = vpop.f32.mrf.mxu0
    %v1581 = vadd.f32 0.0, %v1580
    %v1582 = vpop.f32.mrf.mxu0
    %v1583 = vadd.f32 0.0, %v1582
    %1584 = vdwg.mxu0
    %v1587 = vunpack.c.l.b16 %v1558
    %v1588 = vunpack.c.l.b16 %v1559
    %v1589 = vpack.c.b16 %v1588, %v1587
    %1590 = vrot.lane.b32.xlu0 %v1481, 64
    %v1591 = vpop.permute.xlu0 %1590
    %v1594 = vsel %vm354, %v1589, 0
    %1596 = vmatpush.bf16.msra.mxu0 0
    %1597 = vmatpush.bf16.msra.mxu0 0
    %1598 = vmatpush.bf16.msra.mxu0 0
    %1599 = vmatpush.bf16.msra.mxu0 0
    %1600 = vmatpush.bf16.msra.mxu0 0
    %1601 = vmatpush.bf16.msra.mxu0 0
    %1602 = vmatpush.bf16.msra.mxu0 0
    %1603 = vmatpush.bf16.msra.mxu0 %v1591
    %1604 = vmatmul.bf16.gmra.mxu0 %v1594
    %v1605 = vpop.f32.mrf.mxu0
    %v1606 = vadd.f32 0.0, %v1605
    %v1607 = vpop.f32.mrf.mxu0
    %v1608 = vadd.f32 0.0, %v1607
    %1609 = vdwg.mxu0
    %v1610 = vpack.c.bf16 %v1583, %v1581
    %v1611 = vpack.c.bf16 %v1608, %v1606
    %s1612 = scalar_lea.vmem %s5, 16
    %v1613 = vld [vmem:[%s1612] sm:$0xf]
    %1614 = vrot.lane.b32.xlu0 %v1454, 120
    %v1615 = vpop.permute.xlu0 %1614
    %1616 = vrot.lane.b32.xlu0 %v1454, 88
    %v1617 = vpop.permute.xlu0 %1616
    %v1619 = vsel %vm292, %v1615, 0
    %v1622 = vsel %vm292, %v1617, 0
    %1624 = vmatpush.bf16.xpose.msra.mxu0 0
    %1625 = vmatpush.bf16.xpose.msra.mxu0 0
    %1626 = vmatpush.bf16.xpose.msra.mxu0 0
    %1627 = vmatpush.bf16.xpose.msra.mxu0 0
    %1628 = vmatpush.bf16.xpose.msra.mxu0 0
    %1629 = vmatpush.bf16.xpose.msra.mxu0 0
    %1630 = vmatpush.bf16.xpose.msra.mxu0 0
    %1631 = vmatpush.bf16.xpose.msra.mxu0 %v1622
    %1632 = vmatmul.bf16.gmra.mxu0 %v1619
    %v1633 = vpop.f32.mrf.mxu0
    %v1634 = vadd.f32 0.0, %v1633
    %v1635 = vpop.f32.mrf.mxu0
    %v1636 = vadd.f32 0.0, %v1635
    %1637 = vdwg.mxu0
    %1638 = vrot.lane.b32.xlu0 %v1481, 120
    %v1639 = vpop.permute.xlu0 %1638
    %1640 = vrot.lane.b32.xlu0 %v1481, 88
    %v1641 = vpop.permute.xlu0 %1640
    %v1643 = vsel %vm292, %v1639, 0
    %v1646 = vsel %vm292, %v1641, 0
    %1648 = vmatpush.bf16.xpose.msra.mxu0 0
    %1649 = vmatpush.bf16.xpose.msra.mxu0 0
    %1650 = vmatpush.bf16.xpose.msra.mxu0 0
    %1651 = vmatpush.bf16.xpose.msra.mxu0 0
    %1652 = vmatpush.bf16.xpose.msra.mxu0 0
    %1653 = vmatpush.bf16.xpose.msra.mxu0 0
    %1654 = vmatpush.bf16.xpose.msra.mxu0 0
    %1655 = vmatpush.bf16.xpose.msra.mxu0 %v1646
    %1656 = vmatmul.bf16.gmra.mxu0 %v1643
    %v1657 = vpop.f32.mrf.mxu0
    %v1658 = vadd.f32 0.0, %v1657
    %v1659 = vpop.f32.mrf.mxu0
    %v1660 = vadd.f32 0.0, %v1659
    %1661 = vdwg.mxu0
    %v1662 = vmul.f32 %v1634, 0.35355338
    %v1663 = vmul.f32 %v1636, 0.35355338
    %v1664 = vmul.f32 %v1658, 0.35355338
    %v1665 = vmul.f32 %v1660, 0.35355338
    %v1666 = vadd.f32 %v1662, %v346
    %v1667 = vadd.f32 %v1663, %v346
    %v1668 = vadd.f32 %v1664, %v347
    %v1669 = vadd.f32 %v1665, %v347
    %v1670 = vsel %vm354, %v1666, -inf
    %1671 = vmax.xlane.f32.xlu0 %v1670
    %v1672 = vpop.xlane.xlu0 %1671
    %v1673 = vsel %vm354, %v1667, -inf
    %1674 = vmax.xlane.f32.xlu0 %v1673
    %v1675 = vpop.xlane.xlu0 %1674
    %v1676 = vsel %vm354, %v1668, -inf
    %1677 = vmax.xlane.f32.xlu0 %v1676
    %v1678 = vpop.xlane.xlu0 %1677
    %v1679 = vsel %vm354, %v1669, -inf
    %1680 = vmax.xlane.f32.xlu0 %v1679
    %v1681 = vpop.xlane.xlu0 %1680
    %v1682 = vsub.f32 %v1666, %v1672
    %v1683 = vsub.f32 %v1667, %v1675
    %v1684 = vsub.f32 %v1668, %v1678
    %v1685 = vsub.f32 %v1669, %v1681
    %v1686 = vmul.f32 %v1682, 1.442695
    %v1687 = vpow.pop %v1686
    %v1688 = vmul.f32 %v1683, 1.442695
    %v1689 = vpow.pop %v1688
    %v1690 = vmul.f32 %v1684, 1.442695
    %v1691 = vpow.pop %v1690
    %v1692 = vmul.f32 %v1685, 1.442695
    %v1693 = vpow.pop %v1692
    %v1694 = vsel %vm354, %v1687, 0.0
    %1695 = vadd.xlane.f32.xlu0 %v1694
    %v1696 = vpop.xlane.xlu0 %1695
    %v1697 = vsel %vm354, %v1689, 0.0
    %1698 = vadd.xlane.f32.xlu0 %v1697
    %v1699 = vpop.xlane.xlu0 %1698
    %v1700 = vsel %vm354, %v1691, 0.0
    %1701 = vadd.xlane.f32.xlu0 %v1700
    %v1702 = vpop.xlane.xlu0 %1701
    %v1703 = vsel %vm354, %v1693, 0.0
    %1704 = vadd.xlane.f32.xlu0 %v1703
    %v1705 = vpop.xlane.xlu0 %1704
    %v1706 = vrcp.pop %v1696
    %v1707 = vrcp.pop %v1699
    %v1708 = vrcp.pop %v1702
    %v1709 = vrcp.pop %v1705
    %v1710 = vmul.f32 %v1687, %v1706
    %v1711 = vmul.f32 %v1689, %v1707
    %v1712 = vmul.f32 %v1691, %v1708
    %v1713 = vmul.f32 %v1693, %v1709
    %v1714 = vpack.c.bf16 %v1710, %v1710
    %v1715 = vpack.c.bf16 %v1711, %v1711
    %v1716 = vpack.c.bf16 %v1712, %v1712
    %v1717 = vpack.c.bf16 %v1713, %v1713
    %v1720 = vunpack.c.l.b16 %v1714
    %v1721 = vunpack.c.l.b16 %v1715
    %v1722 = vpack.c.b16 %v1721, %v1720
    %1723 = vrot.lane.b32.xlu0 %v1454, 56
    %v1724 = vpop.permute.xlu0 %1723
    %v1727 = vsel %vm354, %v1722, 0
    %1729 = vmatpush.bf16.msra.mxu0 0
    %1730 = vmatpush.bf16.msra.mxu0 0
    %1731 = vmatpush.bf16.msra.mxu0 0
    %1732 = vmatpush.bf16.msra.mxu0 0
    %1733 = vmatpush.bf16.msra.mxu0 0
    %1734 = vmatpush.bf16.msra.mxu0 0
    %1735 = vmatpush.bf16.msra.mxu0 0
    %1736 = vmatpush.bf16.msra.mxu0 %v1724
    %1737 = vmatmul.bf16.gmra.mxu0 %v1727
    %v1738 = vpop.f32.mrf.mxu0
    %v1739 = vadd.f32 0.0, %v1738
    %v1740 = vpop.f32.mrf.mxu0
    %v1741 = vadd.f32 0.0, %v1740
    %1742 = vdwg.mxu0
    %v1745 = vunpack.c.l.b16 %v1716
    %v1746 = vunpack.c.l.b16 %v1717
    %v1747 = vpack.c.b16 %v1746, %v1745
    %1748 = vrot.lane.b32.xlu0 %v1481, 56
    %v1749 = vpop.permute.xlu0 %1748
    %v1752 = vsel %vm354, %v1747, 0
    %1754 = vmatpush.bf16.msra.mxu0 0
    %1755 = vmatpush.bf16.msra.mxu0 0
    %1756 = vmatpush.bf16.msra.mxu0 0
    %1757 = vmatpush.bf16.msra.mxu0 0
    %1758 = vmatpush.bf16.msra.mxu0 0
    %1759 = vmatpush.bf16.msra.mxu0 0
    %1760 = vmatpush.bf16.msra.mxu0 0
    %1761 = vmatpush.bf16.msra.mxu0 %v1749
    %1762 = vmatmul.bf16.gmra.mxu0 %v1752
    %v1763 = vpop.f32.mrf.mxu0
    %v1764 = vadd.f32 0.0, %v1763
    %v1765 = vpop.f32.mrf.mxu0
    %v1766 = vadd.f32 0.0, %v1765
    %1767 = vdwg.mxu0
    %v1768 = vpack.c.bf16 %v1741, %v1739
    %v1769 = vpack.c.bf16 %v1766, %v1764
    %s1770 = scalar_lea.vmem %s5, 20
    %v1771 = vld [vmem:[%s1770] sm:$0xf]
    %v1773 = vsel %vm292, %v1768, 0
    %v1776 = vsel %vm292, %v1769, 0
    %v1779 = vsel %vm620, %v1771, 0
    %1781 = vmatpush.bf16.msra.mxu0 0
    %1782 = vmatpush.bf16.msra.mxu0 0
    %1783 = vmatpush.bf16.msra.mxu0 0
    %1784 = vmatpush.bf16.msra.mxu0 0
    %1785 = vmatpush.bf16.msra.mxu0 0
    %1786 = vmatpush.bf16.msra.mxu0 0
    %1787 = vmatpush.bf16.msra.mxu0 0
    %1788 = vmatpush.bf16.msra.mxu0 %v1779
    %1789 = vmatmul.bf16.gmra.mxu0 %v1773
    %v1790 = vpop.f32.mrf.mxu0
    %v1791 = vadd.f32 0.0, %v1790
    %v1792 = vpop.f32.mrf.mxu0
    %v1793 = vadd.f32 0.0, %v1792
    %1794 = vmatmul.bf16.gmra.mxu0 %v1776
    %v1795 = vpop.f32.mrf.mxu0
    %v1796 = vadd.f32 0.0, %v1795
    %v1797 = vpop.f32.mrf.mxu0
    %v1798 = vadd.f32 0.0, %v1797
    %1799 = vdwg.mxu0
    %v1801 = vsel %vm292, %v1610, 0
    %v1804 = vsel %vm292, %v1611, 0
    %v1807 = vsel %vm620, %v1613, 0
    %1809 = vmatpush.bf16.msra.mxu0 0
    %1810 = vmatpush.bf16.msra.mxu0 0
    %1811 = vmatpush.bf16.msra.mxu0 0
    %1812 = vmatpush.bf16.msra.mxu0 0
    %1813 = vmatpush.bf16.msra.mxu0 0
    %1814 = vmatpush.bf16.msra.mxu0 0
    %1815 = vmatpush.bf16.msra.mxu0 0
    %1816 = vmatpush.bf16.msra.mxu0 %v1807
    %1817 = vmatmul.bf16.gmra.mxu0 %v1801
    %v1818 = vpop.f32.mrf.mxu0
    %v1819 = vadd.f32 %v1791, %v1818
    %v1820 = vpop.f32.mrf.mxu0
    %v1821 = vadd.f32 %v1793, %v1820
    %1822 = vmatmul.bf16.gmra.mxu0 %v1804
    %v1823 = vpop.f32.mrf.mxu0
    %v1824 = vadd.f32 %v1796, %v1823
    %v1825 = vpop.f32.mrf.mxu0
    %v1826 = vadd.f32 %v1798, %v1825
    %1827 = vdwg.mxu0
    %1828 = vrot.lane.b32.xlu0 %v1454, 112
    %v1829 = vpop.permute.xlu0 %1828
    %1830 = vrot.lane.b32.xlu0 %v1454, 80
    %v1831 = vpop.permute.xlu0 %1830
    %v1833 = vsel %vm292, %v1829, 0
    %v1836 = vsel %vm292, %v1831, 0
    %1838 = vmatpush.bf16.xpose.msra.mxu0 0
    %1839 = vmatpush.bf16.xpose.msra.mxu0 0
    %1840 = vmatpush.bf16.xpose.msra.mxu0 0
    %1841 = vmatpush.bf16.xpose.msra.mxu0 0
    %1842 = vmatpush.bf16.xpose.msra.mxu0 0
    %1843 = vmatpush.bf16.xpose.msra.mxu0 0
    %1844 = vmatpush.bf16.xpose.msra.mxu0 0
    %1845 = vmatpush.bf16.xpose.msra.mxu0 %v1836
    %1846 = vmatmul.bf16.gmra.mxu0 %v1833
    %v1847 = vpop.f32.mrf.mxu0
    %v1848 = vadd.f32 0.0, %v1847
    %v1849 = vpop.f32.mrf.mxu0
    %v1850 = vadd.f32 0.0, %v1849
    %1851 = vdwg.mxu0
    %1852 = vrot.lane.b32.xlu0 %v1481, 112
    %v1853 = vpop.permute.xlu0 %1852
    %1854 = vrot.lane.b32.xlu0 %v1481, 80
    %v1855 = vpop.permute.xlu0 %1854
    %v1857 = vsel %vm292, %v1853, 0
    %v1860 = vsel %vm292, %v1855, 0
    %1862 = vmatpush.bf16.xpose.msra.mxu0 0
    %1863 = vmatpush.bf16.xpose.msra.mxu0 0
    %1864 = vmatpush.bf16.xpose.msra.mxu0 0
    %1865 = vmatpush.bf16.xpose.msra.mxu0 0
    %1866 = vmatpush.bf16.xpose.msra.mxu0 0
    %1867 = vmatpush.bf16.xpose.msra.mxu0 0
    %1868 = vmatpush.bf16.xpose.msra.mxu0 0
    %1869 = vmatpush.bf16.xpose.msra.mxu0 %v1860
    %1870 = vmatmul.bf16.gmra.mxu0 %v1857
    %v1871 = vpop.f32.mrf.mxu0
    %v1872 = vadd.f32 0.0, %v1871
    %v1873 = vpop.f32.mrf.mxu0
    %v1874 = vadd.f32 0.0, %v1873
    %1875 = vdwg.mxu0
    %v1876 = vmul.f32 %v1848, 0.35355338
    %v1877 = vmul.f32 %v1850, 0.35355338
    %v1878 = vmul.f32 %v1872, 0.35355338
    %v1879 = vmul.f32 %v1874, 0.35355338
    %v1880 = vadd.f32 %v1876, %v346
    %v1881 = vadd.f32 %v1877, %v346
    %v1882 = vadd.f32 %v1878, %v347
    %v1883 = vadd.f32 %v1879, %v347
    %v1884 = vsel %vm354, %v1880, -inf
    %1885 = vmax.xlane.f32.xlu0 %v1884
    %v1886 = vpop.xlane.xlu0 %1885
    %v1887 = vsel %vm354, %v1881, -inf
    %1888 = vmax.xlane.f32.xlu0 %v1887
    %v1889 = vpop.xlane.xlu0 %1888
    %v1890 = vsel %vm354, %v1882, -inf
    %1891 = vmax.xlane.f32.xlu0 %v1890
    %v1892 = vpop.xlane.xlu0 %1891
    %v1893 = vsel %vm354, %v1883, -inf
    %1894 = vmax.xlane.f32.xlu0 %v1893
    %v1895 = vpop.xlane.xlu0 %1894
    %v1896 = vsub.f32 %v1880, %v1886
    %v1897 = vsub.f32 %v1881, %v1889
    %v1898 = vsub.f32 %v1882, %v1892
    %v1899 = vsub.f32 %v1883, %v1895
    %v1900 = vmul.f32 %v1896, 1.442695
    %v1901 = vpow.pop %v1900
    %v1902 = vmul.f32 %v1897, 1.442695
    %v1903 = vpow.pop %v1902
    %v1904 = vmul.f32 %v1898, 1.442695
    %v1905 = vpow.pop %v1904
    %v1906 = vmul.f32 %v1899, 1.442695
    %v1907 = vpow.pop %v1906
    %v1908 = vsel %vm354, %v1901, 0.0
    %1909 = vadd.xlane.f32.xlu0 %v1908
    %v1910 = vpop.xlane.xlu0 %1909
    %v1911 = vsel %vm354, %v1903, 0.0
    %1912 = vadd.xlane.f32.xlu0 %v1911
    %v1913 = vpop.xlane.xlu0 %1912
    %v1914 = vsel %vm354, %v1905, 0.0
    %1915 = vadd.xlane.f32.xlu0 %v1914
    %v1916 = vpop.xlane.xlu0 %1915
    %v1917 = vsel %vm354, %v1907, 0.0
    %1918 = vadd.xlane.f32.xlu0 %v1917
    %v1919 = vpop.xlane.xlu0 %1918
    %v1920 = vrcp.pop %v1910
    %v1921 = vrcp.pop %v1913
    %v1922 = vrcp.pop %v1916
    %v1923 = vrcp.pop %v1919
    %v1924 = vmul.f32 %v1901, %v1920
    %v1925 = vmul.f32 %v1903, %v1921
    %v1926 = vmul.f32 %v1905, %v1922
    %v1927 = vmul.f32 %v1907, %v1923
    %v1928 = vpack.c.bf16 %v1924, %v1924
    %v1929 = vpack.c.bf16 %v1925, %v1925
    %v1930 = vpack.c.bf16 %v1926, %v1926
    %v1931 = vpack.c.bf16 %v1927, %v1927
    %v1934 = vunpack.c.l.b16 %v1928
    %v1935 = vunpack.c.l.b16 %v1929
    %v1936 = vpack.c.b16 %v1935, %v1934
    %1937 = vrot.lane.b32.xlu0 %v1454, 48
    %v1938 = vpop.permute.xlu0 %1937
    %v1941 = vsel %vm354, %v1936, 0
    %1943 = vmatpush.bf16.msra.mxu0 0
    %1944 = vmatpush.bf16.msra.mxu0 0
    %1945 = vmatpush.bf16.msra.mxu0 0
    %1946 = vmatpush.bf16.msra.mxu0 0
    %1947 = vmatpush.bf16.msra.mxu0 0
    %1948 = vmatpush.bf16.msra.mxu0 0
    %1949 = vmatpush.bf16.msra.mxu0 0
    %1950 = vmatpush.bf16.msra.mxu0 %v1938
    %1951 = vmatmul.bf16.gmra.mxu0 %v1941
    %v1952 = vpop.f32.mrf.mxu0
    %v1953 = vadd.f32 0.0, %v1952
    %v1954 = vpop.f32.mrf.mxu0
    %v1955 = vadd.f32 0.0, %v1954
    %1956 = vdwg.mxu0
    %v1959 = vunpack.c.l.b16 %v1930
    %v1960 = vunpack.c.l.b16 %v1931
    %v1961 = vpack.c.b16 %v1960, %v1959
    %1962 = vrot.lane.b32.xlu0 %v1481, 48
    %v1963 = vpop.permute.xlu0 %1962
    %v1966 = vsel %vm354, %v1961, 0
    %1968 = vmatpush.bf16.msra.mxu0 0
    %1969 = vmatpush.bf16.msra.mxu0 0
    %1970 = vmatpush.bf16.msra.mxu0 0
    %1971 = vmatpush.bf16.msra.mxu0 0
    %1972 = vmatpush.bf16.msra.mxu0 0
    %1973 = vmatpush.bf16.msra.mxu0 0
    %1974 = vmatpush.bf16.msra.mxu0 0
    %1975 = vmatpush.bf16.msra.mxu0 %v1963
    %1976 = vmatmul.bf16.gmra.mxu0 %v1966
    %v1977 = vpop.f32.mrf.mxu0
    %v1978 = vadd.f32 0.0, %v1977
    %v1979 = vpop.f32.mrf.mxu0
    %v1980 = vadd.f32 0.0, %v1979
    %1981 = vdwg.mxu0
    %v1982 = vpack.c.bf16 %v1955, %v1953
    %v1983 = vpack.c.bf16 %v1980, %v1978
    %s1984 = scalar_lea.vmem %s5, 24
    %v1985 = vld [vmem:[%s1984] sm:$0xf]
    %v1987 = vsel %vm292, %v1982, 0
    %v1990 = vsel %vm292, %v1983, 0
    %v1993 = vsel %vm620, %v1985, 0
    %1995 = vmatpush.bf16.msra.mxu0 0
    %1996 = vmatpush.bf16.msra.mxu0 0
    %1997 = vmatpush.bf16.msra.mxu0 0
    %1998 = vmatpush.bf16.msra.mxu0 0
    %1999 = vmatpush.bf16.msra.mxu0 0
    %2000 = vmatpush.bf16.msra.mxu0 0
    %2001 = vmatpush.bf16.msra.mxu0 0
    %2002 = vmatpush.bf16.msra.mxu0 %v1993
    %2003 = vmatmul.bf16.gmra.mxu0 %v1987
    %v2004 = vpop.f32.mrf.mxu0
    %v2005 = vadd.f32 0.0, %v2004
    %v2006 = vpop.f32.mrf.mxu0
    %v2007 = vadd.f32 0.0, %v2006
    %2008 = vmatmul.bf16.gmra.mxu0 %v1990
    %v2009 = vpop.f32.mrf.mxu0
    %v2010 = vadd.f32 0.0, %v2009
    %v2011 = vpop.f32.mrf.mxu0
    %v2012 = vadd.f32 0.0, %v2011
    %2013 = vdwg.mxu0
    %v2014 = vadd.f32 %v1819, %v2005
    %v2015 = vadd.f32 %v1821, %v2007
    %v2016 = vadd.f32 %v1824, %v2010
    %v2017 = vadd.f32 %v1826, %v2012
    %2018 = vrot.lane.b32.xlu0 %v1454, 104
    %v2019 = vpop.permute.xlu0 %2018
    %2020 = vrot.lane.b32.xlu0 %v1454, 72
    %v2021 = vpop.permute.xlu0 %2020
    %v2023 = vsel %vm292, %v2019, 0
    %v2026 = vsel %vm292, %v2021, 0
    %2028 = vmatpush.bf16.xpose.msra.mxu0 0
    %2029 = vmatpush.bf16.xpose.msra.mxu0 0
    %2030 = vmatpush.bf16.xpose.msra.mxu0 0
    %2031 = vmatpush.bf16.xpose.msra.mxu0 0
    %2032 = vmatpush.bf16.xpose.msra.mxu0 0
    %2033 = vmatpush.bf16.xpose.msra.mxu0 0
    %2034 = vmatpush.bf16.xpose.msra.mxu0 0
    %2035 = vmatpush.bf16.xpose.msra.mxu0 %v2026
    %2036 = vmatmul.bf16.gmra.mxu0 %v2023
    %v2037 = vpop.f32.mrf.mxu0
    %v2038 = vadd.f32 0.0, %v2037
    %v2039 = vpop.f32.mrf.mxu0
    %v2040 = vadd.f32 0.0, %v2039
    %2041 = vdwg.mxu0
    %2042 = vrot.lane.b32.xlu0 %v1481, 104
    %v2043 = vpop.permute.xlu0 %2042
    %2044 = vrot.lane.b32.xlu0 %v1481, 72
    %v2045 = vpop.permute.xlu0 %2044
    %v2047 = vsel %vm292, %v2043, 0
    %v2050 = vsel %vm292, %v2045, 0
    %2052 = vmatpush.bf16.xpose.msra.mxu0 0
    %2053 = vmatpush.bf16.xpose.msra.mxu0 0
    %2054 = vmatpush.bf16.xpose.msra.mxu0 0
    %2055 = vmatpush.bf16.xpose.msra.mxu0 0
    %2056 = vmatpush.bf16.xpose.msra.mxu0 0
    %2057 = vmatpush.bf16.xpose.msra.mxu0 0
    %2058 = vmatpush.bf16.xpose.msra.mxu0 0
    %2059 = vmatpush.bf16.xpose.msra.mxu0 %v2050
    %2060 = vmatmul.bf16.gmra.mxu0 %v2047
    %v2061 = vpop.f32.mrf.mxu0
    %v2062 = vadd.f32 0.0, %v2061
    %v2063 = vpop.f32.mrf.mxu0
    %v2064 = vadd.f32 0.0, %v2063
    %2065 = vdwg.mxu0
    %v2066 = vmul.f32 %v2038, 0.35355338
    %v2067 = vmul.f32 %v2040, 0.35355338
    %v2068 = vmul.f32 %v2062, 0.35355338
    %v2069 = vmul.f32 %v2064, 0.35355338
    %v2070 = vadd.f32 %v2066, %v346
    %v2071 = vadd.f32 %v2067, %v346
    %v2072 = vadd.f32 %v2068, %v347
    %v2073 = vadd.f32 %v2069, %v347
    %v2074 = vsel %vm354, %v2070, -inf
    %2075 = vmax.xlane.f32.xlu0 %v2074
    %v2076 = vpop.xlane.xlu0 %2075
    %v2077 = vsel %vm354, %v2071, -inf
    %2078 = vmax.xlane.f32.xlu0 %v2077
    %v2079 = vpop.xlane.xlu0 %2078
    %v2080 = vsel %vm354, %v2072, -inf
    %2081 = vmax.xlane.f32.xlu0 %v2080
    %v2082 = vpop.xlane.xlu0 %2081
    %v2083 = vsel %vm354, %v2073, -inf
    %2084 = vmax.xlane.f32.xlu0 %v2083
    %v2085 = vpop.xlane.xlu0 %2084
    %v2086 = vsub.f32 %v2070, %v2076
    %v2087 = vsub.f32 %v2071, %v2079
    %v2088 = vsub.f32 %v2072, %v2082
    %v2089 = vsub.f32 %v2073, %v2085
    %v2090 = vmul.f32 %v2086, 1.442695
    %v2091 = vpow.pop %v2090
    %v2092 = vmul.f32 %v2087, 1.442695
    %v2093 = vpow.pop %v2092
    %v2094 = vmul.f32 %v2088, 1.442695
    %v2095 = vpow.pop %v2094
    %v2096 = vmul.f32 %v2089, 1.442695
    %v2097 = vpow.pop %v2096
    %v2098 = vsel %vm354, %v2091, 0.0
    %2099 = vadd.xlane.f32.xlu0 %v2098
    %v2100 = vpop.xlane.xlu0 %2099
    %v2101 = vsel %vm354, %v2093, 0.0
    %2102 = vadd.xlane.f32.xlu0 %v2101
    %v2103 = vpop.xlane.xlu0 %2102
    %v2104 = vsel %vm354, %v2095, 0.0
    %2105 = vadd.xlane.f32.xlu0 %v2104
    %v2106 = vpop.xlane.xlu0 %2105
    %v2107 = vsel %vm354, %v2097, 0.0
    %2108 = vadd.xlane.f32.xlu0 %v2107
    %v2109 = vpop.xlane.xlu0 %2108
    %v2110 = vrcp.pop %v2100
    %v2111 = vrcp.pop %v2103
    %v2112 = vrcp.pop %v2106
    %v2113 = vrcp.pop %v2109
    %v2114 = vmul.f32 %v2091, %v2110
    %v2115 = vmul.f32 %v2093, %v2111
    %v2116 = vmul.f32 %v2095, %v2112
    %v2117 = vmul.f32 %v2097, %v2113
    %v2118 = vpack.c.bf16 %v2114, %v2114
    %v2119 = vpack.c.bf16 %v2115, %v2115
    %v2120 = vpack.c.bf16 %v2116, %v2116
    %v2121 = vpack.c.bf16 %v2117, %v2117
    %v2124 = vunpack.c.l.b16 %v2118
    %v2125 = vunpack.c.l.b16 %v2119
    %v2126 = vpack.c.b16 %v2125, %v2124
    %2127 = vrot.lane.b32.xlu0 %v1454, 40
    %v2128 = vpop.permute.xlu0 %2127
    %v2131 = vsel %vm354, %v2126, 0
    %2133 = vmatpush.bf16.msra.mxu0 0
    %2134 = vmatpush.bf16.msra.mxu0 0
    %2135 = vmatpush.bf16.msra.mxu0 0
    %2136 = vmatpush.bf16.msra.mxu0 0
    %2137 = vmatpush.bf16.msra.mxu0 0
    %2138 = vmatpush.bf16.msra.mxu0 0
    %2139 = vmatpush.bf16.msra.mxu0 0
    %2140 = vmatpush.bf16.msra.mxu0 %v2128
    %2141 = vmatmul.bf16.gmra.mxu0 %v2131
    %v2142 = vpop.f32.mrf.mxu0
    %v2143 = vadd.f32 0.0, %v2142
    %v2144 = vpop.f32.mrf.mxu0
    %v2145 = vadd.f32 0.0, %v2144
    %2146 = vdwg.mxu0
    %v2149 = vunpack.c.l.b16 %v2120
    %v2150 = vunpack.c.l.b16 %v2121
    %v2151 = vpack.c.b16 %v2150, %v2149
    %2152 = vrot.lane.b32.xlu0 %v1481, 40
    %v2153 = vpop.permute.xlu0 %2152
    %v2156 = vsel %vm354, %v2151, 0
    %2158 = vmatpush.bf16.msra.mxu0 0
    %2159 = vmatpush.bf16.msra.mxu0 0
    %2160 = vmatpush.bf16.msra.mxu0 0
    %2161 = vmatpush.bf16.msra.mxu0 0
    %2162 = vmatpush.bf16.msra.mxu0 0
    %2163 = vmatpush.bf16.msra.mxu0 0
    %2164 = vmatpush.bf16.msra.mxu0 0
    %2165 = vmatpush.bf16.msra.mxu0 %v2153
    %2166 = vmatmul.bf16.gmra.mxu0 %v2156
    %v2167 = vpop.f32.mrf.mxu0
    %v2168 = vadd.f32 0.0, %v2167
    %v2169 = vpop.f32.mrf.mxu0
    %v2170 = vadd.f32 0.0, %v2169
    %2171 = vdwg.mxu0
    %v2172 = vpack.c.bf16 %v2145, %v2143
    %v2173 = vpack.c.bf16 %v2170, %v2168
    %s2174 = scalar_lea.vmem %s5, 28
    %v2175 = vld [vmem:[%s2174] sm:$0xf]
    %v2177 = vsel %vm292, %v2172, 0
    %v2180 = vsel %vm292, %v2173, 0
    %v2183 = vsel %vm620, %v2175, 0
    %2185 = vmatpush.bf16.msra.mxu0 0
    %2186 = vmatpush.bf16.msra.mxu0 0
    %2187 = vmatpush.bf16.msra.mxu0 0
    %2188 = vmatpush.bf16.msra.mxu0 0
    %2189 = vmatpush.bf16.msra.mxu0 0
    %2190 = vmatpush.bf16.msra.mxu0 0
    %2191 = vmatpush.bf16.msra.mxu0 0
    %2192 = vmatpush.bf16.msra.mxu0 %v2183
    %2193 = vmatmul.bf16.gmra.mxu0 %v2177
    %v2194 = vpop.f32.mrf.mxu0
    %v2195 = vadd.f32 0.0, %v2194
    %v2196 = vpop.f32.mrf.mxu0
    %v2197 = vadd.f32 0.0, %v2196
    %2198 = vmatmul.bf16.gmra.mxu0 %v2180
    %v2199 = vpop.f32.mrf.mxu0
    %v2200 = vadd.f32 0.0, %v2199
    %v2201 = vpop.f32.mrf.mxu0
    %v2202 = vadd.f32 0.0, %v2201
    %2203 = vdwg.mxu0
    %v2204 = vadd.f32 %v2014, %v2195
    %v2205 = vadd.f32 %v2015, %v2197
    %v2206 = vadd.f32 %v2016, %v2200
    %v2207 = vadd.f32 %v2017, %v2202
    %s2208 = scalar_lea.vmem [#allocation7], 1
    %v2209 = vld [vmem:[%s2208] sm:$0x1]
    %v2211 = vperm.slane %v2209, 0
    %v2213 = vadd.f32 %v2204, %v2211
    %v2214 = vadd.f32 %v2205, %v2211
    %v2215 = vadd.f32 %v2206, %v2211
    %v2216 = vadd.f32 %v2207, %v2211
    %v2217 = vadd.f32 %v1393, %v2213
    %v2218 = vadd.f32 %v1394, %v2214
    %v2219 = vadd.f32 %v1395, %v2215
    %v2220 = vadd.f32 %v1396, %v2216
    %s2221 = scalar_lea.vmem [#allocation8], 1
    %v2222 = vld [vmem:[%s2221] sm:$0x1]
    %s2223 = scalar_lea.vmem [#allocation10], 1
    %v2224 = vld [vmem:[%s2223] sm:$0x1]
    %v2225 = vsel %vm255, %v2217, 0.0
    %2226 = vadd.xlane.f32.xlu0 %v2225
    %v2227 = vpop.xlane.xlu0 %2226
    %v2228 = vsel %vm255, %v2218, 0.0
    %2229 = vadd.xlane.f32.xlu0 %v2228
    %v2230 = vpop.xlane.xlu0 %2229
    %v2231 = vsel %vm255, %v2219, 0.0
    %2232 = vadd.xlane.f32.xlu0 %v2231
    %v2233 = vpop.xlane.xlu0 %2232
    %v2234 = vsel %vm255, %v2220, 0.0
    %2235 = vadd.xlane.f32.xlu0 %v2234
    %v2236 = vpop.xlane.xlu0 %2235
    %v2237 = vmul.f32 %v2227, %v1083
    %v2238 = vmul.f32 %v2230, %v1083
    %v2239 = vmul.f32 %v2233, %v1083
    %v2240 = vmul.f32 %v2236, %v1083
    %v2241 = vsub.f32 %v2217, %v2237
    %v2242 = vsub.f32 %v2218, %v2238
    %v2243 = vsub.f32 %v2219, %v2239
    %v2244 = vsub.f32 %v2220, %v2240
    %v2245 = vmul.f32 %v2241, %v2241
    %v2246 = vmul.f32 %v2242, %v2242
    %v2247 = vmul.f32 %v2243, %v2243
    %v2248 = vmul.f32 %v2244, %v2244
    %v2249 = vsel %vm255, %v2245, 0.0
    %2250 = vadd.xlane.f32.xlu0 %v2249
    %v2251 = vpop.xlane.xlu0 %2250
    %v2252 = vsel %vm255, %v2246, 0.0
    %2253 = vadd.xlane.f32.xlu0 %v2252
    %v2254 = vpop.xlane.xlu0 %2253
    %v2255 = vsel %vm255, %v2247, 0.0
    %2256 = vadd.xlane.f32.xlu0 %v2255
    %v2257 = vpop.xlane.xlu0 %2256
    %v2258 = vsel %vm255, %v2248, 0.0
    %2259 = vadd.xlane.f32.xlu0 %v2258
    %v2260 = vpop.xlane.xlu0 %2259
    %v2261 = vmul.f32 %v2251, %v1083
    %v2262 = vmul.f32 %v2254, %v1083
    %v2263 = vmul.f32 %v2257, %v1083
    %v2264 = vmul.f32 %v2260, %v1083
    %v2265 = vadd.f32 %v2261, 1e-05
    %v2266 = vadd.f32 %v2262, 1e-05
    %v2267 = vadd.f32 %v2263, 1e-05
    %v2268 = vadd.f32 %v2264, 1e-05
    %v2269 = vrsqrt.pop %v2265
    %v2270 = vmul.f32 %v2269, %v2265
    %v2271 = vmul.f32 %v2270, %v2269
    %v2272 = vmul.f32 0.5, %v2271
    %v2273 = vsub.f32 1.5, %v2272
    %v2274 = vmul.f32 %v2269, %v2273
    %vm2275 = vweird.f32 %v2265
    %vm2276 = vweird.f32 %v2269
    %vm2277 = vmor %vm2275, %vm2276
    %v2278 = vsel %vm2277, %v2269, %v2274
    %v2279 = vrsqrt.pop %v2266
    %v2280 = vmul.f32 %v2279, %v2266
    %v2281 = vmul.f32 %v2280, %v2279
    %v2282 = vmul.f32 0.5, %v2281
    %v2283 = vsub.f32 1.5, %v2282
    %v2284 = vmul.f32 %v2279, %v2283
    %vm2285 = vweird.f32 %v2266
    %vm2286 = vweird.f32 %v2279
    %vm2287 = vmor %vm2285, %vm2286
    %v2288 = vsel %vm2287, %v2279, %v2284
    %v2289 = vrsqrt.pop %v2267
    %v2290 = vmul.f32 %v2289, %v2267
    %v2291 = vmul.f32 %v2290, %v2289
    %v2292 = vmul.f32 0.5, %v2291
    %v2293 = vsub.f32 1.5, %v2292
    %v2294 = vmul.f32 %v2289, %v2293
    %vm2295 = vweird.f32 %v2267
    %vm2296 = vweird.f32 %v2289
    %vm2297 = vmor %vm2295, %vm2296
    %v2298 = vsel %vm2297, %v2289, %v2294
    %v2299 = vrsqrt.pop %v2268
    %v2300 = vmul.f32 %v2299, %v2268
    %v2301 = vmul.f32 %v2300, %v2299
    %v2302 = vmul.f32 0.5, %v2301
    %v2303 = vsub.f32 1.5, %v2302
    %v2304 = vmul.f32 %v2299, %v2303
    %vm2305 = vweird.f32 %v2268
    %vm2306 = vweird.f32 %v2299
    %vm2307 = vmor %vm2305, %vm2306
    %v2308 = vsel %vm2307, %v2299, %v2304
    %v2309 = vmul.f32 %v2241, %v2278
    %v2310 = vmul.f32 %v2242, %v2288
    %v2311 = vmul.f32 %v2243, %v2298
    %v2312 = vmul.f32 %v2244, %v2308
    %v2314 = vperm.slane %v2222, 0
    %v2316 = vmul.f32 %v2309, %v2314
    %v2317 = vmul.f32 %v2310, %v2314
    %v2318 = vmul.f32 %v2311, %v2314
    %v2319 = vmul.f32 %v2312, %v2314
    %v2321 = vperm.slane %v2224, 0
    %v2323 = vadd.f32 %v2316, %v2321
    %v2324 = vadd.f32 %v2317, %v2321
    %v2325 = vadd.f32 %v2318, %v2321
    %v2326 = vadd.f32 %v2319, %v2321
    %v2327 = vpack.c.bf16 %v2324, %v2323
    %v2328 = vpack.c.bf16 %v2326, %v2325
    %s2329 = scalar_lea.vmem [#allocation11], 16
    %v2330 = vld [vmem:[%s2329] sm:$0xf]
    %v2331 = vld [vmem:[%s2329 + $0x4] sm:$0xf]
    %v2332 = vld [vmem:[%s2329 + $0x8] sm:$0xf]
    %v2333 = vld [vmem:[%s2329 + $0xc] sm:$0xf]
    %s2334 = scalar_lea.vmem [#allocation13], 1
    %v2335 = vld [vmem:[%s2334] sm:$0x1]
    %v2337 = vperm.slane %v2335, 0
    %v2343 = vunpack.c.l.b16 %v2330
    %v2344 = vunpack.c.l.b16 %v2331
    %v2345 = vunpack.c.l.b16 %v2332
    %v2346 = vunpack.c.l.b16 %v2333
    %v2347 = vpack.c.b16 %v2344, %v2343
    %v2348 = vpack.c.b16 %v2346, %v2345
    %v2352 = vsel %vm255, %v2327, 0
    %v2355 = vsel %vm255, %v2328, 0
    %2357 = vmatpush.bf16.msra.mxu0 0
    %2358 = vmatpush.bf16.msra.mxu0 0
    %2359 = vmatpush.bf16.msra.mxu0 0
    %2360 = vmatpush.bf16.msra.mxu0 0
    %2361 = vmatpush.bf16.msra.mxu0 0
    %2362 = vmatpush.bf16.msra.mxu0 0
    %2363 = vmatpush.bf16.msra.mxu0 %v2348
    %2364 = vmatpush.bf16.msra.mxu0 %v2347
    %2365 = vmatmul.bf16.gmra.mxu0 %v2352
    %v2366 = vpop.f32.mrf.mxu0
    %v2367 = vadd.f32 %v2337, %v2366
    %v2368 = vpop.f32.mrf.mxu0
    %v2369 = vadd.f32 %v2337, %v2368
    %2370 = vmatmul.bf16.gmra.mxu0 %v2355
    %v2371 = vpop.f32.mrf.mxu0
    %v2372 = vadd.f32 %v2337, %v2371
    %v2373 = vpop.f32.mrf.mxu0
    %v2374 = vadd.f32 %v2337, %v2373
    %2375 = vdwg.mxu0
    %v2376 = vmax.f32 %v2367, 0.0
    %v2377 = vmax.f32 %v2369, 0.0
    %v2378 = vmax.f32 %v2372, 0.0
    %v2379 = vmax.f32 %v2374, 0.0
    %v2380 = vpack.c.bf16 %v2377, %v2376
    %v2381 = vpack.c.bf16 %v2379, %v2378
    %s2382 = scalar_lea.vmem %s11, 32
    %v2383 = vld [vmem:[%s2382] sm:$0xf]
    %v2384 = vld [vmem:[%s2382 + $0x4] sm:$0xf]
    %v2385 = vld [vmem:[%s2382 + $0x8] sm:$0xf]
    %v2386 = vld [vmem:[%s2382 + $0xc] sm:$0xf]
    %v2387 = vld [vmem:[%s2382 + $0x10] sm:$0xf]
    %v2388 = vld [vmem:[%s2382 + $0x14] sm:$0xf]
    %v2389 = vld [vmem:[%s2382 + $0x18] sm:$0xf]
    %v2390 = vld [vmem:[%s2382 + $0x1c] sm:$0xf]
    %s2391 = scalar_lea.vmem [#allocation14], 1
    %v2392 = vld [vmem:[%s2391] sm:$0x1]
    %v2394 = vperm.slane %v2392, 0
    %v2404 = vunpack.c.l.b16 %v2383
    %v2405 = vunpack.c.l.b16 %v2384
    %v2406 = vunpack.c.l.b16 %v2385
    %v2407 = vunpack.c.l.b16 %v2386
    %v2408 = vunpack.c.l.b16 %v2387
    %v2409 = vunpack.c.l.b16 %v2388
    %v2410 = vunpack.c.l.b16 %v2389
    %v2411 = vunpack.c.l.b16 %v2390
    %v2412 = vpack.c.b16 %v2405, %v2404
    %v2413 = vpack.c.b16 %v2407, %v2406
    %v2414 = vpack.c.b16 %v2409, %v2408
    %v2415 = vpack.c.b16 %v2411, %v2410
    %v2421 = vsel %vm1263, %v2380, 0
    %v2424 = vsel %vm1263, %v2381, 0
    %2426 = vmatpush.bf16.msra.mxu0 0
    %2427 = vmatpush.bf16.msra.mxu0 0
    %2428 = vmatpush.bf16.msra.mxu0 0
    %2429 = vmatpush.bf16.msra.mxu0 0
    %2430 = vmatpush.bf16.msra.mxu0 %v2415
    %2431 = vmatpush.bf16.msra.mxu0 %v2414
    %2432 = vmatpush.bf16.msra.mxu0 %v2413
    %2433 = vmatpush.bf16.msra.mxu0 %v2412
    %2434 = vmatmul.bf16.gmra.mxu0 %v2421
    %v2435 = vpop.f32.mrf.mxu0
    %v2436 = vadd.f32 %v2394, %v2435
    %v2437 = vpop.f32.mrf.mxu0
    %v2438 = vadd.f32 %v2394, %v2437
    %2439 = vmatmul.bf16.gmra.mxu0 %v2424
    %v2440 = vpop.f32.mrf.mxu0
    %v2441 = vadd.f32 %v2394, %v2440
    %v2442 = vpop.f32.mrf.mxu0
    %v2443 = vadd.f32 %v2394, %v2442
    %2444 = vdwg.mxu0
    %v2445 = vadd.f32 %v2323, %v2436
    %v2446 = vadd.f32 %v2324, %v2438
    %v2447 = vadd.f32 %v2325, %v2441
    %v2448 = vadd.f32 %v2326, %v2443
    %s2449 = scalar_lea.vmem [#allocation16], 1
    %v2450 = vld [vmem:[%s2449] sm:$0x1]
    %s2451 = scalar_lea.vmem [#allocation17], 1
    %v2452 = vld [vmem:[%s2451] sm:$0x1]
    %v2453 = vsel %vm255, %v2445, 0.0
    %2454 = vadd.xlane.f32.xlu0 %v2453
    %v2455 = vpop.xlane.xlu0 %2454
    %v2456 = vsel %vm255, %v2446, 0.0
    %2457 = vadd.xlane.f32.xlu0 %v2456
    %v2458 = vpop.xlane.xlu0 %2457
    %v2459 = vsel %vm255, %v2447, 0.0
    %2460 = vadd.xlane.f32.xlu0 %v2459
    %v2461 = vpop.xlane.xlu0 %2460
    %v2462 = vsel %vm255, %v2448, 0.0
    %2463 = vadd.xlane.f32.xlu0 %v2462
    %v2464 = vpop.xlane.xlu0 %2463
    %v2465 = vmul.f32 %v2455, %v1083
    %v2466 = vmul.f32 %v2458, %v1083
    %v2467 = vmul.f32 %v2461, %v1083
    %v2468 = vmul.f32 %v2464, %v1083
    %v2469 = vsub.f32 %v2445, %v2465
    %v2470 = vsub.f32 %v2446, %v2466
    %v2471 = vsub.f32 %v2447, %v2467
    %v2472 = vsub.f32 %v2448, %v2468
    %v2473 = vmul.f32 %v2469, %v2469
    %v2474 = vmul.f32 %v2470, %v2470
    %v2475 = vmul.f32 %v2471, %v2471
    %v2476 = vmul.f32 %v2472, %v2472
    %v2477 = vsel %vm255, %v2473, 0.0
    %2478 = vadd.xlane.f32.xlu0 %v2477
    %v2479 = vpop.xlane.xlu0 %2478
    %v2480 = vsel %vm255, %v2474, 0.0
    %2481 = vadd.xlane.f32.xlu0 %v2480
    %v2482 = vpop.xlane.xlu0 %2481
    %v2483 = vsel %vm255, %v2475, 0.0
    %2484 = vadd.xlane.f32.xlu0 %v2483
    %v2485 = vpop.xlane.xlu0 %2484
    %v2486 = vsel %vm255, %v2476, 0.0
    %2487 = vadd.xlane.f32.xlu0 %v2486
    %v2488 = vpop.xlane.xlu0 %2487
    %v2489 = vmul.f32 %v2479, %v1083
    %v2490 = vmul.f32 %v2482, %v1083
    %v2491 = vmul.f32 %v2485, %v1083
    %v2492 = vmul.f32 %v2488, %v1083
    %v2493 = vadd.f32 %v2489, 1e-05
    %v2494 = vadd.f32 %v2490, 1e-05
    %v2495 = vadd.f32 %v2491, 1e-05
    %v2496 = vadd.f32 %v2492, 1e-05
    %v2497 = vrsqrt.pop %v2493
    %v2498 = vmul.f32 %v2497, %v2493
    %v2499 = vmul.f32 %v2498, %v2497
    %v2500 = vmul.f32 0.5, %v2499
    %v2501 = vsub.f32 1.5, %v2500
    %v2502 = vmul.f32 %v2497, %v2501
    %vm2503 = vweird.f32 %v2493
    %vm2504 = vweird.f32 %v2497
    %vm2505 = vmor %vm2503, %vm2504
    %v2506 = vsel %vm2505, %v2497, %v2502
    %v2507 = vrsqrt.pop %v2494
    %v2508 = vmul.f32 %v2507, %v2494
    %v2509 = vmul.f32 %v2508, %v2507
    %v2510 = vmul.f32 0.5, %v2509
    %v2511 = vsub.f32 1.5, %v2510
    %v2512 = vmul.f32 %v2507, %v2511
    %vm2513 = vweird.f32 %v2494
    %vm2514 = vweird.f32 %v2507
    %vm2515 = vmor %vm2513, %vm2514
    %v2516 = vsel %vm2515, %v2507, %v2512
    %v2517 = vrsqrt.pop %v2495
    %v2518 = vmul.f32 %v2517, %v2495
    %v2519 = vmul.f32 %v2518, %v2517
    %v2520 = vmul.f32 0.5, %v2519
    %v2521 = vsub.f32 1.5, %v2520
    %v2522 = vmul.f32 %v2517, %v2521
    %vm2523 = vweird.f32 %v2495
    %vm2524 = vweird.f32 %v2517
    %vm2525 = vmor %vm2523, %vm2524
    %v2526 = vsel %vm2525, %v2517, %v2522
    %v2527 = vrsqrt.pop %v2496
    %v2528 = vmul.f32 %v2527, %v2496
    %v2529 = vmul.f32 %v2528, %v2527
    %v2530 = vmul.f32 0.5, %v2529
    %v2531 = vsub.f32 1.5, %v2530
    %v2532 = vmul.f32 %v2527, %v2531
    %vm2533 = vweird.f32 %v2496
    %vm2534 = vweird.f32 %v2527
    %vm2535 = vmor %vm2533, %vm2534
    %v2536 = vsel %vm2535, %v2527, %v2532
    %v2537 = vmul.f32 %v2469, %v2506
    %v2538 = vmul.f32 %v2470, %v2516
    %v2539 = vmul.f32 %v2471, %v2526
    %v2540 = vmul.f32 %v2472, %v2536
    %v2542 = vperm.slane %v2450, 0
    %v2544 = vmul.f32 %v2537, %v2542
    %v2545 = vmul.f32 %v2538, %v2542
    %v2546 = vmul.f32 %v2539, %v2542
    %v2547 = vmul.f32 %v2540, %v2542
    %v2549 = vperm.slane %v2452, 0
    %v2551 = vadd.f32 %v2544, %v2549
    %v2552 = vadd.f32 %v2545, %v2549
    %v2553 = vadd.f32 %v2546, %v2549
    %v2554 = vadd.f32 %v2547, %v2549
    %v2555 = vld [vmem:[%s15] sm:$0x1]
    %v2556 = vld [vmem:[%s16] sm:$0x1]
    %v2557 = vsel %vm255, %v2551, 0.0
    %2558 = vadd.xlane.f32.xlu0 %v2557
    %v2559 = vpop.xlane.xlu0 %2558
    %v2560 = vsel %vm255, %v2552, 0.0
    %2561 = vadd.xlane.f32.xlu0 %v2560
    %v2562 = vpop.xlane.xlu0 %2561
    %v2563 = vsel %vm255, %v2553, 0.0
    %2564 = vadd.xlane.f32.xlu0 %v2563
    %v2565 = vpop.xlane.xlu0 %2564
    %v2566 = vsel %vm255, %v2554, 0.0
    %2567 = vadd.xlane.f32.xlu0 %v2566
    %v2568 = vpop.xlane.xlu0 %2567
    %v2569 = vmul.f32 %v2559, %v1083
    %v2570 = vmul.f32 %v2562, %v1083
    %v2571 = vmul.f32 %v2565, %v1083
    %v2572 = vmul.f32 %v2568, %v1083
    %v2573 = vsub.f32 %v2551, %v2569
    %v2574 = vsub.f32 %v2552, %v2570
    %v2575 = vsub.f32 %v2553, %v2571
    %v2576 = vsub.f32 %v2554, %v2572
    %v2577 = vmul.f32 %v2573, %v2573
    %v2578 = vmul.f32 %v2574, %v2574
    %v2579 = vmul.f32 %v2575, %v2575
    %v2580 = vmul.f32 %v2576, %v2576
    %v2581 = vsel %vm255, %v2577, 0.0
    %2582 = vadd.xlane.f32.xlu0 %v2581
    %v2583 = vpop.xlane.xlu0 %2582
    %v2584 = vsel %vm255, %v2578, 0.0
    %2585 = vadd.xlane.f32.xlu0 %v2584
    %v2586 = vpop.xlane.xlu0 %2585
    %v2587 = vsel %vm255, %v2579, 0.0
    %2588 = vadd.xlane.f32.xlu0 %v2587
    %v2589 = vpop.xlane.xlu0 %2588
    %v2590 = vsel %vm255, %v2580, 0.0
    %2591 = vadd.xlane.f32.xlu0 %v2590
    %v2592 = vpop.xlane.xlu0 %2591
    %v2593 = vmul.f32 %v2583, %v1083
    %v2594 = vmul.f32 %v2586, %v1083
    %v2595 = vmul.f32 %v2589, %v1083
    %v2596 = vmul.f32 %v2592, %v1083
    %v2597 = vadd.f32 %v2593, 1e-05
    %v2598 = vadd.f32 %v2594, 1e-05
    %v2599 = vadd.f32 %v2595, 1e-05
    %v2600 = vadd.f32 %v2596, 1e-05
    %v2601 = vrsqrt.pop %v2597
    %v2602 = vmul.f32 %v2601, %v2597
    %v2603 = vmul.f32 %v2602, %v2601
    %v2604 = vmul.f32 0.5, %v2603
    %v2605 = vsub.f32 1.5, %v2604
    %v2606 = vmul.f32 %v2601, %v2605
    %vm2607 = vweird.f32 %v2597
    %vm2608 = vweird.f32 %v2601
    %vm2609 = vmor %vm2607, %vm2608
    %v2610 = vsel %vm2609, %v2601, %v2606
    %v2611 = vrsqrt.pop %v2598
    %v2612 = vmul.f32 %v2611, %v2598
    %v2613 = vmul.f32 %v2612, %v2611
    %v2614 = vmul.f32 0.5, %v2613
    %v2615 = vsub.f32 1.5, %v2614
    %v2616 = vmul.f32 %v2611, %v2615
    %vm2617 = vweird.f32 %v2598
    %vm2618 = vweird.f32 %v2611
    %vm2619 = vmor %vm2617, %vm2618
    %v2620 = vsel %vm2619, %v2611, %v2616
    %v2621 = vrsqrt.pop %v2599
    %v2622 = vmul.f32 %v2621, %v2599
    %v2623 = vmul.f32 %v2622, %v2621
    %v2624 = vmul.f32 0.5, %v2623
    %v2625 = vsub.f32 1.5, %v2624
    %v2626 = vmul.f32 %v2621, %v2625
    %vm2627 = vweird.f32 %v2599
    %vm2628 = vweird.f32 %v2621
    %vm2629 = vmor %vm2627, %vm2628
    %v2630 = vsel %vm2629, %v2621, %v2626
    %v2631 = vrsqrt.pop %v2600
    %v2632 = vmul.f32 %v2631, %v2600
    %v2633 = vmul.f32 %v2632, %v2631
    %v2634 = vmul.f32 0.5, %v2633
    %v2635 = vsub.f32 1.5, %v2634
    %v2636 = vmul.f32 %v2631, %v2635
    %vm2637 = vweird.f32 %v2600
    %vm2638 = vweird.f32 %v2631
    %vm2639 = vmor %vm2637, %vm2638
    %v2640 = vsel %vm2639, %v2631, %v2636
    %v2641 = vmul.f32 %v2573, %v2610
    %v2642 = vmul.f32 %v2574, %v2620
    %v2643 = vmul.f32 %v2575, %v2630
    %v2644 = vmul.f32 %v2576, %v2640
    %v2646 = vperm.slane %v2555, 0
    %v2648 = vmul.f32 %v2641, %v2646
    %v2649 = vmul.f32 %v2642, %v2646
    %v2650 = vmul.f32 %v2643, %v2646
    %v2651 = vmul.f32 %v2644, %v2646
    %v2653 = vperm.slane %v2556, 0
    %v2655 = vadd.f32 %v2648, %v2653
    %v2656 = vadd.f32 %v2649, %v2653
    %v2657 = vadd.f32 %v2650, %v2653
    %v2658 = vadd.f32 %v2651, %v2653
    %v2659 = vld [vmem:[%s2] sm:$0xff]
    %v2660 = vld [vmem:[%s2 + $0x8] sm:$0xff]
    %v2661 = vld [vmem:[%s2 + $0x10] sm:$0xff]
    %v2662 = vld [vmem:[%s2 + $0x18] sm:$0xff]
    %2664 = vset.pattern.permute.xlu0 0
    %2665 = vperm.xlu0 %2664, %v2659
    %v2666 = vpop.permute.xlu0 %2665
    %2669 = vset.pattern.permute.xlu0 0
    %2670 = vperm.xlu0 %2669, %v2660
    %v2671 = vpop.permute.xlu0 %2670
    %2674 = vset.pattern.permute.xlu0 0
    %2675 = vperm.xlu0 %2674, %v2661
    %v2676 = vpop.permute.xlu0 %2675
    %2679 = vset.pattern.permute.xlu0 0
    %2680 = vperm.xlu0 %2679, %v2662
    %v2681 = vpop.permute.xlu0 %2680
    %v2683 = vmul.f32 %v2655, %v2666
    %v2684 = vmul.f32 %v2656, %v2671
    %v2685 = vmul.f32 %v2657, %v2676
    %v2686 = vmul.f32 %v2658, %v2681
    %v2687 = vsel %vm255, %v2683, 0.0
    %v2688 = vsel %vm255, %v2684, 0.0
    %v2689 = vadd.f32 %v2687, %v2688
    %v2690 = vrot.slane %v2689, 4
    %v2691 = vadd.f32 %v2689, %v2690
    %v2692 = vrot.slane %v2691, 2
    %v2693 = vadd.f32 %v2691, %v2692
    %v2694 = vrot.slane %v2693, 1
    %v2695 = vadd.f32 %v2693, %v2694
    %v2696 = vsel %vm255, %v2685, 0.0
    %v2697 = vsel %vm255, %v2686, 0.0
    %v2698 = vadd.f32 %v2696, %v2697
    %v2699 = vrot.slane %v2698, 4
    %v2700 = vadd.f32 %v2698, %v2699
    %v2701 = vrot.slane %v2700, 2
    %v2702 = vadd.f32 %v2700, %v2701
    %v2703 = vrot.slane %v2702, 1
    %v2704 = vadd.f32 %v2702, %v2703
    %v2705 = vpack.c.bf16 %v2695, %v2695
    %v2706 = vpack.c.bf16 %v2704, %v2704
    %v2707 = vld [vmem:[%s17] sm:$0xf]
    %v2708 = vld [vmem:[%s17 + $0x4] sm:$0xf]
    %v2709 = vld [vmem:[%s17 + $0x8] sm:$0xf]
    %v2710 = vld [vmem:[%s17 + $0xc] sm:$0xf]
    %v2711 = vld [vmem:[%s18] sm:$0x1]
    %v2713 = vperm.slane %v2711, 0
    %v2717 = vunpack.c.l.b16 %v2705
    %v2718 = vunpack.c.l.b16 %v2706
    %vm2719 = vcmask 1041409
    %v2720 = vsel %vm2719, %v2718, %v2717
    %v2721 = vpack.c.b16 %v2720, %v2720
    %v2726 = vunpack.c.l.b16 %v2707
    %v2727 = vunpack.c.l.b16 %v2708
    %v2728 = vunpack.c.l.b16 %v2709
    %v2729 = vunpack.c.l.b16 %v2710
    %v2730 = vpack.c.b16 %v2727, %v2726
    %v2731 = vpack.c.b16 %v2729, %v2728
    %v2735 = vsel %vm255, %v2721, 0
    %2737 = vmatpush.bf16.msra.mxu0 0
    %2738 = vmatpush.bf16.msra.mxu0 0
    %2739 = vmatpush.bf16.msra.mxu0 0
    %2740 = vmatpush.bf16.msra.mxu0 0
    %2741 = vmatpush.bf16.msra.mxu0 0
    %2742 = vmatpush.bf16.msra.mxu0 0
    %2743 = vmatpush.bf16.msra.mxu0 %v2731
    %2744 = vmatpush.bf16.msra.mxu0 %v2730
    %2745 = vmatmul.bf16.gmra.mxu0 %v2735
    %v2746 = vpop.f32.mrf.mxu0
    %v2747 = vadd.f32 %v2713, %v2746
    %v2748 = vpop.f32.mrf.mxu0
    %2749 = vdwg.mxu0
    %v2750 = vmax.f32 %v2747, 0.0
    %v2751 = vld [vmem:[%s19] sm:$0x1]
    %v2753 = vperm.slane %v2751, 0
    %v2755 = vmul.f32 %v2750, %v2753
    %vm2756 = vcmask 254976
    %v2757 = vsel %vm2756, %v2755, 0.0
    %2758 = vadd.xlane.f32.xlu0 %v2757
    %v2759 = vpop.xlane.xlu0 %2758
    %v2760 = vld [vmem:[#allocation2] sm:$0x1]
    %v2762 = vperm.slane %v2760, 0
    %v2764 = vadd.f32 %v2759, %v2762
    %vm2765 = vcmask 1024
    %2766 = vst.msk [vmem:[%s21] sm:$0x3] %vm2765, %v2764
    // Predicated region
    $region126: #{tpu_custom_call.1} parent=1 // pred_check
      _
    $region127: #{tpu_custom_call.1} parent=1 // pred_check_branch
      %2768 = sbr.rel (0) target = $region129
    $region128: #{tpu_custom_call.1} parent=1 // pred_region
      _
    $region129: #{tpu_custom_call.1} parent=1 // pred_fallthru
      _
    // Predicated region
    $region130: #{tpu_custom_call.1} parent=1 // pred_check
      _
    $region131: #{tpu_custom_call.1} parent=1 // pred_check_branch
      %2770 = sbr.rel (0) target = $region133
    $region132: #{tpu_custom_call.1} parent=1 // pred_region
      _
    $region133: #{tpu_custom_call.1} parent=1 // pred_fallthru
      _
    %2771 = vsyncpa [#allocation4], 1
    %2772 = vsyncpa [#allocation6], 1
    %2773 = vsyncpa [#allocation9], 1
    %2774 = vsyncpa [#allocation12], 1
    %2775 = vsyncpa [#allocation15], 1
    %2776 = vsyncpa [#allocation18], 1

</llo_original>
